<compile_context>
chip_gen: v6e
topology: v6e:2x2x1
jax: 0.10.0
libtpu: 0.0.40
codegen_flags: <defaults>
</compile_context>

<pallas_src>
import functools

import jax
import jax.numpy as jnp
from jax.experimental import pallas as pl
from jax.experimental.pallas import tpu as pltpu


def mlp_kernel(x_ref, w1_ref, b1_ref, w2_ref, b2_ref, o_ref):
    # fc1: (TB, D_in) @ (D_in, H) + b1, f32 accumulation on the MXU.
    x = x_ref[...].astype(w1_ref.dtype)
    h = jnp.dot(x, w1_ref[...], preferred_element_type=jnp.float32)
    h = jnp.maximum(h + b1_ref[...], 0.0)          # bias + ReLU epilogue in f32
    # fc2: (TB, H) @ (H, D_out) + b2, f32 accumulation on the MXU.
    out = jnp.dot(h.astype(w2_ref.dtype), w2_ref[...],
                  preferred_element_type=jnp.float32)
    o_ref[...] = (out + b2_ref[...]).astype(o_ref.dtype)


def vector_model_forward(x, w1_t, b1, w2_t, b2, *, block_b=128):
    """Forward pass of VectorModel.

    x:    (B, D_in)      activations (f32)
    w1_t: (D_in, H)      fc1 weight, pre-transposed (bf16 recommended)
    b1:   (H,)           fc1 bias (f32)
    w2_t: (H, D_out)     fc2 weight, pre-transposed (bf16 recommended)
    b2:   (D_out,)       fc2 bias (f32)
    """
    B, D_in = x.shape
    H = w1_t.shape[1]
    D_out = w2_t.shape[1]

    b1_2d = b1.reshape(1, H)
    b2_2d = b2.reshape(1, D_out)

    # Batch tiling: single tile if B is small, otherwise pad B up to a
    # multiple of block_b and tile the grid over batch rows.
    if B <= block_b:
        tb = B
        b_pad = B
        x_p = x
    else:
        tb = block_b
        b_pad = ((B + tb - 1) // tb) * tb
        x_p = x if b_pad == B else jnp.pad(x, ((0, b_pad - B), (0, 0)))
    num_tiles = b_pad // tb

    out_dtype = x.dtype
    itemsize = lambda a: a.size * a.dtype.itemsize
    cost = pl.CostEstimate(
        flops=2 * b_pad * (D_in * H + H * D_out),
        transcendentals=0,
        bytes_accessed=(itemsize(x_p) + itemsize(w1_t) + itemsize(b1_2d)
                        + itemsize(w2_t) + itemsize(b2_2d)
                        + b_pad * D_out * jnp.dtype(out_dtype).itemsize),
    )

    out = pl.pallas_call(
        mlp_kernel,
        out_shape=jax.ShapeDtypeStruct((b_pad, D_out), out_dtype),
        grid_spec=pltpu.PrefetchScalarGridSpec(
            num_scalar_prefetch=0,
            grid=(num_tiles,),
            in_specs=[
                # Activations: tiled over batch.
                pl.BlockSpec((tb, D_in), lambda i: (i, 0)),
                # Weights / biases: constant block index -> DMA'd once,
                # VMEM-resident across all batch tiles.
                pl.BlockSpec((D_in, H), lambda i: (0, 0)),
                pl.BlockSpec((1, H), lambda i: (0, 0)),
                pl.BlockSpec((H, D_out), lambda i: (0, 0)),
                pl.BlockSpec((1, D_out), lambda i: (0, 0)),
            ],
            out_specs=pl.BlockSpec((tb, D_out), lambda i: (i, 0)),
        ),
        compiler_params=pltpu.CompilerParams(
            dimension_semantics=("parallel",)),
        cost_estimate=cost,
    )(x_p, w1_t, b1_2d, w2_t, b2_2d)

    return out[:B] if b_pad != B else out


if __name__ == "__main__":
    # Shapes consistent with the module: input_dim=32, hidden=1024, output_dim=512.
    # B=256 with 128-row batch tiles exercises the batch grid (2 tiles).
    B, D_IN, HID, D_OUT = 256, 32, 1024, 512

    key = jax.random.PRNGKey(0)
    kx, kw1, kb1, kw2, kb2 = jax.random.split(key, 5)

    x = jax.random.normal(kx, (B, D_IN), dtype=jnp.float32)
    # PyTorch nn.Linear stores weight as (out, in); we keep the transposed
    # (in, out) layout and stream weights as bf16 (f32 accumulation on MXU).
    w1_t = (jax.random.uniform(kw1, (D_IN, HID), jnp.float32, -1.0, 1.0)
            * (1.0 / jnp.sqrt(D_IN))).astype(jnp.bfloat16)
    b1 = jax.random.uniform(kb1, (HID,), jnp.float32, -1.0, 1.0) * (1.0 / jnp.sqrt(D_IN))
    w2_t = (jax.random.uniform(kw2, (HID, D_OUT), jnp.float32, -1.0, 1.0)
            * (1.0 / jnp.sqrt(HID))).astype(jnp.bfloat16)
    b2 = jax.random.uniform(kb2, (D_OUT,), jnp.float32, -1.0, 1.0) * (1.0 / jnp.sqrt(HID))

    out = vector_model_forward(x, w1_t, b1, w2_t, b2, block_b=128)
    out = jax.block_until_ready(out)

    # Pure-JAX reference with the same bf16 weight / f32 accumulation recipe.
    h_ref = jnp.dot(x.astype(jnp.bfloat16), w1_t,
                    preferred_element_type=jnp.float32) + b1
    h_ref = jnp.maximum(h_ref, 0.0)
    ref = jnp.dot(h_ref.astype(jnp.bfloat16), w2_t,
                  preferred_element_type=jnp.float32) + b2

    assert out.shape == (B, D_OUT)
    assert out.dtype == jnp.float32
    assert jnp.allclose(out, ref, atol=1e-2, rtol=1e-2), float(jnp.max(jnp.abs(out - ref)))

    print("KERNEL_OK")
</pallas_src>

<mosaic_0001>
module attributes {stable_mosaic.version = 11 : i64} {
  func.func @mlp_kernel(%arg0: i32, %arg1: memref<128x32xf32, #tpu.memory_space<vmem>>, %arg2: memref<32x1024xbf16, #tpu.memory_space<vmem>>, %arg3: memref<1x1024xf32, #tpu.memory_space<vmem>>, %arg4: memref<1024x512xbf16, #tpu.memory_space<vmem>>, %arg5: memref<1x512xf32, #tpu.memory_space<vmem>>, %arg6: memref<128x512xf32, #tpu.memory_space<vmem>>) attributes {dimension_semantics = [#tpu.dimension_semantics<parallel>], iteration_bounds = array<i64: 2>, scalar_prefetch = 0 : i64, scratch_operands = 0 : i64, tpu.core_type = #tpu.core_type<tc>, window_params = [{transform_indices = @transform_0, window_bounds = array<i64: 128, 32>}, {pipeline_mode = #tpu.pipeline_mode<synchronous>, transform_indices = @transform_1, window_bounds = array<i64: 32, 1024>}, {pipeline_mode = #tpu.pipeline_mode<synchronous>, transform_indices = @transform_2, window_bounds = array<i64: 1, 1024>}, {pipeline_mode = #tpu.pipeline_mode<synchronous>, transform_indices = @transform_3, window_bounds = array<i64: 1024, 512>}, {pipeline_mode = #tpu.pipeline_mode<synchronous>, transform_indices = @transform_4, window_bounds = array<i64: 1, 512>}, {transform_indices = @transform_5, window_bounds = array<i64: 128, 512>}]} {
    %c0 = arith.constant 0 : index
    %c0_0 = arith.constant 0 : index
    %0 = vector.load %arg1[%c0, %c0_0] : memref<128x32xf32, #tpu.memory_space<vmem>>, vector<128x32xf32>
    %1 = arith.truncf %0 : vector<128x32xf32> to vector<128x32xbf16>
    %c0_1 = arith.constant 0 : index
    %c0_2 = arith.constant 0 : index
    %2 = vector.load %arg2[%c0_1, %c0_2] : memref<32x1024xbf16, #tpu.memory_space<vmem>>, vector<32x1024xbf16>
    %cst = arith.constant dense<0.000000e+00> : vector<128x1024xf32>
    %3 = tpu.matmul %1, %2, %cst {dimension_numbers = #tpu.dot_dimension_numbers<[1], [0], [0], [1], [0, 0, 1, 1], [], []>} : vector<128x32xbf16>, vector<32x1024xbf16>, vector<128x1024xf32> -> vector<128x1024xf32>
    %c0_3 = arith.constant 0 : index
    %c0_4 = arith.constant 0 : index
    %4 = vector.load %arg3[%c0_3, %c0_4] : memref<1x1024xf32, #tpu.memory_space<vmem>>, vector<1x1024xf32>
    %5 = vector.broadcast %4 : vector<1x1024xf32> to vector<128x1024xf32>
    %6 = arith.addf %3, %5 : vector<128x1024xf32>
    %cst_5 = arith.constant 0.000000e+00 : f32
    %7 = vector.broadcast %cst_5 : f32 to vector<128x1024xf32>
    %8 = arith.maximumf %6, %7 : vector<128x1024xf32>
    %9 = arith.truncf %8 : vector<128x1024xf32> to vector<128x1024xbf16>
    %c0_6 = arith.constant 0 : index
    %c0_7 = arith.constant 0 : index
    %10 = vector.load %arg4[%c0_6, %c0_7] : memref<1024x512xbf16, #tpu.memory_space<vmem>>, vector<1024x512xbf16>
    %cst_8 = arith.constant dense<0.000000e+00> : vector<128x512xf32>
    %11 = tpu.matmul %9, %10, %cst_8 {dimension_numbers = #tpu.dot_dimension_numbers<[1], [0], [0], [1], [0, 0, 1, 1], [], []>} : vector<128x1024xbf16>, vector<1024x512xbf16>, vector<128x512xf32> -> vector<128x512xf32>
    %c0_9 = arith.constant 0 : index
    %c0_10 = arith.constant 0 : index
    %12 = vector.load %arg5[%c0_9, %c0_10] : memref<1x512xf32, #tpu.memory_space<vmem>>, vector<1x512xf32>
    %13 = vector.broadcast %12 : vector<1x512xf32> to vector<128x512xf32>
    %14 = arith.addf %11, %13 : vector<128x512xf32>
    %c0_11 = arith.constant 0 : index
    %c0_12 = arith.constant 0 : index
    %15 = vector.load %arg6[%c0_11, %c0_12] : memref<128x512xf32, #tpu.memory_space<vmem>>, vector<128x512xf32>
    tpu.vector_store %arg6[%c0_11, %c0_12], %14 {strides = array<i32>} : memref<128x512xf32, #tpu.memory_space<vmem>>, vector<128x512xf32>,
    return
  }
  func.func @transform_0(%arg0: i32) -> (i32, i32) {
    %c0_i32 = arith.constant 0 : i32
    %c0_i32_0 = arith.constant 0 : i32
    return %arg0, %c0_i32 : i32, i32
  }
  func.func @transform_1(%arg0: i32) -> (i32, i32) {
    %c0_i32 = arith.constant 0 : i32
    %c0_i32_0 = arith.constant 0 : i32
    %c0_i32_1 = arith.constant 0 : i32
    return %c0_i32, %c0_i32_0 : i32, i32
  }
  func.func @transform_2(%arg0: i32) -> (i32, i32) {
    %c0_i32 = arith.constant 0 : i32
    %c0_i32_0 = arith.constant 0 : i32
    %c0_i32_1 = arith.constant 0 : i32
    return %c0_i32, %c0_i32_0 : i32, i32
  }
  func.func @transform_3(%arg0: i32) -> (i32, i32) {
    %c0_i32 = arith.constant 0 : i32
    %c0_i32_0 = arith.constant 0 : i32
    %c0_i32_1 = arith.constant 0 : i32
    return %c0_i32, %c0_i32_0 : i32, i32
  }
  func.func @transform_4(%arg0: i32) -> (i32, i32) {
    %c0_i32 = arith.constant 0 : i32
    %c0_i32_0 = arith.constant 0 : i32
    %c0_i32_1 = arith.constant 0 : i32
    return %c0_i32, %c0_i32_0 : i32, i32
  }
  func.func @transform_5(%arg0: i32) -> (i32, i32) {
    %c0_i32 = arith.constant 0 : i32
    %c0_i32_0 = arith.constant 0 : i32
    return %arg0, %c0_i32 : i32, i32
  }
}

</mosaic_0001>

<llo_original>
// kernel: tpu_custom_call.1
$region0: #{tpu_custom_call.1}
  #allocation0 [shape = 'u32[]', space=smem, size = 0x4, offset = 0x4, fixed_abs, tag = 'smem constant byte address 0x4 - core index']
  #allocation1 [shape = 'u32[144,128]{1,0:T(1,128)}', space=vmem, size = 0x12000, scoped, tag = 'internal scratch']
  %s0 = inlined_call_operand.vmem [shape: f32[256,32], index: 0, kind: input, shape index: {}]
  %s1 = inlined_call_operand.vmem [shape: bf16[32,1024], index: 1, kind: input, shape index: {}]
  %s2 = inlined_call_operand.vmem [shape: f32[1,1024], index: 2, kind: input, shape index: {}]
  %s3 = inlined_call_operand.hbm [shape: bf16[1024,512], index: 3, kind: input, shape index: {}]
  %s4 = inlined_call_operand.vmem [shape: f32[1,512], index: 4, kind: input, shape index: {}]
  %s5 = inlined_call_operand.hbm [shape: f32[256,512], index: 5, kind: output, shape index: {}]
  %s6 = sld [smem:[#allocation0]]
  $region57: #{tpu_custom_call.1} parent=0
    _
  %s8 = ssub.s32 1, %s6
  %s9 = scalar_select 0, %s8, %s6
  $region1: #{tpu_custom_call.1} parent=0
    #allocation2 [shape = 'u8[1048576]{0}', space=vmem, size = 0x100000, scoped, tag = 'input window, operand 3, single buffered']
    #allocation3 [shape = 's32[2]{0}', space=sflag, size = 0x8, scoped, tag = 'scoped memory for tpu_custom_call.1']
    #allocation4 [shape = 's32[2]{0}', space=sflag, size = 0x8, scoped, tag = 'scoped memory for tpu_custom_call.1']
    #allocation5 [shape = 'u8[524288]{0}', space=vmem, size = 0x80000, scoped, tag = 'output window, operand 0']
    %10 = vsyncpa [#allocation3], 0
    %11 = vsyncpa [#allocation4], 0
    %s12 = scalar_lea.sflag [#allocation4], 1
    %13 = vsyncpa %s12, 0
    loop: start=0, step=1, limit=4
    $region2: #{tpu_custom_call.1} parent=1 // loop_pre_header
      _
    $region3: #{tpu_custom_call.1} parent=1 // loop_header
      %s15 = sphi 0, %s19
      %p16 = scmp.ge.s32.totalorder %s15, 4
      %s25 = sphi 0, %s27
      %s28 = sphi 0, %s25
      %s29 = sphi 0, %s28
      %s45 = sphi 0, %s29
      %s49 = sphi 0, %s49
      %s51 = sphi 0, %s49
      %s52 = sphi 0, %s51
      %s66 = sphi 0, %s52
      %s70 = sphi 0, %s70
      %s72 = sphi 0, %s70
      %s73 = sphi 0, %s72
      %s87 = sphi 0, %s73
      %s91 = sphi 0, %s91
      %s93 = sphi 0, %s91
      %s94 = sphi 0, %s93
      %s108 = sphi 0, %s94
      %s112 = sphi 0, %s112
      %s114 = sphi 0, %s112
      %s115 = sphi 0, %s114
      %s129 = sphi 0, %s115
      %s135 = sphi 0, %s137
      %s138 = sphi 0, %s135
      %s139 = sphi 0, %s138
      %s155 = sphi 0, %s139
    $region4: #{tpu_custom_call.1} parent=1 // loop_header_branch
      %18 = sbr.rel (%p16) target = $region8
    $region5: #{tpu_custom_call.1} parent=1 // loop_body
      %s20 = ssub.s32 %s15, 1
      %s21 = ssub.s32 %s15, 2
      %s22 = sadd.s32 %s15, 1
      %s23 = ssub.s32 %s15, %s22
      %p24 = scmp.eq.s32.totalorder %s23, 0
      %s26 = sadd.s32 %s25, 1
      %s27 = scalar_select %p24, %s25, %s26
      %p30 = pneg %p24
      %p31 = scmp.eq.s32.totalorder %s15, 1
      %p32 = por %p30, %p31
      %p33 = scmp.ne.s32.totalorder %s25, %s28
      %p34 = scmp.eq.s32.totalorder %s15, 0
      %p35 = por %p33, %p34
      %p36 = scmp.ne.s32.totalorder %s25, %s28
      %p37 = scmp.eq.s32.totalorder %s20, 1
      %p38 = por %p36, %p37
      %p39 = scmp.ne.s32.totalorder %s28, %s29
      %p40 = scmp.eq.s32.totalorder %s20, 0
      %p41 = por %p39, %p40
      %p42 = scmp.ne.s32.totalorder %s28, %s29
      %p43 = scmp.eq.s32.totalorder %s21, 1
      %p44 = por %p42, %p43
      %p46 = scmp.ne.s32.totalorder %s29, %s45
      %p47 = scmp.eq.s32.totalorder %s21, 0
      %p48 = por %p46, %p47
      %s50 = sadd.s32 %s49, 1
      %p53 = scmp.eq.s32.totalorder %s15, 1
      %p54 = scmp.ne.s32.totalorder %s49, %s51
      %p55 = scmp.eq.s32.totalorder %s15, 0
      %p56 = por %p54, %p55
      %p57 = scmp.ne.s32.totalorder %s49, %s51
      %p58 = scmp.eq.s32.totalorder %s20, 1
      %p59 = por %p57, %p58
      %p60 = scmp.ne.s32.totalorder %s51, %s52
      %p61 = scmp.eq.s32.totalorder %s20, 0
      %p62 = por %p60, %p61
      %p63 = scmp.ne.s32.totalorder %s51, %s52
      %p64 = scmp.eq.s32.totalorder %s21, 1
      %p65 = por %p63, %p64
      %p67 = scmp.ne.s32.totalorder %s52, %s66
      %p68 = scmp.eq.s32.totalorder %s21, 0
      %p69 = por %p67, %p68
      %s71 = sadd.s32 %s70, 1
      %p74 = scmp.eq.s32.totalorder %s15, 1
      %p75 = scmp.ne.s32.totalorder %s70, %s72
      %p76 = scmp.eq.s32.totalorder %s15, 0
      %p77 = por %p75, %p76
      %p78 = scmp.ne.s32.totalorder %s70, %s72
      %p79 = scmp.eq.s32.totalorder %s20, 1
      %p80 = por %p78, %p79
      %p81 = scmp.ne.s32.totalorder %s72, %s73
      %p82 = scmp.eq.s32.totalorder %s20, 0
      %p83 = por %p81, %p82
      %p84 = scmp.ne.s32.totalorder %s72, %s73
      %p85 = scmp.eq.s32.totalorder %s21, 1
      %p86 = por %p84, %p85
      %p88 = scmp.ne.s32.totalorder %s73, %s87
      %p89 = scmp.eq.s32.totalorder %s21, 0
      %p90 = por %p88, %p89
      %s92 = sadd.s32 %s91, 1
      %p95 = scmp.eq.s32.totalorder %s15, 1
      %p96 = scmp.ne.s32.totalorder %s91, %s93
      %p97 = scmp.eq.s32.totalorder %s15, 0
      %p98 = por %p96, %p97
      %p99 = scmp.ne.s32.totalorder %s91, %s93
      %p100 = scmp.eq.s32.totalorder %s20, 1
      %p101 = por %p99, %p100
      %p102 = scmp.ne.s32.totalorder %s93, %s94
      %p103 = scmp.eq.s32.totalorder %s20, 0
      %p104 = por %p102, %p103
      %p105 = scmp.ne.s32.totalorder %s93, %s94
      %p106 = scmp.eq.s32.totalorder %s21, 1
      %p107 = por %p105, %p106
      %p109 = scmp.ne.s32.totalorder %s94, %s108
      %p110 = scmp.eq.s32.totalorder %s21, 0
      %p111 = por %p109, %p110
      %s113 = sadd.s32 %s112, 1
      %p116 = scmp.eq.s32.totalorder %s15, 1
      %p117 = scmp.ne.s32.totalorder %s112, %s114
      %p118 = scmp.eq.s32.totalorder %s15, 0
      %p119 = por %p117, %p118
      %p120 = scmp.ne.s32.totalorder %s112, %s114
      %p121 = scmp.eq.s32.totalorder %s20, 1
      %p122 = por %p120, %p121
      %p123 = scmp.ne.s32.totalorder %s114, %s115
      %p124 = scmp.eq.s32.totalorder %s20, 0
      %p125 = por %p123, %p124
      %p126 = scmp.ne.s32.totalorder %s114, %s115
      %p127 = scmp.eq.s32.totalorder %s21, 1
      %p128 = por %p126, %p127
      %p130 = scmp.ne.s32.totalorder %s115, %s129
      %p131 = scmp.eq.s32.totalorder %s21, 0
      %p132 = por %p130, %p131
      %s133 = ssub.s32 %s15, %s22
      %p134 = scmp.eq.s32.totalorder %s133, 0
      %s136 = sadd.s32 %s135, 1
      %s137 = scalar_select %p134, %s135, %s136
      %p140 = pneg %p134
      %p141 = scmp.eq.s32.totalorder %s15, 1
      %p142 = por %p140, %p141
      %p143 = scmp.ne.s32.totalorder %s135, %s138
      %p144 = scmp.eq.s32.totalorder %s15, 0
      %p145 = por %p143, %p144
      %p146 = scmp.ne.s32.totalorder %s135, %s138
      %p147 = scmp.eq.s32.totalorder %s20, 1
      %p148 = por %p146, %p147
      %p149 = scmp.ne.s32.totalorder %s138, %s139
      %p150 = scmp.eq.s32.totalorder %s20, 0
      %p151 = por %p149, %p150
      %p152 = scmp.ne.s32.totalorder %s138, %s139
      %p153 = scmp.eq.s32.totalorder %s21, 1
      %p154 = por %p152, %p153
      %p156 = scmp.ne.s32.totalorder %s139, %s155
      %p157 = scmp.eq.s32.totalorder %s21, 0
      %p158 = por %p156, %p157
      %p159 = scmp.le.s32.totalorder 1, %s15
      %p160 = scmp.lt.s32.totalorder %s15, 3
      %p161 = pnand %p159, %p160
      %p162 = pneg %p161
      // Predicated region
      $region9: #{tpu_custom_call.1} parent=5 // pred_check
        _
      $region10: #{tpu_custom_call.1} parent=5 // pred_check_branch
        %164 = sbr.rel (%p161) target = $region12
      $region11: #{tpu_custom_call.1} parent=5 // pred_region
        %s165 = ssub.s32 %s15, 1
        // Predicated region
        $region13: #{tpu_custom_call.1} parent=11 // pred_check
          %p166 = pneg %p62
        $region14: #{tpu_custom_call.1} parent=11 // pred_check_branch
          %168 = sbr.rel (%p166) target = $region16
        $region15: #{tpu_custom_call.1} parent=11 // pred_region
          _
        $region16: #{tpu_custom_call.1} parent=11 // pred_fallthru
          _
        // Predicated region
        $region17: #{tpu_custom_call.1} parent=11 // pred_check
          %p169 = pneg %p83
        $region18: #{tpu_custom_call.1} parent=11 // pred_check_branch
          %171 = sbr.rel (%p169) target = $region20
        $region19: #{tpu_custom_call.1} parent=11 // pred_region
          _
        $region20: #{tpu_custom_call.1} parent=11 // pred_fallthru
          _
        // Predicated region
        $region21: #{tpu_custom_call.1} parent=11 // pred_check
          %p172 = pneg %p104
        $region22: #{tpu_custom_call.1} parent=11 // pred_check_branch
          %174 = sbr.rel (%p172) target = $region24
        $region23: #{tpu_custom_call.1} parent=11 // pred_region
          %s176 = ssub.s32 32768, 32768
          %177 = vsyncadd [#allocation3], %s176
          %s178 = sshll.u32 [#allocation2], 4
          %s179 = int_to_ptr.vmem [resolvable:$true] %s178
          %184 = dma.hbm_to_vmem [thread:$0]  %s3, 32768, %s179, [#allocation3], 256, 256, 16
        $region24: #{tpu_custom_call.1} parent=11 // pred_fallthru
          _
        // Predicated region
        $region25: #{tpu_custom_call.1} parent=11 // pred_check
          %p185 = pneg %p125
        $region26: #{tpu_custom_call.1} parent=11 // pred_check_branch
          %187 = sbr.rel (%p185) target = $region28
        $region27: #{tpu_custom_call.1} parent=11 // pred_region
          _
        $region28: #{tpu_custom_call.1} parent=11 // pred_fallthru
          _
      $region12: #{tpu_custom_call.1} parent=5 // pred_fallthru
        _
      %p188 = scmp.lt.s32.totalorder %s15, 2
      // Predicated region
      $region29: #{tpu_custom_call.1} parent=5 // pred_check
        %p189 = pneg %p188
      $region30: #{tpu_custom_call.1} parent=5 // pred_check_branch
        %191 = sbr.rel (%p189) target = $region32
      $region31: #{tpu_custom_call.1} parent=5 // pred_region
        // Predicated region
        $region33: #{tpu_custom_call.1} parent=31 // pred_check
          %p192 = pneg %p35
        $region34: #{tpu_custom_call.1} parent=31 // pred_check_branch
          %194 = sbr.rel (%p192) target = $region36
        $region35: #{tpu_custom_call.1} parent=31 // pred_region
          %s195 = smul.u32 16, %s15
          %p196 = scmp.lt.s32.totalorder %s195, 31
          %s197 = scalar_select %p196, %s195, 31
          %s198 = smul.addr %s197, 8
          %s199 = scalar_lea.vmem %s0, %s198
          %s200 = smul.u32 16, %s15
        $region36: #{tpu_custom_call.1} parent=31 // pred_fallthru
          _
      $region32: #{tpu_custom_call.1} parent=5 // pred_fallthru
        _
      %p201 = scmp.le.s32.totalorder 1, %s15
      %p202 = scmp.lt.s32.totalorder %s15, 3
      %p203 = pnand %p201, %p202
      %p204 = pneg %p203
      // Predicated region
      $region37: #{tpu_custom_call.1} parent=5 // pred_check
        _
      $region38: #{tpu_custom_call.1} parent=5 // pred_check_branch
        %206 = sbr.rel (%p203) target = $region40
      $region39: #{tpu_custom_call.1} parent=5 // pred_region
        %s207 = ssub.s32 %s15, 1
        // Predicated region
        $region41: #{tpu_custom_call.1} parent=39 // pred_check
          %p208 = pneg %p104
        $region42: #{tpu_custom_call.1} parent=39 // pred_check_branch
          %210 = sbr.rel (%p208) target = $region44
        $region43: #{tpu_custom_call.1} parent=39 // pred_region
          %211 = dma.done [#allocation3], 32768
        $region44: #{tpu_custom_call.1} parent=39 // pred_fallthru
          _
        %s212 = smul.u32 16, %s20
        %p213 = scmp.lt.s32.totalorder %s212, 31
        %s214 = scalar_select %p213, %s212, 31
        %s215 = smul.addr %s214, 8
        %s216 = scalar_lea.vmem %s0, %s215
        %p217 = pneg %p41
        %p218 = pneg %p38
        %p219 = pneg %p62
        %p220 = pneg %p59
        %p221 = pneg %p83
        %p222 = pneg %p80
        %p223 = pneg %p104
        %p224 = pneg %p101
        %p225 = pneg %p125
        %p226 = pneg %p122
        %p227 = pneg %p151
        %p228 = pneg %p148
        %s229 = sand.u32 %s138, 1
        %s230 = scalar_lea.sflag [#allocation4], %s229
        %s231 = sand.u32 %s138, 1
        %s232 = smul.addr %s231, 512
        %s233 = scalar_lea.vmem [#allocation5], %s232
        %s234 = smul.u32 16, %s20
        %p235 = scmp.lt.s32.totalorder %s234, 31
        %s236 = scalar_select %p235, %s234, 31
        %s237 = smul.addr %s236, 8
        %s238 = scalar_lea.vmem %s0, %s237
        %s239 = smul.u32 16, %s20
        %s240 = smul.u32 16, %s20
        %v242 = vld [vmem:[%s238] sm:$0xff]
        %v243 = vld [vmem:[%s238 + $0x8] sm:$0xff]
        %v244 = vld [vmem:[%s238 + $0x10] sm:$0xff]
        %v245 = vld [vmem:[%s238 + $0x18] sm:$0xff]
        %v246 = vld [vmem:[%s238 + $0x20] sm:$0xff]
        %v247 = vld [vmem:[%s238 + $0x28] sm:$0xff]
        %v248 = vld [vmem:[%s238 + $0x30] sm:$0xff]
        %v249 = vld [vmem:[%s238 + $0x38] sm:$0xff]
        %v250 = vld [vmem:[%s238 + $0x40] sm:$0xff]
        %v251 = vld [vmem:[%s238 + $0x48] sm:$0xff]
        %v252 = vld [vmem:[%s238 + $0x50] sm:$0xff]
        %v253 = vld [vmem:[%s238 + $0x58] sm:$0xff]
        %v254 = vld [vmem:[%s238 + $0x60] sm:$0xff]
        %v255 = vld [vmem:[%s238 + $0x68] sm:$0xff]
        %v256 = vld [vmem:[%s238 + $0x70] sm:$0xff]
        %v257 = vld [vmem:[%s238 + $0x78] sm:$0xff]
        %v258 = vpack.c.bf16 %v243, %v242
        %v259 = vpack.c.bf16 %v245, %v244
        %v260 = vpack.c.bf16 %v247, %v246
        %v261 = vpack.c.bf16 %v249, %v248
        %v262 = vpack.c.bf16 %v251, %v250
        %v263 = vpack.c.bf16 %v253, %v252
        %v264 = vpack.c.bf16 %v255, %v254
        %v265 = vpack.c.bf16 %v257, %v256
        %v266 = vld [vmem:[%s1] sm:$0xff]
        %v267 = vld [vmem:[%s1 + $0x8] sm:$0xff]
        %v268 = vld [vmem:[%s1 + $0x10] sm:$0xff]
        %v269 = vld [vmem:[%s1 + $0x18] sm:$0xff]
        %v270 = vld [vmem:[%s1 + $0x20] sm:$0xff]
        %v271 = vld [vmem:[%s1 + $0x28] sm:$0xff]
        %v272 = vld [vmem:[%s1 + $0x30] sm:$0xff]
        %v273 = vld [vmem:[%s1 + $0x38] sm:$0xff]
        %v274 = vld [vmem:[%s1 + $0x40] sm:$0xff]
        %v275 = vld [vmem:[%s1 + $0x48] sm:$0xff]
        %v276 = vld [vmem:[%s1 + $0x50] sm:$0xff]
        %v277 = vld [vmem:[%s1 + $0x58] sm:$0xff]
        %v278 = vld [vmem:[%s1 + $0x60] sm:$0xff]
        %v279 = vld [vmem:[%s1 + $0x68] sm:$0xff]
        %v280 = vld [vmem:[%s1 + $0x70] sm:$0xff]
        %v281 = vld [vmem:[%s1 + $0x78] sm:$0xff]
        %v282 = vld [vmem:[%s2] sm:$0xff]
        %v284 = vlaneseq
        %v285 = vshrl.u32 %v284, 7
        %v286 = vsub.s32 0, %v285
        %v287 = vrot.slane %v282, %v286
        %v288 = vlaneseq
        %v289 = vshrl.u32 %v288, 7
        %v290 = vsub.s32 1, %v289
        %v291 = vrot.slane %v282, %v290
        %v292 = vlaneseq
        %v293 = vshrl.u32 %v292, 7
        %v294 = vsub.s32 2, %v293
        %v295 = vrot.slane %v282, %v294
        %v296 = vlaneseq
        %v297 = vshrl.u32 %v296, 7
        %v298 = vsub.s32 3, %v297
        %v299 = vrot.slane %v282, %v298
        %v300 = vlaneseq
        %v301 = vshrl.u32 %v300, 7
        %v302 = vsub.s32 4, %v301
        %v303 = vrot.slane %v282, %v302
        %v304 = vlaneseq
        %v305 = vshrl.u32 %v304, 7
        %v306 = vsub.s32 5, %v305
        %v307 = vrot.slane %v282, %v306
        %v308 = vlaneseq
        %v309 = vshrl.u32 %v308, 7
        %v310 = vsub.s32 6, %v309
        %v311 = vrot.slane %v282, %v310
        %v312 = vlaneseq
        %v313 = vshrl.u32 %v312, 7
        %v314 = vsub.s32 7, %v313
        %v315 = vrot.slane %v282, %v314
        %v340 = vunpack.c.l.b16 %v266
        %v341 = vunpack.c.h.b16 %v266
        %v342 = vunpack.c.l.b16 %v267
        %v343 = vunpack.c.h.b16 %v267
        %v344 = vunpack.c.l.b16 %v268
        %v345 = vunpack.c.h.b16 %v268
        %v346 = vunpack.c.l.b16 %v269
        %v347 = vunpack.c.h.b16 %v269
        %v348 = vunpack.c.l.b16 %v270
        %v349 = vunpack.c.h.b16 %v270
        %v350 = vunpack.c.l.b16 %v271
        %v351 = vunpack.c.h.b16 %v271
        %v352 = vunpack.c.l.b16 %v272
        %v353 = vunpack.c.h.b16 %v272
        %v354 = vunpack.c.l.b16 %v273
        %v355 = vunpack.c.h.b16 %v273
        %v356 = vunpack.c.l.b16 %v274
        %v357 = vunpack.c.h.b16 %v274
        %v358 = vunpack.c.l.b16 %v275
        %v359 = vunpack.c.h.b16 %v275
        %v360 = vunpack.c.l.b16 %v276
        %v361 = vunpack.c.h.b16 %v276
        %v362 = vunpack.c.l.b16 %v277
        %v363 = vunpack.c.h.b16 %v277
        %v364 = vunpack.c.l.b16 %v278
        %v365 = vunpack.c.h.b16 %v278
        %v366 = vunpack.c.l.b16 %v279
        %v367 = vunpack.c.h.b16 %v279
        %v368 = vunpack.c.l.b16 %v280
        %v369 = vunpack.c.h.b16 %v280
        %v370 = vunpack.c.l.b16 %v281
        %v371 = vunpack.c.h.b16 %v281
        %v372 = vpack.c.b16 %v348, %v340
        %v373 = vpack.c.b16 %v349, %v341
        %v374 = vpack.c.b16 %v350, %v342
        %v375 = vpack.c.b16 %v351, %v343
        %v376 = vpack.c.b16 %v352, %v344
        %v377 = vpack.c.b16 %v353, %v345
        %v378 = vpack.c.b16 %v354, %v346
        %v379 = vpack.c.b16 %v355, %v347
        %v380 = vpack.c.b16 %v364, %v356
        %v381 = vpack.c.b16 %v365, %v357
        %v382 = vpack.c.b16 %v366, %v358
        %v383 = vpack.c.b16 %v367, %v359
        %v384 = vpack.c.b16 %v368, %v360
        %v385 = vpack.c.b16 %v369, %v361
        %v386 = vpack.c.b16 %v370, %v362
        %v387 = vpack.c.b16 %v371, %v363
        %vm404 = vcmask 261120
        %v406 = vsel %vm404, %v258, 0
        %v409 = vsel %vm404, %v259, 0
        %v412 = vsel %vm404, %v260, 0
        %v415 = vsel %vm404, %v261, 0
        %v418 = vsel %vm404, %v262, 0
        %v421 = vsel %vm404, %v263, 0
        %v424 = vsel %vm404, %v264, 0
        %v427 = vsel %vm404, %v265, 0
        %429 = vmatprep.subr.bf16.mxu0 0
        %430 = vmatpush1.bf16.msra.mxu0 0
        %431 = vmatprep.subr.bf16.mxu0 0
        %432 = vmatpush1.bf16.msra.mxu0 0
        %433 = vmatprep.subr.bf16.mxu0 0
        %434 = vmatpush1.bf16.msra.mxu0 0
        %435 = vmatprep.subr.bf16.mxu0 0
        %436 = vmatpush1.bf16.msra.mxu0 0
        %437 = vmatprep.subr.bf16.mxu0 0
        %438 = vmatpush1.bf16.msra.mxu0 0
        %439 = vmatprep.subr.bf16.mxu0 0
        %440 = vmatpush1.bf16.msra.mxu0 0
        %441 = vmatprep.subr.bf16.mxu0 %v381
        %442 = vmatpush1.bf16.msra.mxu0 %v380
        %443 = vmatprep.subr.bf16.mxu0 %v373
        %444 = vmatpush1.bf16.msra.mxu0 %v372
        %445 = vmatprep.subr.bf16.mxu0 0
        %446 = vmatpush2.bf16.msra.mxu0 0
        %447 = vmatprep.subr.bf16.mxu0 0
        %448 = vmatpush2.bf16.msra.mxu0 0
        %449 = vmatprep.subr.bf16.mxu0 0
        %450 = vmatpush2.bf16.msra.mxu0 0
        %451 = vmatprep.subr.bf16.mxu0 0
        %452 = vmatpush2.bf16.msra.mxu0 0
        %453 = vmatprep.subr.bf16.mxu0 0
        %454 = vmatpush2.bf16.msra.mxu0 0
        %455 = vmatprep.subr.bf16.mxu0 0
        %456 = vmatpush2.bf16.msra.mxu0 0
        %457 = vmatprep.subr.bf16.mxu0 0
        %458 = vmatpush2.bf16.msra.mxu0 0
        %459 = vmatprep.subr.bf16.mxu0 0
        %460 = vmatpush2.bf16.msra.mxu0 0
        %461 = vmatprep.mubr.bf16.mxu0 0
        %462 = vmatmul.mubr.bf16.gmra.mxu0 %v406
        %v463 = vpop.f32.mrf.mxu0
        %v464 = vadd.f32 %v287, %v463
        %v465 = vpop.f32.mrf.mxu0
        %v466 = vadd.f32 %v291, %v465
        %v467 = vpop.f32.mrf.mxu0
        %v468 = vadd.f32 %v287, %v467
        %v469 = vpop.f32.mrf.mxu0
        %v470 = vadd.f32 %v291, %v469
        %471 = vmatprep.mubr.bf16.mxu0 0
        %472 = vmatmul.mubr.bf16.gmra.mxu0 %v409
        %v473 = vpop.f32.mrf.mxu0
        %v474 = vadd.f32 %v287, %v473
        %v475 = vpop.f32.mrf.mxu0
        %v476 = vadd.f32 %v291, %v475
        %v477 = vpop.f32.mrf.mxu0
        %v478 = vadd.f32 %v287, %v477
        %v479 = vpop.f32.mrf.mxu0
        %v480 = vadd.f32 %v291, %v479
        %481 = vmatprep.mubr.bf16.mxu0 0
        %482 = vmatmul.mubr.bf16.gmra.mxu0 %v412
        %v483 = vpop.f32.mrf.mxu0
        %v484 = vadd.f32 %v287, %v483
        %v485 = vpop.f32.mrf.mxu0
        %v486 = vadd.f32 %v291, %v485
        %v487 = vpop.f32.mrf.mxu0
        %v488 = vadd.f32 %v287, %v487
        %v489 = vpop.f32.mrf.mxu0
        %v490 = vadd.f32 %v291, %v489
        %491 = vmatprep.mubr.bf16.mxu0 0
        %492 = vmatmul.mubr.bf16.gmra.mxu0 %v415
        %v493 = vpop.f32.mrf.mxu0
        %v494 = vadd.f32 %v287, %v493
        %v495 = vpop.f32.mrf.mxu0
        %v496 = vadd.f32 %v291, %v495
        %v497 = vpop.f32.mrf.mxu0
        %v498 = vadd.f32 %v287, %v497
        %v499 = vpop.f32.mrf.mxu0
        %v500 = vadd.f32 %v291, %v499
        %501 = vmatprep.mubr.bf16.mxu0 0
        %502 = vmatmul.mubr.bf16.gmra.mxu0 %v418
        %v503 = vpop.f32.mrf.mxu0
        %v504 = vadd.f32 %v287, %v503
        %v505 = vpop.f32.mrf.mxu0
        %v506 = vadd.f32 %v291, %v505
        %v507 = vpop.f32.mrf.mxu0
        %v508 = vadd.f32 %v287, %v507
        %v509 = vpop.f32.mrf.mxu0
        %v510 = vadd.f32 %v291, %v509
        %511 = vmatprep.mubr.bf16.mxu0 0
        %512 = vmatmul.mubr.bf16.gmra.mxu0 %v421
        %v513 = vpop.f32.mrf.mxu0
        %v514 = vadd.f32 %v287, %v513
        %v515 = vpop.f32.mrf.mxu0
        %v516 = vadd.f32 %v291, %v515
        %v517 = vpop.f32.mrf.mxu0
        %v518 = vadd.f32 %v287, %v517
        %v519 = vpop.f32.mrf.mxu0
        %v520 = vadd.f32 %v291, %v519
        %521 = vmatprep.mubr.bf16.mxu0 0
        %522 = vmatmul.mubr.bf16.gmra.mxu0 %v424
        %v523 = vpop.f32.mrf.mxu0
        %v524 = vadd.f32 %v287, %v523
        %v525 = vpop.f32.mrf.mxu0
        %v526 = vadd.f32 %v291, %v525
        %v527 = vpop.f32.mrf.mxu0
        %v528 = vadd.f32 %v287, %v527
        %v529 = vpop.f32.mrf.mxu0
        %v530 = vadd.f32 %v291, %v529
        %531 = vmatprep.mubr.bf16.mxu0 0
        %532 = vmatmul.mubr.bf16.gmra.mxu0 %v427
        %v533 = vpop.f32.mrf.mxu0
        %v534 = vadd.f32 %v287, %v533
        %v535 = vpop.f32.mrf.mxu0
        %v536 = vadd.f32 %v291, %v535
        %v537 = vpop.f32.mrf.mxu0
        %v538 = vadd.f32 %v287, %v537
        %v539 = vpop.f32.mrf.mxu0
        %v540 = vadd.f32 %v291, %v539
        %541 = vdwg.mxu0
        %542 = vmatprep.subr.bf16.mxu0 0
        %543 = vmatpush1.bf16.msra.mxu0 0
        %544 = vmatprep.subr.bf16.mxu0 0
        %545 = vmatpush1.bf16.msra.mxu0 0
        %546 = vmatprep.subr.bf16.mxu0 0
        %547 = vmatpush1.bf16.msra.mxu0 0
        %548 = vmatprep.subr.bf16.mxu0 0
        %549 = vmatpush1.bf16.msra.mxu0 0
        %550 = vmatprep.subr.bf16.mxu0 0
        %551 = vmatpush1.bf16.msra.mxu0 0
        %552 = vmatprep.subr.bf16.mxu0 0
        %553 = vmatpush1.bf16.msra.mxu0 0
        %554 = vmatprep.subr.bf16.mxu0 %v383
        %555 = vmatpush1.bf16.msra.mxu0 %v382
        %556 = vmatprep.subr.bf16.mxu0 %v375
        %557 = vmatpush1.bf16.msra.mxu0 %v374
        %558 = vmatprep.subr.bf16.mxu0 0
        %559 = vmatpush2.bf16.msra.mxu0 0
        %560 = vmatprep.subr.bf16.mxu0 0
        %561 = vmatpush2.bf16.msra.mxu0 0
        %562 = vmatprep.subr.bf16.mxu0 0
        %563 = vmatpush2.bf16.msra.mxu0 0
        %564 = vmatprep.subr.bf16.mxu0 0
        %565 = vmatpush2.bf16.msra.mxu0 0
        %566 = vmatprep.subr.bf16.mxu0 0
        %567 = vmatpush2.bf16.msra.mxu0 0
        %568 = vmatprep.subr.bf16.mxu0 0
        %569 = vmatpush2.bf16.msra.mxu0 0
        %570 = vmatprep.subr.bf16.mxu0 0
        %571 = vmatpush2.bf16.msra.mxu0 0
        %572 = vmatprep.subr.bf16.mxu0 0
        %573 = vmatpush2.bf16.msra.mxu0 0
        %574 = vmatprep.mubr.bf16.mxu0 0
        %575 = vmatmul.mubr.bf16.gmra.mxu0 %v406
        %v576 = vpop.f32.mrf.mxu0
        %v577 = vadd.f32 %v295, %v576
        %v578 = vpop.f32.mrf.mxu0
        %v579 = vadd.f32 %v299, %v578
        %v580 = vpop.f32.mrf.mxu0
        %v581 = vadd.f32 %v295, %v580
        %v582 = vpop.f32.mrf.mxu0
        %v583 = vadd.f32 %v299, %v582
        %584 = vmatprep.mubr.bf16.mxu0 0
        %585 = vmatmul.mubr.bf16.gmra.mxu0 %v409
        %v586 = vpop.f32.mrf.mxu0
        %v587 = vadd.f32 %v295, %v586
        %v588 = vpop.f32.mrf.mxu0
        %v589 = vadd.f32 %v299, %v588
        %v590 = vpop.f32.mrf.mxu0
        %v591 = vadd.f32 %v295, %v590
        %v592 = vpop.f32.mrf.mxu0
        %v593 = vadd.f32 %v299, %v592
        %594 = vmatprep.mubr.bf16.mxu0 0
        %595 = vmatmul.mubr.bf16.gmra.mxu0 %v412
        %v596 = vpop.f32.mrf.mxu0
        %v597 = vadd.f32 %v295, %v596
        %v598 = vpop.f32.mrf.mxu0
        %v599 = vadd.f32 %v299, %v598
        %v600 = vpop.f32.mrf.mxu0
        %v601 = vadd.f32 %v295, %v600
        %v602 = vpop.f32.mrf.mxu0
        %v603 = vadd.f32 %v299, %v602
        %604 = vmatprep.mubr.bf16.mxu0 0
        %605 = vmatmul.mubr.bf16.gmra.mxu0 %v415
        %v606 = vpop.f32.mrf.mxu0
        %v607 = vadd.f32 %v295, %v606
        %v608 = vpop.f32.mrf.mxu0
        %v609 = vadd.f32 %v299, %v608
        %v610 = vpop.f32.mrf.mxu0
        %v611 = vadd.f32 %v295, %v610
        %v612 = vpop.f32.mrf.mxu0
        %v613 = vadd.f32 %v299, %v612
        %614 = vmatprep.mubr.bf16.mxu0 0
        %615 = vmatmul.mubr.bf16.gmra.mxu0 %v418
        %v616 = vpop.f32.mrf.mxu0
        %v617 = vadd.f32 %v295, %v616
        %v618 = vpop.f32.mrf.mxu0
        %v619 = vadd.f32 %v299, %v618
        %v620 = vpop.f32.mrf.mxu0
        %v621 = vadd.f32 %v295, %v620
        %v622 = vpop.f32.mrf.mxu0
        %v623 = vadd.f32 %v299, %v622
        %624 = vmatprep.mubr.bf16.mxu0 0
        %625 = vmatmul.mubr.bf16.gmra.mxu0 %v421
        %v626 = vpop.f32.mrf.mxu0
        %v627 = vadd.f32 %v295, %v626
        %v628 = vpop.f32.mrf.mxu0
        %v629 = vadd.f32 %v299, %v628
        %v630 = vpop.f32.mrf.mxu0
        %v631 = vadd.f32 %v295, %v630
        %v632 = vpop.f32.mrf.mxu0
        %v633 = vadd.f32 %v299, %v632
        %634 = vmatprep.mubr.bf16.mxu0 0
        %635 = vmatmul.mubr.bf16.gmra.mxu0 %v424
        %v636 = vpop.f32.mrf.mxu0
        %v637 = vadd.f32 %v295, %v636
        %v638 = vpop.f32.mrf.mxu0
        %v639 = vadd.f32 %v299, %v638
        %v640 = vpop.f32.mrf.mxu0
        %v641 = vadd.f32 %v295, %v640
        %v642 = vpop.f32.mrf.mxu0
        %v643 = vadd.f32 %v299, %v642
        %644 = vmatprep.mubr.bf16.mxu0 0
        %645 = vmatmul.mubr.bf16.gmra.mxu0 %v427
        %v646 = vpop.f32.mrf.mxu0
        %v647 = vadd.f32 %v295, %v646
        %v648 = vpop.f32.mrf.mxu0
        %v649 = vadd.f32 %v299, %v648
        %v650 = vpop.f32.mrf.mxu0
        %v651 = vadd.f32 %v295, %v650
        %v652 = vpop.f32.mrf.mxu0
        %v653 = vadd.f32 %v299, %v652
        %654 = vdwg.mxu0
        %655 = vmatprep.subr.bf16.mxu0 0
        %656 = vmatpush1.bf16.msra.mxu0 0
        %657 = vmatprep.subr.bf16.mxu0 0
        %658 = vmatpush1.bf16.msra.mxu0 0
        %659 = vmatprep.subr.bf16.mxu0 0
        %660 = vmatpush1.bf16.msra.mxu0 0
        %661 = vmatprep.subr.bf16.mxu0 0
        %662 = vmatpush1.bf16.msra.mxu0 0
        %663 = vmatprep.subr.bf16.mxu0 0
        %664 = vmatpush1.bf16.msra.mxu0 0
        %665 = vmatprep.subr.bf16.mxu0 0
        %666 = vmatpush1.bf16.msra.mxu0 0
        %667 = vmatprep.subr.bf16.mxu0 %v385
        %668 = vmatpush1.bf16.msra.mxu0 %v384
        %669 = vmatprep.subr.bf16.mxu0 %v377
        %670 = vmatpush1.bf16.msra.mxu0 %v376
        %671 = vmatprep.subr.bf16.mxu0 0
        %672 = vmatpush2.bf16.msra.mxu0 0
        %673 = vmatprep.subr.bf16.mxu0 0
        %674 = vmatpush2.bf16.msra.mxu0 0
        %675 = vmatprep.subr.bf16.mxu0 0
        %676 = vmatpush2.bf16.msra.mxu0 0
        %677 = vmatprep.subr.bf16.mxu0 0
        %678 = vmatpush2.bf16.msra.mxu0 0
        %679 = vmatprep.subr.bf16.mxu0 0
        %680 = vmatpush2.bf16.msra.mxu0 0
        %681 = vmatprep.subr.bf16.mxu0 0
        %682 = vmatpush2.bf16.msra.mxu0 0
        %683 = vmatprep.subr.bf16.mxu0 0
        %684 = vmatpush2.bf16.msra.mxu0 0
        %685 = vmatprep.subr.bf16.mxu0 0
        %686 = vmatpush2.bf16.msra.mxu0 0
        %687 = vmatprep.mubr.bf16.mxu0 0
        %688 = vmatmul.mubr.bf16.gmra.mxu0 %v406
        %v689 = vpop.f32.mrf.mxu0
        %v690 = vadd.f32 %v303, %v689
        %v691 = vpop.f32.mrf.mxu0
        %v692 = vadd.f32 %v307, %v691
        %v693 = vpop.f32.mrf.mxu0
        %v694 = vadd.f32 %v303, %v693
        %v695 = vpop.f32.mrf.mxu0
        %v696 = vadd.f32 %v307, %v695
        %697 = vmatprep.mubr.bf16.mxu0 0
        %698 = vmatmul.mubr.bf16.gmra.mxu0 %v409
        %v699 = vpop.f32.mrf.mxu0
        %v700 = vadd.f32 %v303, %v699
        %v701 = vpop.f32.mrf.mxu0
        %v702 = vadd.f32 %v307, %v701
        %v703 = vpop.f32.mrf.mxu0
        %v704 = vadd.f32 %v303, %v703
        %v705 = vpop.f32.mrf.mxu0
        %v706 = vadd.f32 %v307, %v705
        %707 = vmatprep.mubr.bf16.mxu0 0
        %708 = vmatmul.mubr.bf16.gmra.mxu0 %v412
        %v709 = vpop.f32.mrf.mxu0
        %v710 = vadd.f32 %v303, %v709
        %v711 = vpop.f32.mrf.mxu0
        %v712 = vadd.f32 %v307, %v711
        %v713 = vpop.f32.mrf.mxu0
        %v714 = vadd.f32 %v303, %v713
        %v715 = vpop.f32.mrf.mxu0
        %v716 = vadd.f32 %v307, %v715
        %717 = vmatprep.mubr.bf16.mxu0 0
        %718 = vmatmul.mubr.bf16.gmra.mxu0 %v415
        %v719 = vpop.f32.mrf.mxu0
        %v720 = vadd.f32 %v303, %v719
        %v721 = vpop.f32.mrf.mxu0
        %v722 = vadd.f32 %v307, %v721
        %v723 = vpop.f32.mrf.mxu0
        %v724 = vadd.f32 %v303, %v723
        %v725 = vpop.f32.mrf.mxu0
        %v726 = vadd.f32 %v307, %v725
        %727 = vmatprep.mubr.bf16.mxu0 0
        %728 = vmatmul.mubr.bf16.gmra.mxu0 %v418
        %v729 = vpop.f32.mrf.mxu0
        %v730 = vadd.f32 %v303, %v729
        %v731 = vpop.f32.mrf.mxu0
        %v732 = vadd.f32 %v307, %v731
        %v733 = vpop.f32.mrf.mxu0
        %v734 = vadd.f32 %v303, %v733
        %v735 = vpop.f32.mrf.mxu0
        %v736 = vadd.f32 %v307, %v735
        %737 = vmatprep.mubr.bf16.mxu0 0
        %738 = vmatmul.mubr.bf16.gmra.mxu0 %v421
        %v739 = vpop.f32.mrf.mxu0
        %v740 = vadd.f32 %v303, %v739
        %v741 = vpop.f32.mrf.mxu0
        %v742 = vadd.f32 %v307, %v741
        %v743 = vpop.f32.mrf.mxu0
        %v744 = vadd.f32 %v303, %v743
        %v745 = vpop.f32.mrf.mxu0
        %v746 = vadd.f32 %v307, %v745
        %747 = vmatprep.mubr.bf16.mxu0 0
        %748 = vmatmul.mubr.bf16.gmra.mxu0 %v424
        %v749 = vpop.f32.mrf.mxu0
        %v750 = vadd.f32 %v303, %v749
        %v751 = vpop.f32.mrf.mxu0
        %v752 = vadd.f32 %v307, %v751
        %v753 = vpop.f32.mrf.mxu0
        %v754 = vadd.f32 %v303, %v753
        %v755 = vpop.f32.mrf.mxu0
        %v756 = vadd.f32 %v307, %v755
        %757 = vmatprep.mubr.bf16.mxu0 0
        %758 = vmatmul.mubr.bf16.gmra.mxu0 %v427
        %v759 = vpop.f32.mrf.mxu0
        %v760 = vadd.f32 %v303, %v759
        %v761 = vpop.f32.mrf.mxu0
        %v762 = vadd.f32 %v307, %v761
        %v763 = vpop.f32.mrf.mxu0
        %v764 = vadd.f32 %v303, %v763
        %v765 = vpop.f32.mrf.mxu0
        %v766 = vadd.f32 %v307, %v765
        %767 = vdwg.mxu0
        %768 = vmatprep.subr.bf16.mxu0 0
        %769 = vmatpush1.bf16.msra.mxu0 0
        %770 = vmatprep.subr.bf16.mxu0 0
        %771 = vmatpush1.bf16.msra.mxu0 0
        %772 = vmatprep.subr.bf16.mxu0 0
        %773 = vmatpush1.bf16.msra.mxu0 0
        %774 = vmatprep.subr.bf16.mxu0 0
        %775 = vmatpush1.bf16.msra.mxu0 0
        %776 = vmatprep.subr.bf16.mxu0 0
        %777 = vmatpush1.bf16.msra.mxu0 0
        %778 = vmatprep.subr.bf16.mxu0 0
        %779 = vmatpush1.bf16.msra.mxu0 0
        %780 = vmatprep.subr.bf16.mxu0 %v387
        %781 = vmatpush1.bf16.msra.mxu0 %v386
        %782 = vmatprep.subr.bf16.mxu0 %v379
        %783 = vmatpush1.bf16.msra.mxu0 %v378
        %784 = vmatprep.subr.bf16.mxu0 0
        %785 = vmatpush2.bf16.msra.mxu0 0
        %786 = vmatprep.subr.bf16.mxu0 0
        %787 = vmatpush2.bf16.msra.mxu0 0
        %788 = vmatprep.subr.bf16.mxu0 0
        %789 = vmatpush2.bf16.msra.mxu0 0
        %790 = vmatprep.subr.bf16.mxu0 0
        %791 = vmatpush2.bf16.msra.mxu0 0
        %792 = vmatprep.subr.bf16.mxu0 0
        %793 = vmatpush2.bf16.msra.mxu0 0
        %794 = vmatprep.subr.bf16.mxu0 0
        %795 = vmatpush2.bf16.msra.mxu0 0
        %796 = vmatprep.subr.bf16.mxu0 0
        %797 = vmatpush2.bf16.msra.mxu0 0
        %798 = vmatprep.subr.bf16.mxu0 0
        %799 = vmatpush2.bf16.msra.mxu0 0
        %800 = vmatprep.mubr.bf16.mxu0 0
        %801 = vmatmul.mubr.bf16.gmra.mxu0 %v406
        %v802 = vpop.f32.mrf.mxu0
        %v803 = vadd.f32 %v311, %v802
        %v804 = vpop.f32.mrf.mxu0
        %v805 = vadd.f32 %v315, %v804
        %v806 = vpop.f32.mrf.mxu0
        %v807 = vadd.f32 %v311, %v806
        %v808 = vpop.f32.mrf.mxu0
        %v809 = vadd.f32 %v315, %v808
        %810 = vmatprep.mubr.bf16.mxu0 0
        %811 = vmatmul.mubr.bf16.gmra.mxu0 %v409
        %v812 = vpop.f32.mrf.mxu0
        %v813 = vadd.f32 %v311, %v812
        %v814 = vpop.f32.mrf.mxu0
        %v815 = vadd.f32 %v315, %v814
        %v816 = vpop.f32.mrf.mxu0
        %v817 = vadd.f32 %v311, %v816
        %v818 = vpop.f32.mrf.mxu0
        %v819 = vadd.f32 %v315, %v818
        %820 = vmatprep.mubr.bf16.mxu0 0
        %821 = vmatmul.mubr.bf16.gmra.mxu0 %v412
        %v822 = vpop.f32.mrf.mxu0
        %v823 = vadd.f32 %v311, %v822
        %v824 = vpop.f32.mrf.mxu0
        %v825 = vadd.f32 %v315, %v824
        %v826 = vpop.f32.mrf.mxu0
        %v827 = vadd.f32 %v311, %v826
        %v828 = vpop.f32.mrf.mxu0
        %v829 = vadd.f32 %v315, %v828
        %830 = vmatprep.mubr.bf16.mxu0 0
        %831 = vmatmul.mubr.bf16.gmra.mxu0 %v415
        %v832 = vpop.f32.mrf.mxu0
        %v833 = vadd.f32 %v311, %v832
        %v834 = vpop.f32.mrf.mxu0
        %v835 = vadd.f32 %v315, %v834
        %v836 = vpop.f32.mrf.mxu0
        %v837 = vadd.f32 %v311, %v836
        %v838 = vpop.f32.mrf.mxu0
        %v839 = vadd.f32 %v315, %v838
        %840 = vmatprep.mubr.bf16.mxu0 0
        %841 = vmatmul.mubr.bf16.gmra.mxu0 %v418
        %v842 = vpop.f32.mrf.mxu0
        %v843 = vadd.f32 %v311, %v842
        %v844 = vpop.f32.mrf.mxu0
        %v845 = vadd.f32 %v315, %v844
        %v846 = vpop.f32.mrf.mxu0
        %v847 = vadd.f32 %v311, %v846
        %v848 = vpop.f32.mrf.mxu0
        %v849 = vadd.f32 %v315, %v848
        %850 = vmatprep.mubr.bf16.mxu0 0
        %851 = vmatmul.mubr.bf16.gmra.mxu0 %v421
        %v852 = vpop.f32.mrf.mxu0
        %v853 = vadd.f32 %v311, %v852
        %v854 = vpop.f32.mrf.mxu0
        %v855 = vadd.f32 %v315, %v854
        %v856 = vpop.f32.mrf.mxu0
        %v857 = vadd.f32 %v311, %v856
        %v858 = vpop.f32.mrf.mxu0
        %v859 = vadd.f32 %v315, %v858
        %860 = vmatprep.mubr.bf16.mxu0 0
        %861 = vmatmul.mubr.bf16.gmra.mxu0 %v424
        %v862 = vpop.f32.mrf.mxu0
        %v863 = vadd.f32 %v311, %v862
        %v864 = vpop.f32.mrf.mxu0
        %v865 = vadd.f32 %v315, %v864
        %v866 = vpop.f32.mrf.mxu0
        %v867 = vadd.f32 %v311, %v866
        %v868 = vpop.f32.mrf.mxu0
        %v869 = vadd.f32 %v315, %v868
        %870 = vmatprep.mubr.bf16.mxu0 0
        %871 = vmatmul.mubr.bf16.gmra.mxu0 %v427
        %v872 = vpop.f32.mrf.mxu0
        %v873 = vadd.f32 %v311, %v872
        %v874 = vpop.f32.mrf.mxu0
        %v875 = vadd.f32 %v315, %v874
        %v876 = vpop.f32.mrf.mxu0
        %v877 = vadd.f32 %v311, %v876
        %v878 = vpop.f32.mrf.mxu0
        %v879 = vadd.f32 %v315, %v878
        %880 = vdwg.mxu0
        %v881 = vmax.f32 %v464, 0.0
        %v882 = vmax.f32 %v466, 0.0
        %v883 = vmax.f32 %v577, 0.0
        %v884 = vmax.f32 %v579, 0.0
        %v885 = vmax.f32 %v690, 0.0
        %v886 = vmax.f32 %v692, 0.0
        %v887 = vmax.f32 %v803, 0.0
        %v888 = vmax.f32 %v805, 0.0
        %v889 = vmax.f32 %v468, 0.0
        %v890 = vmax.f32 %v470, 0.0
        %v891 = vmax.f32 %v581, 0.0
        %v892 = vmax.f32 %v583, 0.0
        %v893 = vmax.f32 %v694, 0.0
        %v894 = vmax.f32 %v696, 0.0
        %v895 = vmax.f32 %v807, 0.0
        %v896 = vmax.f32 %v809, 0.0
        %v897 = vmax.f32 %v474, 0.0
        %v898 = vmax.f32 %v476, 0.0
        %v899 = vmax.f32 %v587, 0.0
        %v900 = vmax.f32 %v589, 0.0
        %v901 = vmax.f32 %v700, 0.0
        %v902 = vmax.f32 %v702, 0.0
        %v903 = vmax.f32 %v813, 0.0
        %v904 = vmax.f32 %v815, 0.0
        %v905 = vmax.f32 %v478, 0.0
        %v906 = vmax.f32 %v480, 0.0
        %v907 = vmax.f32 %v591, 0.0
        %v908 = vmax.f32 %v593, 0.0
        %v909 = vmax.f32 %v704, 0.0
        %v910 = vmax.f32 %v706, 0.0
        %v911 = vmax.f32 %v817, 0.0
        %v912 = vmax.f32 %v819, 0.0
        %v913 = vmax.f32 %v484, 0.0
        %v914 = vmax.f32 %v486, 0.0
        %v915 = vmax.f32 %v597, 0.0
        %v916 = vmax.f32 %v599, 0.0
        %v917 = vmax.f32 %v710, 0.0
        %v918 = vmax.f32 %v712, 0.0
        %v919 = vmax.f32 %v823, 0.0
        %v920 = vmax.f32 %v825, 0.0
        %v921 = vmax.f32 %v488, 0.0
        %v922 = vmax.f32 %v490, 0.0
        %v923 = vmax.f32 %v601, 0.0
        %v924 = vmax.f32 %v603, 0.0
        %v925 = vmax.f32 %v714, 0.0
        %v926 = vmax.f32 %v716, 0.0
        %v927 = vmax.f32 %v827, 0.0
        %v928 = vmax.f32 %v829, 0.0
        %v929 = vmax.f32 %v494, 0.0
        %v930 = vmax.f32 %v496, 0.0
        %v931 = vmax.f32 %v607, 0.0
        %v932 = vmax.f32 %v609, 0.0
        %v933 = vmax.f32 %v720, 0.0
        %v934 = vmax.f32 %v722, 0.0
        %v935 = vmax.f32 %v833, 0.0
        %v936 = vmax.f32 %v835, 0.0
        %v937 = vmax.f32 %v498, 0.0
        %v938 = vmax.f32 %v500, 0.0
        %v939 = vmax.f32 %v611, 0.0
        %v940 = vmax.f32 %v613, 0.0
        %v941 = vmax.f32 %v724, 0.0
        %v942 = vmax.f32 %v726, 0.0
        %v943 = vmax.f32 %v837, 0.0
        %v944 = vmax.f32 %v839, 0.0
        %v945 = vmax.f32 %v504, 0.0
        %v946 = vmax.f32 %v506, 0.0
        %v947 = vmax.f32 %v617, 0.0
        %v948 = vmax.f32 %v619, 0.0
        %v949 = vmax.f32 %v730, 0.0
        %v950 = vmax.f32 %v732, 0.0
        %v951 = vmax.f32 %v843, 0.0
        %v952 = vmax.f32 %v845, 0.0
        %v953 = vmax.f32 %v508, 0.0
        %v954 = vmax.f32 %v510, 0.0
        %v955 = vmax.f32 %v621, 0.0
        %v956 = vmax.f32 %v623, 0.0
        %v957 = vmax.f32 %v734, 0.0
        %v958 = vmax.f32 %v736, 0.0
        %v959 = vmax.f32 %v847, 0.0
        %v960 = vmax.f32 %v849, 0.0
        %v961 = vmax.f32 %v514, 0.0
        %v962 = vmax.f32 %v516, 0.0
        %v963 = vmax.f32 %v627, 0.0
        %v964 = vmax.f32 %v629, 0.0
        %v965 = vmax.f32 %v740, 0.0
        %v966 = vmax.f32 %v742, 0.0
        %v967 = vmax.f32 %v853, 0.0
        %v968 = vmax.f32 %v855, 0.0
        %v969 = vmax.f32 %v518, 0.0
        %v970 = vmax.f32 %v520, 0.0
        %v971 = vmax.f32 %v631, 0.0
        %v972 = vmax.f32 %v633, 0.0
        %v973 = vmax.f32 %v744, 0.0
        %v974 = vmax.f32 %v746, 0.0
        %v975 = vmax.f32 %v857, 0.0
        %v976 = vmax.f32 %v859, 0.0
        %v977 = vmax.f32 %v524, 0.0
        %v978 = vmax.f32 %v526, 0.0
        %v979 = vmax.f32 %v637, 0.0
        %v980 = vmax.f32 %v639, 0.0
        %v981 = vmax.f32 %v750, 0.0
        %v982 = vmax.f32 %v752, 0.0
        %v983 = vmax.f32 %v863, 0.0
        %v984 = vmax.f32 %v865, 0.0
        %v985 = vmax.f32 %v528, 0.0
        %v986 = vmax.f32 %v530, 0.0
        %v987 = vmax.f32 %v641, 0.0
        %v988 = vmax.f32 %v643, 0.0
        %v989 = vmax.f32 %v754, 0.0
        %v990 = vmax.f32 %v756, 0.0
        %v991 = vmax.f32 %v867, 0.0
        %v992 = vmax.f32 %v869, 0.0
        %v993 = vmax.f32 %v534, 0.0
        %v994 = vmax.f32 %v536, 0.0
        %v995 = vmax.f32 %v647, 0.0
        %v996 = vmax.f32 %v649, 0.0
        %v997 = vmax.f32 %v760, 0.0
        %v998 = vmax.f32 %v762, 0.0
        %v999 = vmax.f32 %v873, 0.0
        %v1000 = vmax.f32 %v875, 0.0
        %v1001 = vmax.f32 %v538, 0.0
        %v1002 = vmax.f32 %v540, 0.0
        %v1003 = vmax.f32 %v651, 0.0
        %v1004 = vmax.f32 %v653, 0.0
        %v1005 = vmax.f32 %v764, 0.0
        %v1006 = vmax.f32 %v766, 0.0
        %v1007 = vmax.f32 %v877, 0.0
        %v1008 = vmax.f32 %v879, 0.0
        %v1009 = vpack.c.bf16 %v889, %v881
        %v1010 = vpack.c.bf16 %v890, %v882
        %v1011 = vpack.c.bf16 %v891, %v883
        %v1012 = vpack.c.bf16 %v892, %v884
        %v1013 = vpack.c.bf16 %v893, %v885
        %v1014 = vpack.c.bf16 %v894, %v886
        %v1015 = vpack.c.bf16 %v895, %v887
        %v1016 = vpack.c.bf16 %v896, %v888
        %v1017 = vpack.c.bf16 %v905, %v897
        %v1018 = vpack.c.bf16 %v906, %v898
        %v1019 = vpack.c.bf16 %v907, %v899
        %v1020 = vpack.c.bf16 %v908, %v900
        %v1021 = vpack.c.bf16 %v909, %v901
        %v1022 = vpack.c.bf16 %v910, %v902
        %v1023 = vpack.c.bf16 %v911, %v903
        %v1024 = vpack.c.bf16 %v912, %v904
        %v1025 = vpack.c.bf16 %v921, %v913
        %v1026 = vpack.c.bf16 %v922, %v914
        %v1027 = vpack.c.bf16 %v923, %v915
        %v1028 = vpack.c.bf16 %v924, %v916
        %v1029 = vpack.c.bf16 %v925, %v917
        %v1030 = vpack.c.bf16 %v926, %v918
        %v1031 = vpack.c.bf16 %v927, %v919
        %v1032 = vpack.c.bf16 %v928, %v920
        %v1033 = vpack.c.bf16 %v937, %v929
        %v1034 = vpack.c.bf16 %v938, %v930
        %v1035 = vpack.c.bf16 %v939, %v931
        %v1036 = vpack.c.bf16 %v940, %v932
        %v1037 = vpack.c.bf16 %v941, %v933
        %v1038 = vpack.c.bf16 %v942, %v934
        %v1039 = vpack.c.bf16 %v943, %v935
        %v1040 = vpack.c.bf16 %v944, %v936
        %v1041 = vpack.c.bf16 %v953, %v945
        %v1042 = vpack.c.bf16 %v954, %v946
        %v1043 = vpack.c.bf16 %v955, %v947
        %v1044 = vpack.c.bf16 %v956, %v948
        %v1045 = vpack.c.bf16 %v957, %v949
        %v1046 = vpack.c.bf16 %v958, %v950
        %v1047 = vpack.c.bf16 %v959, %v951
        %v1048 = vpack.c.bf16 %v960, %v952
        %v1049 = vpack.c.bf16 %v969, %v961
        %v1050 = vpack.c.bf16 %v970, %v962
        %v1051 = vpack.c.bf16 %v971, %v963
        %v1052 = vpack.c.bf16 %v972, %v964
        %v1053 = vpack.c.bf16 %v973, %v965
        %v1054 = vpack.c.bf16 %v974, %v966
        %v1055 = vpack.c.bf16 %v975, %v967
        %v1056 = vpack.c.bf16 %v976, %v968
        %v1057 = vpack.c.bf16 %v985, %v977
        %v1058 = vpack.c.bf16 %v986, %v978
        %v1059 = vpack.c.bf16 %v987, %v979
        %v1060 = vpack.c.bf16 %v988, %v980
        %v1061 = vpack.c.bf16 %v989, %v981
        %v1062 = vpack.c.bf16 %v990, %v982
        %v1063 = vpack.c.bf16 %v991, %v983
        %v1064 = vpack.c.bf16 %v992, %v984
        %v1065 = vpack.c.bf16 %v1001, %v993
        %v1066 = vpack.c.bf16 %v1002, %v994
        %v1067 = vpack.c.bf16 %v1003, %v995
        %v1068 = vpack.c.bf16 %v1004, %v996
        %v1069 = vpack.c.bf16 %v1005, %v997
        %v1070 = vpack.c.bf16 %v1006, %v998
        %v1071 = vpack.c.bf16 %v1007, %v999
        %v1072 = vpack.c.bf16 %v1008, %v1000
        %v1073 = vld [vmem:[#allocation2] sm:$0xff]
        %v1074 = vld [vmem:[#allocation2 + $0x8] sm:$0xff]
        %v1075 = vld [vmem:[#allocation2 + $0x10] sm:$0xff]
        %v1076 = vld [vmem:[#allocation2 + $0x18] sm:$0xff]
        %v1077 = vld [vmem:[#allocation2 + $0x20] sm:$0xff]
        %v1078 = vld [vmem:[#allocation2 + $0x28] sm:$0xff]
        %v1079 = vld [vmem:[#allocation2 + $0x30] sm:$0xff]
        %v1080 = vld [vmem:[#allocation2 + $0x38] sm:$0xff]
        %v1081 = vld [vmem:[#allocation2 + $0x40] sm:$0xff]
        %v1082 = vld [vmem:[#allocation2 + $0x48] sm:$0xff]
        %v1083 = vld [vmem:[#allocation2 + $0x50] sm:$0xff]
        %v1084 = vld [vmem:[#allocation2 + $0x58] sm:$0xff]
        %v1085 = vld [vmem:[#allocation2 + $0x60] sm:$0xff]
        %v1086 = vld [vmem:[#allocation2 + $0x68] sm:$0xff]
        %v1087 = vld [vmem:[#allocation2 + $0x70] sm:$0xff]
        %v1088 = vld [vmem:[#allocation2 + $0x78] sm:$0xff]
        %v1089 = vld [vmem:[#allocation2 + $0x80] sm:$0xff]
        %v1090 = vld [vmem:[#allocation2 + $0x88] sm:$0xff]
        %v1091 = vld [vmem:[#allocation2 + $0x90] sm:$0xff]
        %v1092 = vld [vmem:[#allocation2 + $0x98] sm:$0xff]
        %v1093 = vld [vmem:[#allocation2 + $0xa0] sm:$0xff]
        %v1094 = vld [vmem:[#allocation2 + $0xa8] sm:$0xff]
        %v1095 = vld [vmem:[#allocation2 + $0xb0] sm:$0xff]
        %v1096 = vld [vmem:[#allocation2 + $0xb8] sm:$0xff]
        %v1097 = vld [vmem:[#allocation2 + $0xc0] sm:$0xff]
        %v1098 = vld [vmem:[#allocation2 + $0xc8] sm:$0xff]
        %v1099 = vld [vmem:[#allocation2 + $0xd0] sm:$0xff]
        %v1100 = vld [vmem:[#allocation2 + $0xd8] sm:$0xff]
        %v1101 = vld [vmem:[#allocation2 + $0xe0] sm:$0xff]
        %v1102 = vld [vmem:[#allocation2 + $0xe8] sm:$0xff]
        %v1103 = vld [vmem:[#allocation2 + $0xf0] sm:$0xff]
        %v1104 = vld [vmem:[#allocation2 + $0xf8] sm:$0xff]
        %v1105 = vld [vmem:[#allocation2 + $0x100] sm:$0xff]
        %v1106 = vld [vmem:[#allocation2 + $0x108] sm:$0xff]
        %v1107 = vld [vmem:[#allocation2 + $0x110] sm:$0xff]
        %v1108 = vld [vmem:[#allocation2 + $0x118] sm:$0xff]
        %v1109 = vld [vmem:[#allocation2 + $0x120] sm:$0xff]
        %v1110 = vld [vmem:[#allocation2 + $0x128] sm:$0xff]
        %v1111 = vld [vmem:[#allocation2 + $0x130] sm:$0xff]
        %v1112 = vld [vmem:[#allocation2 + $0x138] sm:$0xff]
        %v1113 = vld [vmem:[#allocation2 + $0x140] sm:$0xff]
        %v1114 = vld [vmem:[#allocation2 + $0x148] sm:$0xff]
        %v1115 = vld [vmem:[#allocation2 + $0x150] sm:$0xff]
        %v1116 = vld [vmem:[#allocation2 + $0x158] sm:$0xff]
        %v1117 = vld [vmem:[#allocation2 + $0x160] sm:$0xff]
        %v1118 = vld [vmem:[#allocation2 + $0x168] sm:$0xff]
        %v1119 = vld [vmem:[#allocation2 + $0x170] sm:$0xff]
        %v1120 = vld [vmem:[#allocation2 + $0x178] sm:$0xff]
        %v1121 = vld [vmem:[#allocation2 + $0x180] sm:$0xff]
        %v1122 = vld [vmem:[#allocation2 + $0x188] sm:$0xff]
        %v1123 = vld [vmem:[#allocation2 + $0x190] sm:$0xff]
        %v1124 = vld [vmem:[#allocation2 + $0x198] sm:$0xff]
        %v1125 = vld [vmem:[#allocation2 + $0x1a0] sm:$0xff]
        %v1126 = vld [vmem:[#allocation2 + $0x1a8] sm:$0xff]
        %v1127 = vld [vmem:[#allocation2 + $0x1b0] sm:$0xff]
        %v1128 = vld [vmem:[#allocation2 + $0x1b8] sm:$0xff]
        %v1129 = vld [vmem:[#allocation2 + $0x1c0] sm:$0xff]
        %v1130 = vld [vmem:[#allocation2 + $0x1c8] sm:$0xff]
        %v1131 = vld [vmem:[#allocation2 + $0x1d0] sm:$0xff]
        %v1132 = vld [vmem:[#allocation2 + $0x1d8] sm:$0xff]
        %v1133 = vld [vmem:[#allocation2 + $0x1e0] sm:$0xff]
        %v1134 = vld [vmem:[#allocation2 + $0x1e8] sm:$0xff]
        %v1135 = vld [vmem:[#allocation2 + $0x1f0] sm:$0xff]
        %v1136 = vld [vmem:[#allocation2 + $0x1f8] sm:$0xff]
        %v1137 = vld [vmem:[#allocation2 + $0x200] sm:$0xff]
        %v1138 = vld [vmem:[#allocation2 + $0x208] sm:$0xff]
        %v1139 = vld [vmem:[#allocation2 + $0x210] sm:$0xff]
        %v1140 = vld [vmem:[#allocation2 + $0x218] sm:$0xff]
        %v1141 = vld [vmem:[#allocation2 + $0x220] sm:$0xff]
        %v1142 = vld [vmem:[#allocation2 + $0x228] sm:$0xff]
        %v1143 = vld [vmem:[#allocation2 + $0x230] sm:$0xff]
        %v1144 = vld [vmem:[#allocation2 + $0x238] sm:$0xff]
        %v1145 = vld [vmem:[#allocation2 + $0x240] sm:$0xff]
        %v1146 = vld [vmem:[#allocation2 + $0x248] sm:$0xff]
        %v1147 = vld [vmem:[#allocation2 + $0x250] sm:$0xff]
        %v1148 = vld [vmem:[#allocation2 + $0x258] sm:$0xff]
        %v1149 = vld [vmem:[#allocation2 + $0x260] sm:$0xff]
        %v1150 = vld [vmem:[#allocation2 + $0x268] sm:$0xff]
        %v1151 = vld [vmem:[#allocation2 + $0x270] sm:$0xff]
        %v1152 = vld [vmem:[#allocation2 + $0x278] sm:$0xff]
        %v1153 = vld [vmem:[#allocation2 + $0x280] sm:$0xff]
        %v1154 = vld [vmem:[#allocation2 + $0x288] sm:$0xff]
        %v1155 = vld [vmem:[#allocation2 + $0x290] sm:$0xff]
        %v1156 = vld [vmem:[#allocation2 + $0x298] sm:$0xff]
        %v1157 = vld [vmem:[#allocation2 + $0x2a0] sm:$0xff]
        %v1158 = vld [vmem:[#allocation2 + $0x2a8] sm:$0xff]
        %v1159 = vld [vmem:[#allocation2 + $0x2b0] sm:$0xff]
        %v1160 = vld [vmem:[#allocation2 + $0x2b8] sm:$0xff]
        %v1161 = vld [vmem:[#allocation2 + $0x2c0] sm:$0xff]
        %v1162 = vld [vmem:[#allocation2 + $0x2c8] sm:$0xff]
        %v1163 = vld [vmem:[#allocation2 + $0x2d0] sm:$0xff]
        %v1164 = vld [vmem:[#allocation2 + $0x2d8] sm:$0xff]
        %v1165 = vld [vmem:[#allocation2 + $0x2e0] sm:$0xff]
        %v1166 = vld [vmem:[#allocation2 + $0x2e8] sm:$0xff]
        %v1167 = vld [vmem:[#allocation2 + $0x2f0] sm:$0xff]
        %v1168 = vld [vmem:[#allocation2 + $0x2f8] sm:$0xff]
        %v1169 = vld [vmem:[#allocation2 + $0x300] sm:$0xff]
        %v1170 = vld [vmem:[#allocation2 + $0x308] sm:$0xff]
        %v1171 = vld [vmem:[#allocation2 + $0x310] sm:$0xff]
        %v1172 = vld [vmem:[#allocation2 + $0x318] sm:$0xff]
        %v1173 = vld [vmem:[#allocation2 + $0x320] sm:$0xff]
        %v1174 = vld [vmem:[#allocation2 + $0x328] sm:$0xff]
        %v1175 = vld [vmem:[#allocation2 + $0x330] sm:$0xff]
        %v1176 = vld [vmem:[#allocation2 + $0x338] sm:$0xff]
        %v1177 = vld [vmem:[#allocation2 + $0x340] sm:$0xff]
        %v1178 = vld [vmem:[#allocation2 + $0x348] sm:$0xff]
        %v1179 = vld [vmem:[#allocation2 + $0x350] sm:$0xff]
        %v1180 = vld [vmem:[#allocation2 + $0x358] sm:$0xff]
        %v1181 = vld [vmem:[#allocation2 + $0x360] sm:$0xff]
        %v1182 = vld [vmem:[#allocation2 + $0x368] sm:$0xff]
        %v1183 = vld [vmem:[#allocation2 + $0x370] sm:$0xff]
        %v1184 = vld [vmem:[#allocation2 + $0x378] sm:$0xff]
        %v1185 = vld [vmem:[#allocation2 + $0x380] sm:$0xff]
        %v1186 = vld [vmem:[#allocation2 + $0x388] sm:$0xff]
        %v1187 = vld [vmem:[#allocation2 + $0x390] sm:$0xff]
        %v1188 = vld [vmem:[#allocation2 + $0x398] sm:$0xff]
        %v1189 = vld [vmem:[#allocation2 + $0x3a0] sm:$0xff]
        %v1190 = vld [vmem:[#allocation2 + $0x3a8] sm:$0xff]
        %v1191 = vld [vmem:[#allocation2 + $0x3b0] sm:$0xff]
        %v1192 = vld [vmem:[#allocation2 + $0x3b8] sm:$0xff]
        %v1193 = vld [vmem:[#allocation2 + $0x3c0] sm:$0xff]
        %v1194 = vld [vmem:[#allocation2 + $0x3c8] sm:$0xff]
        %v1195 = vld [vmem:[#allocation2 + $0x3d0] sm:$0xff]
        %v1196 = vld [vmem:[#allocation2 + $0x3d8] sm:$0xff]
        %v1197 = vld [vmem:[#allocation2 + $0x3e0] sm:$0xff]
        %v1198 = vld [vmem:[#allocation2 + $0x3e8] sm:$0xff]
        %v1199 = vld [vmem:[#allocation2 + $0x3f0] sm:$0xff]
        %v1200 = vld [vmem:[#allocation2 + $0x3f8] sm:$0xff]
        %v1201 = vld [vmem:[#allocation2 + $0x400] sm:$0xff]
        %v1202 = vld [vmem:[#allocation2 + $0x408] sm:$0xff]
        %v1203 = vld [vmem:[#allocation2 + $0x410] sm:$0xff]
        %v1204 = vld [vmem:[#allocation2 + $0x418] sm:$0xff]
        %v1205 = vld [vmem:[#allocation2 + $0x420] sm:$0xff]
        %v1206 = vld [vmem:[#allocation2 + $0x428] sm:$0xff]
        %v1207 = vld [vmem:[#allocation2 + $0x430] sm:$0xff]
        %v1208 = vld [vmem:[#allocation2 + $0x438] sm:$0xff]
        %v1209 = vld [vmem:[#allocation2 + $0x440] sm:$0xff]
        %v1210 = vld [vmem:[#allocation2 + $0x448] sm:$0xff]
        %v1211 = vld [vmem:[#allocation2 + $0x450] sm:$0xff]
        %v1212 = vld [vmem:[#allocation2 + $0x458] sm:$0xff]
        %v1213 = vld [vmem:[#allocation2 + $0x460] sm:$0xff]
        %v1214 = vld [vmem:[#allocation2 + $0x468] sm:$0xff]
        %v1215 = vld [vmem:[#allocation2 + $0x470] sm:$0xff]
        %v1216 = vld [vmem:[#allocation2 + $0x478] sm:$0xff]
        %v1217 = vld [vmem:[#allocation2 + $0x480] sm:$0xff]
        %v1218 = vld [vmem:[#allocation2 + $0x488] sm:$0xff]
        %v1219 = vld [vmem:[#allocation2 + $0x490] sm:$0xff]
        %v1220 = vld [vmem:[#allocation2 + $0x498] sm:$0xff]
        %v1221 = vld [vmem:[#allocation2 + $0x4a0] sm:$0xff]
        %v1222 = vld [vmem:[#allocation2 + $0x4a8] sm:$0xff]
        %v1223 = vld [vmem:[#allocation2 + $0x4b0] sm:$0xff]
        %v1224 = vld [vmem:[#allocation2 + $0x4b8] sm:$0xff]
        %v1225 = vld [vmem:[#allocation2 + $0x4c0] sm:$0xff]
        %v1226 = vld [vmem:[#allocation2 + $0x4c8] sm:$0xff]
        %v1227 = vld [vmem:[#allocation2 + $0x4d0] sm:$0xff]
        %v1228 = vld [vmem:[#allocation2 + $0x4d8] sm:$0xff]
        %v1229 = vld [vmem:[#allocation2 + $0x4e0] sm:$0xff]
        %v1230 = vld [vmem:[#allocation2 + $0x4e8] sm:$0xff]
        %v1231 = vld [vmem:[#allocation2 + $0x4f0] sm:$0xff]
        %v1232 = vld [vmem:[#allocation2 + $0x4f8] sm:$0xff]
        %v1233 = vld [vmem:[#allocation2 + $0x500] sm:$0xff]
        %v1234 = vld [vmem:[#allocation2 + $0x508] sm:$0xff]
        %v1235 = vld [vmem:[#allocation2 + $0x510] sm:$0xff]
        %v1236 = vld [vmem:[#allocation2 + $0x518] sm:$0xff]
        %v1237 = vld [vmem:[#allocation2 + $0x520] sm:$0xff]
        %v1238 = vld [vmem:[#allocation2 + $0x528] sm:$0xff]
        %v1239 = vld [vmem:[#allocation2 + $0x530] sm:$0xff]
        %v1240 = vld [vmem:[#allocation2 + $0x538] sm:$0xff]
        %v1241 = vld [vmem:[#allocation2 + $0x540] sm:$0xff]
        %v1242 = vld [vmem:[#allocation2 + $0x548] sm:$0xff]
        %v1243 = vld [vmem:[#allocation2 + $0x550] sm:$0xff]
        %v1244 = vld [vmem:[#allocation2 + $0x558] sm:$0xff]
        %v1245 = vld [vmem:[#allocation2 + $0x560] sm:$0xff]
        %v1246 = vld [vmem:[#allocation2 + $0x568] sm:$0xff]
        %v1247 = vld [vmem:[#allocation2 + $0x570] sm:$0xff]
        %v1248 = vld [vmem:[#allocation2 + $0x578] sm:$0xff]
        %v1249 = vld [vmem:[#allocation2 + $0x580] sm:$0xff]
        %v1250 = vld [vmem:[#allocation2 + $0x588] sm:$0xff]
        %v1251 = vld [vmem:[#allocation2 + $0x590] sm:$0xff]
        %v1252 = vld [vmem:[#allocation2 + $0x598] sm:$0xff]
        %v1253 = vld [vmem:[#allocation2 + $0x5a0] sm:$0xff]
        %v1254 = vld [vmem:[#allocation2 + $0x5a8] sm:$0xff]
        %v1255 = vld [vmem:[#allocation2 + $0x5b0] sm:$0xff]
        %v1256 = vld [vmem:[#allocation2 + $0x5b8] sm:$0xff]
        %v1257 = vld [vmem:[#allocation2 + $0x5c0] sm:$0xff]
        %v1258 = vld [vmem:[#allocation2 + $0x5c8] sm:$0xff]
        %v1259 = vld [vmem:[#allocation2 + $0x5d0] sm:$0xff]
        %v1260 = vld [vmem:[#allocation2 + $0x5d8] sm:$0xff]
        %v1261 = vld [vmem:[#allocation2 + $0x5e0] sm:$0xff]
        %v1262 = vld [vmem:[#allocation2 + $0x5e8] sm:$0xff]
        %v1263 = vld [vmem:[#allocation2 + $0x5f0] sm:$0xff]
        %v1264 = vld [vmem:[#allocation2 + $0x5f8] sm:$0xff]
        %v1265 = vld [vmem:[#allocation2 + $0x600] sm:$0xff]
        %v1266 = vld [vmem:[#allocation2 + $0x608] sm:$0xff]
        %v1267 = vld [vmem:[#allocation2 + $0x610] sm:$0xff]
        %v1268 = vld [vmem:[#allocation2 + $0x618] sm:$0xff]
        %v1269 = vld [vmem:[#allocation2 + $0x620] sm:$0xff]
        %v1270 = vld [vmem:[#allocation2 + $0x628] sm:$0xff]
        %v1271 = vld [vmem:[#allocation2 + $0x630] sm:$0xff]
        %v1272 = vld [vmem:[#allocation2 + $0x638] sm:$0xff]
        %v1273 = vld [vmem:[#allocation2 + $0x640] sm:$0xff]
        %v1274 = vld [vmem:[#allocation2 + $0x648] sm:$0xff]
        %v1275 = vld [vmem:[#allocation2 + $0x650] sm:$0xff]
        %v1276 = vld [vmem:[#allocation2 + $0x658] sm:$0xff]
        %v1277 = vld [vmem:[#allocation2 + $0x660] sm:$0xff]
        %v1278 = vld [vmem:[#allocation2 + $0x668] sm:$0xff]
        %v1279 = vld [vmem:[#allocation2 + $0x670] sm:$0xff]
        %v1280 = vld [vmem:[#allocation2 + $0x678] sm:$0xff]
        %v1281 = vld [vmem:[#allocation2 + $0x680] sm:$0xff]
        %v1282 = vld [vmem:[#allocation2 + $0x688] sm:$0xff]
        %v1283 = vld [vmem:[#allocation2 + $0x690] sm:$0xff]
        %v1284 = vld [vmem:[#allocation2 + $0x698] sm:$0xff]
        %v1285 = vld [vmem:[#allocation2 + $0x6a0] sm:$0xff]
        %v1286 = vld [vmem:[#allocation2 + $0x6a8] sm:$0xff]
        %v1287 = vld [vmem:[#allocation2 + $0x6b0] sm:$0xff]
        %v1288 = vld [vmem:[#allocation2 + $0x6b8] sm:$0xff]
        %v1289 = vld [vmem:[#allocation2 + $0x6c0] sm:$0xff]
        %v1290 = vld [vmem:[#allocation2 + $0x6c8] sm:$0xff]
        %v1291 = vld [vmem:[#allocation2 + $0x6d0] sm:$0xff]
        %v1292 = vld [vmem:[#allocation2 + $0x6d8] sm:$0xff]
        %v1293 = vld [vmem:[#allocation2 + $0x6e0] sm:$0xff]
        %v1294 = vld [vmem:[#allocation2 + $0x6e8] sm:$0xff]
        %v1295 = vld [vmem:[#allocation2 + $0x6f0] sm:$0xff]
        %v1296 = vld [vmem:[#allocation2 + $0x6f8] sm:$0xff]
        %v1297 = vld [vmem:[#allocation2 + $0x700] sm:$0xff]
        %v1298 = vld [vmem:[#allocation2 + $0x708] sm:$0xff]
        %v1299 = vld [vmem:[#allocation2 + $0x710] sm:$0xff]
        %v1300 = vld [vmem:[#allocation2 + $0x718] sm:$0xff]
        %v1301 = vld [vmem:[#allocation2 + $0x720] sm:$0xff]
        %v1302 = vld [vmem:[#allocation2 + $0x728] sm:$0xff]
        %v1303 = vld [vmem:[#allocation2 + $0x730] sm:$0xff]
        %v1304 = vld [vmem:[#allocation2 + $0x738] sm:$0xff]
        %v1305 = vld [vmem:[#allocation2 + $0x740] sm:$0xff]
        %v1306 = vld [vmem:[#allocation2 + $0x748] sm:$0xff]
        %v1307 = vld [vmem:[#allocation2 + $0x750] sm:$0xff]
        %v1308 = vld [vmem:[#allocation2 + $0x758] sm:$0xff]
        %v1309 = vld [vmem:[#allocation2 + $0x760] sm:$0xff]
        %v1310 = vld [vmem:[#allocation2 + $0x768] sm:$0xff]
        %v1311 = vld [vmem:[#allocation2 + $0x770] sm:$0xff]
        %v1312 = vld [vmem:[#allocation2 + $0x778] sm:$0xff]
        %v1313 = vld [vmem:[#allocation2 + $0x780] sm:$0xff]
        %v1314 = vld [vmem:[#allocation2 + $0x788] sm:$0xff]
        %v1315 = vld [vmem:[#allocation2 + $0x790] sm:$0xff]
        %v1316 = vld [vmem:[#allocation2 + $0x798] sm:$0xff]
        %v1317 = vld [vmem:[#allocation2 + $0x7a0] sm:$0xff]
        %v1318 = vld [vmem:[#allocation2 + $0x7a8] sm:$0xff]
        %v1319 = vld [vmem:[#allocation2 + $0x7b0] sm:$0xff]
        %v1320 = vld [vmem:[#allocation2 + $0x7b8] sm:$0xff]
        %v1321 = vld [vmem:[#allocation2 + $0x7c0] sm:$0xff]
        %v1322 = vld [vmem:[#allocation2 + $0x7c8] sm:$0xff]
        %v1323 = vld [vmem:[#allocation2 + $0x7d0] sm:$0xff]
        %v1324 = vld [vmem:[#allocation2 + $0x7d8] sm:$0xff]
        %v1325 = vld [vmem:[#allocation2 + $0x7e0] sm:$0xff]
        %v1326 = vld [vmem:[#allocation2 + $0x7e8] sm:$0xff]
        %v1327 = vld [vmem:[#allocation2 + $0x7f0] sm:$0xff]
        %v1328 = vld [vmem:[#allocation2 + $0x7f8] sm:$0xff]
        %v1329 = vld [vmem:[%s4] sm:$0xf]
        %v1331 = vlaneseq
        %v1332 = vshrl.u32 %v1331, 7
        %v1333 = vsub.s32 0, %v1332
        %v1334 = vrot.slane %v1329, %v1333
        %v1335 = vlaneseq
        %v1336 = vshrl.u32 %v1335, 7
        %v1337 = vsub.s32 1, %v1336
        %v1338 = vrot.slane %v1329, %v1337
        %v1339 = vlaneseq
        %v1340 = vshrl.u32 %v1339, 7
        %v1341 = vsub.s32 2, %v1340
        %v1342 = vrot.slane %v1329, %v1341
        %v1343 = vlaneseq
        %v1344 = vshrl.u32 %v1343, 7
        %v1345 = vsub.s32 3, %v1344
        %v1346 = vrot.slane %v1329, %v1345
        %v1607 = vunpack.c.l.b16 %v1073
        %v1608 = vunpack.c.h.b16 %v1073
        %v1609 = vunpack.c.l.b16 %v1074
        %v1610 = vunpack.c.h.b16 %v1074
        %v1611 = vunpack.c.l.b16 %v1075
        %v1612 = vunpack.c.h.b16 %v1075
        %v1613 = vunpack.c.l.b16 %v1076
        %v1614 = vunpack.c.h.b16 %v1076
        %v1615 = vunpack.c.l.b16 %v1077
        %v1616 = vunpack.c.h.b16 %v1077
        %v1617 = vunpack.c.l.b16 %v1078
        %v1618 = vunpack.c.h.b16 %v1078
        %v1619 = vunpack.c.l.b16 %v1079
        %v1620 = vunpack.c.h.b16 %v1079
        %v1621 = vunpack.c.l.b16 %v1080
        %v1622 = vunpack.c.h.b16 %v1080
        %v1623 = vunpack.c.l.b16 %v1081
        %v1624 = vunpack.c.h.b16 %v1081
        %v1625 = vunpack.c.l.b16 %v1082
        %v1626 = vunpack.c.h.b16 %v1082
        %v1627 = vunpack.c.l.b16 %v1083
        %v1628 = vunpack.c.h.b16 %v1083
        %v1629 = vunpack.c.l.b16 %v1084
        %v1630 = vunpack.c.h.b16 %v1084
        %v1631 = vunpack.c.l.b16 %v1085
        %v1632 = vunpack.c.h.b16 %v1085
        %v1633 = vunpack.c.l.b16 %v1086
        %v1634 = vunpack.c.h.b16 %v1086
        %v1635 = vunpack.c.l.b16 %v1087
        %v1636 = vunpack.c.h.b16 %v1087
        %v1637 = vunpack.c.l.b16 %v1088
        %v1638 = vunpack.c.h.b16 %v1088
        %v1639 = vunpack.c.l.b16 %v1089
        %v1640 = vunpack.c.h.b16 %v1089
        %v1641 = vunpack.c.l.b16 %v1090
        %v1642 = vunpack.c.h.b16 %v1090
        %v1643 = vunpack.c.l.b16 %v1091
        %v1644 = vunpack.c.h.b16 %v1091
        %v1645 = vunpack.c.l.b16 %v1092
        %v1646 = vunpack.c.h.b16 %v1092
        %v1647 = vunpack.c.l.b16 %v1093
        %v1648 = vunpack.c.h.b16 %v1093
        %v1649 = vunpack.c.l.b16 %v1094
        %v1650 = vunpack.c.h.b16 %v1094
        %v1651 = vunpack.c.l.b16 %v1095
        %v1652 = vunpack.c.h.b16 %v1095
        %v1653 = vunpack.c.l.b16 %v1096
        %v1654 = vunpack.c.h.b16 %v1096
        %v1655 = vunpack.c.l.b16 %v1097
        %v1656 = vunpack.c.h.b16 %v1097
        %v1657 = vunpack.c.l.b16 %v1098
        %v1658 = vunpack.c.h.b16 %v1098
        %v1659 = vunpack.c.l.b16 %v1099
        %v1660 = vunpack.c.h.b16 %v1099
        %v1661 = vunpack.c.l.b16 %v1100
        %v1662 = vunpack.c.h.b16 %v1100
        %v1663 = vunpack.c.l.b16 %v1101
        %v1664 = vunpack.c.h.b16 %v1101
        %v1665 = vunpack.c.l.b16 %v1102
        %v1666 = vunpack.c.h.b16 %v1102
        %v1667 = vunpack.c.l.b16 %v1103
        %v1668 = vunpack.c.h.b16 %v1103
        %v1669 = vunpack.c.l.b16 %v1104
        %v1670 = vunpack.c.h.b16 %v1104
        %v1671 = vunpack.c.l.b16 %v1105
        %v1672 = vunpack.c.h.b16 %v1105
        %v1673 = vunpack.c.l.b16 %v1106
        %v1674 = vunpack.c.h.b16 %v1106
        %v1675 = vunpack.c.l.b16 %v1107
        %v1676 = vunpack.c.h.b16 %v1107
        %v1677 = vunpack.c.l.b16 %v1108
        %v1678 = vunpack.c.h.b16 %v1108
        %v1679 = vunpack.c.l.b16 %v1109
        %v1680 = vunpack.c.h.b16 %v1109
        %v1681 = vunpack.c.l.b16 %v1110
        %v1682 = vunpack.c.h.b16 %v1110
        %v1683 = vunpack.c.l.b16 %v1111
        %v1684 = vunpack.c.h.b16 %v1111
        %v1685 = vunpack.c.l.b16 %v1112
        %v1686 = vunpack.c.h.b16 %v1112
        %v1687 = vunpack.c.l.b16 %v1113
        %v1688 = vunpack.c.h.b16 %v1113
        %v1689 = vunpack.c.l.b16 %v1114
        %v1690 = vunpack.c.h.b16 %v1114
        %v1691 = vunpack.c.l.b16 %v1115
        %v1692 = vunpack.c.h.b16 %v1115
        %v1693 = vunpack.c.l.b16 %v1116
        %v1694 = vunpack.c.h.b16 %v1116
        %v1695 = vunpack.c.l.b16 %v1117
        %v1696 = vunpack.c.h.b16 %v1117
        %v1697 = vunpack.c.l.b16 %v1118
        %v1698 = vunpack.c.h.b16 %v1118
        %v1699 = vunpack.c.l.b16 %v1119
        %v1700 = vunpack.c.h.b16 %v1119
        %v1701 = vunpack.c.l.b16 %v1120
        %v1702 = vunpack.c.h.b16 %v1120
        %v1703 = vunpack.c.l.b16 %v1121
        %v1704 = vunpack.c.h.b16 %v1121
        %v1705 = vunpack.c.l.b16 %v1122
        %v1706 = vunpack.c.h.b16 %v1122
        %v1707 = vunpack.c.l.b16 %v1123
        %v1708 = vunpack.c.h.b16 %v1123
        %v1709 = vunpack.c.l.b16 %v1124
        %v1710 = vunpack.c.h.b16 %v1124
        %v1711 = vunpack.c.l.b16 %v1125
        %v1712 = vunpack.c.h.b16 %v1125
        %v1713 = vunpack.c.l.b16 %v1126
        %v1714 = vunpack.c.h.b16 %v1126
        %v1715 = vunpack.c.l.b16 %v1127
        %v1716 = vunpack.c.h.b16 %v1127
        %v1717 = vunpack.c.l.b16 %v1128
        %v1718 = vunpack.c.h.b16 %v1128
        %v1719 = vunpack.c.l.b16 %v1129
        %v1720 = vunpack.c.h.b16 %v1129
        %v1721 = vunpack.c.l.b16 %v1130
        %v1722 = vunpack.c.h.b16 %v1130
        %v1723 = vunpack.c.l.b16 %v1131
        %v1724 = vunpack.c.h.b16 %v1131
        %v1725 = vunpack.c.l.b16 %v1132
        %v1726 = vunpack.c.h.b16 %v1132
        %v1727 = vunpack.c.l.b16 %v1133
        %v1728 = vunpack.c.h.b16 %v1133
        %v1729 = vunpack.c.l.b16 %v1134
        %v1730 = vunpack.c.h.b16 %v1134
        %v1731 = vunpack.c.l.b16 %v1135
        %v1732 = vunpack.c.h.b16 %v1135
        %v1733 = vunpack.c.l.b16 %v1136
        %v1734 = vunpack.c.h.b16 %v1136
        %v1735 = vunpack.c.l.b16 %v1137
        %v1736 = vunpack.c.h.b16 %v1137
        %v1737 = vunpack.c.l.b16 %v1138
        %v1738 = vunpack.c.h.b16 %v1138
        %v1739 = vunpack.c.l.b16 %v1139
        %v1740 = vunpack.c.h.b16 %v1139
        %v1741 = vunpack.c.l.b16 %v1140
        %v1742 = vunpack.c.h.b16 %v1140
        %v1743 = vunpack.c.l.b16 %v1141
        %v1744 = vunpack.c.h.b16 %v1141
        %v1745 = vunpack.c.l.b16 %v1142
        %v1746 = vunpack.c.h.b16 %v1142
        %v1747 = vunpack.c.l.b16 %v1143
        %v1748 = vunpack.c.h.b16 %v1143
        %v1749 = vunpack.c.l.b16 %v1144
        %v1750 = vunpack.c.h.b16 %v1144
        %v1751 = vunpack.c.l.b16 %v1145
        %v1752 = vunpack.c.h.b16 %v1145
        %v1753 = vunpack.c.l.b16 %v1146
        %v1754 = vunpack.c.h.b16 %v1146
        %v1755 = vunpack.c.l.b16 %v1147
        %v1756 = vunpack.c.h.b16 %v1147
        %v1757 = vunpack.c.l.b16 %v1148
        %v1758 = vunpack.c.h.b16 %v1148
        %v1759 = vunpack.c.l.b16 %v1149
        %v1760 = vunpack.c.h.b16 %v1149
        %v1761 = vunpack.c.l.b16 %v1150
        %v1762 = vunpack.c.h.b16 %v1150
        %v1763 = vunpack.c.l.b16 %v1151
        %v1764 = vunpack.c.h.b16 %v1151
        %v1765 = vunpack.c.l.b16 %v1152
        %v1766 = vunpack.c.h.b16 %v1152
        %v1767 = vunpack.c.l.b16 %v1153
        %v1768 = vunpack.c.h.b16 %v1153
        %v1769 = vunpack.c.l.b16 %v1154
        %v1770 = vunpack.c.h.b16 %v1154
        %v1771 = vunpack.c.l.b16 %v1155
        %v1772 = vunpack.c.h.b16 %v1155
        %v1773 = vunpack.c.l.b16 %v1156
        %v1774 = vunpack.c.h.b16 %v1156
        %v1775 = vunpack.c.l.b16 %v1157
        %v1776 = vunpack.c.h.b16 %v1157
        %v1777 = vunpack.c.l.b16 %v1158
        %v1778 = vunpack.c.h.b16 %v1158
        %v1779 = vunpack.c.l.b16 %v1159
        %v1780 = vunpack.c.h.b16 %v1159
        %v1781 = vunpack.c.l.b16 %v1160
        %v1782 = vunpack.c.h.b16 %v1160
        %v1783 = vunpack.c.l.b16 %v1161
        %v1784 = vunpack.c.h.b16 %v1161
        %v1785 = vunpack.c.l.b16 %v1162
        %v1786 = vunpack.c.h.b16 %v1162
        %v1787 = vunpack.c.l.b16 %v1163
        %v1788 = vunpack.c.h.b16 %v1163
        %v1789 = vunpack.c.l.b16 %v1164
        %v1790 = vunpack.c.h.b16 %v1164
        %v1791 = vunpack.c.l.b16 %v1165
        %v1792 = vunpack.c.h.b16 %v1165
        %v1793 = vunpack.c.l.b16 %v1166
        %v1794 = vunpack.c.h.b16 %v1166
        %v1795 = vunpack.c.l.b16 %v1167
        %v1796 = vunpack.c.h.b16 %v1167
        %v1797 = vunpack.c.l.b16 %v1168
        %v1798 = vunpack.c.h.b16 %v1168
        %v1799 = vunpack.c.l.b16 %v1169
        %v1800 = vunpack.c.h.b16 %v1169
        %v1801 = vunpack.c.l.b16 %v1170
        %v1802 = vunpack.c.h.b16 %v1170
        %v1803 = vunpack.c.l.b16 %v1171
        %v1804 = vunpack.c.h.b16 %v1171
        %v1805 = vunpack.c.l.b16 %v1172
        %v1806 = vunpack.c.h.b16 %v1172
        %v1807 = vunpack.c.l.b16 %v1173
        %v1808 = vunpack.c.h.b16 %v1173
        %v1809 = vunpack.c.l.b16 %v1174
        %v1810 = vunpack.c.h.b16 %v1174
        %v1811 = vunpack.c.l.b16 %v1175
        %v1812 = vunpack.c.h.b16 %v1175
        %v1813 = vunpack.c.l.b16 %v1176
        %v1814 = vunpack.c.h.b16 %v1176
        %v1815 = vunpack.c.l.b16 %v1177
        %v1816 = vunpack.c.h.b16 %v1177
        %v1817 = vunpack.c.l.b16 %v1178
        %v1818 = vunpack.c.h.b16 %v1178
        %v1819 = vunpack.c.l.b16 %v1179
        %v1820 = vunpack.c.h.b16 %v1179
        %v1821 = vunpack.c.l.b16 %v1180
        %v1822 = vunpack.c.h.b16 %v1180
        %v1823 = vunpack.c.l.b16 %v1181
        %v1824 = vunpack.c.h.b16 %v1181
        %v1825 = vunpack.c.l.b16 %v1182
        %v1826 = vunpack.c.h.b16 %v1182
        %v1827 = vunpack.c.l.b16 %v1183
        %v1828 = vunpack.c.h.b16 %v1183
        %v1829 = vunpack.c.l.b16 %v1184
        %v1830 = vunpack.c.h.b16 %v1184
        %v1831 = vunpack.c.l.b16 %v1185
        %v1832 = vunpack.c.h.b16 %v1185
        %v1833 = vunpack.c.l.b16 %v1186
        %v1834 = vunpack.c.h.b16 %v1186
        %v1835 = vunpack.c.l.b16 %v1187
        %v1836 = vunpack.c.h.b16 %v1187
        %v1837 = vunpack.c.l.b16 %v1188
        %v1838 = vunpack.c.h.b16 %v1188
        %v1839 = vunpack.c.l.b16 %v1189
        %v1840 = vunpack.c.h.b16 %v1189
        %v1841 = vunpack.c.l.b16 %v1190
        %v1842 = vunpack.c.h.b16 %v1190
        %v1843 = vunpack.c.l.b16 %v1191
        %v1844 = vunpack.c.h.b16 %v1191
        %v1845 = vunpack.c.l.b16 %v1192
        %v1846 = vunpack.c.h.b16 %v1192
        %v1847 = vunpack.c.l.b16 %v1193
        %v1848 = vunpack.c.h.b16 %v1193
        %v1849 = vunpack.c.l.b16 %v1194
        %v1850 = vunpack.c.h.b16 %v1194
        %v1851 = vunpack.c.l.b16 %v1195
        %v1852 = vunpack.c.h.b16 %v1195
        %v1853 = vunpack.c.l.b16 %v1196
        %v1854 = vunpack.c.h.b16 %v1196
        %v1855 = vunpack.c.l.b16 %v1197
        %v1856 = vunpack.c.h.b16 %v1197
        %v1857 = vunpack.c.l.b16 %v1198
        %v1858 = vunpack.c.h.b16 %v1198
        %v1859 = vunpack.c.l.b16 %v1199
        %v1860 = vunpack.c.h.b16 %v1199
        %v1861 = vunpack.c.l.b16 %v1200
        %v1862 = vunpack.c.h.b16 %v1200
        %v1863 = vunpack.c.l.b16 %v1201
        %v1864 = vunpack.c.h.b16 %v1201
        %v1865 = vunpack.c.l.b16 %v1202
        %v1866 = vunpack.c.h.b16 %v1202
        %v1867 = vunpack.c.l.b16 %v1203
        %v1868 = vunpack.c.h.b16 %v1203
        %v1869 = vunpack.c.l.b16 %v1204
        %v1870 = vunpack.c.h.b16 %v1204
        %v1871 = vunpack.c.l.b16 %v1205
        %v1872 = vunpack.c.h.b16 %v1205
        %v1873 = vunpack.c.l.b16 %v1206
        %v1874 = vunpack.c.h.b16 %v1206
        %v1875 = vunpack.c.l.b16 %v1207
        %v1876 = vunpack.c.h.b16 %v1207
        %v1877 = vunpack.c.l.b16 %v1208
        %v1878 = vunpack.c.h.b16 %v1208
        %v1879 = vunpack.c.l.b16 %v1209
        %v1880 = vunpack.c.h.b16 %v1209
        %v1881 = vunpack.c.l.b16 %v1210
        %v1882 = vunpack.c.h.b16 %v1210
        %v1883 = vunpack.c.l.b16 %v1211
        %v1884 = vunpack.c.h.b16 %v1211
        %v1885 = vunpack.c.l.b16 %v1212
        %v1886 = vunpack.c.h.b16 %v1212
        %v1887 = vunpack.c.l.b16 %v1213
        %v1888 = vunpack.c.h.b16 %v1213
        %v1889 = vunpack.c.l.b16 %v1214
        %v1890 = vunpack.c.h.b16 %v1214
        %v1891 = vunpack.c.l.b16 %v1215
        %v1892 = vunpack.c.h.b16 %v1215
        %v1893 = vunpack.c.l.b16 %v1216
        %v1894 = vunpack.c.h.b16 %v1216
        %v1895 = vunpack.c.l.b16 %v1217
        %v1896 = vunpack.c.h.b16 %v1217
        %v1897 = vunpack.c.l.b16 %v1218
        %v1898 = vunpack.c.h.b16 %v1218
        %v1899 = vunpack.c.l.b16 %v1219
        %v1900 = vunpack.c.h.b16 %v1219
        %v1901 = vunpack.c.l.b16 %v1220
        %v1902 = vunpack.c.h.b16 %v1220
        %v1903 = vunpack.c.l.b16 %v1221
        %v1904 = vunpack.c.h.b16 %v1221
        %v1905 = vunpack.c.l.b16 %v1222
        %v1906 = vunpack.c.h.b16 %v1222
        %v1907 = vunpack.c.l.b16 %v1223
        %v1908 = vunpack.c.h.b16 %v1223
        %v1909 = vunpack.c.l.b16 %v1224
        %v1910 = vunpack.c.h.b16 %v1224
        %v1911 = vunpack.c.l.b16 %v1225
        %v1912 = vunpack.c.h.b16 %v1225
        %v1913 = vunpack.c.l.b16 %v1226
        %v1914 = vunpack.c.h.b16 %v1226
        %v1915 = vunpack.c.l.b16 %v1227
        %v1916 = vunpack.c.h.b16 %v1227
        %v1917 = vunpack.c.l.b16 %v1228
        %v1918 = vunpack.c.h.b16 %v1228
        %v1919 = vunpack.c.l.b16 %v1229
        %v1920 = vunpack.c.h.b16 %v1229
        %v1921 = vunpack.c.l.b16 %v1230
        %v1922 = vunpack.c.h.b16 %v1230
        %v1923 = vunpack.c.l.b16 %v1231
        %v1924 = vunpack.c.h.b16 %v1231
        %v1925 = vunpack.c.l.b16 %v1232
        %v1926 = vunpack.c.h.b16 %v1232
        %v1927 = vunpack.c.l.b16 %v1233
        %v1928 = vunpack.c.h.b16 %v1233
        %v1929 = vunpack.c.l.b16 %v1234
        %v1930 = vunpack.c.h.b16 %v1234
        %v1931 = vunpack.c.l.b16 %v1235
        %v1932 = vunpack.c.h.b16 %v1235
        %v1933 = vunpack.c.l.b16 %v1236
        %v1934 = vunpack.c.h.b16 %v1236
        %v1935 = vunpack.c.l.b16 %v1237
        %v1936 = vunpack.c.h.b16 %v1237
        %v1937 = vunpack.c.l.b16 %v1238
        %v1938 = vunpack.c.h.b16 %v1238
        %v1939 = vunpack.c.l.b16 %v1239
        %v1940 = vunpack.c.h.b16 %v1239
        %v1941 = vunpack.c.l.b16 %v1240
        %v1942 = vunpack.c.h.b16 %v1240
        %v1943 = vunpack.c.l.b16 %v1241
        %v1944 = vunpack.c.h.b16 %v1241
        %v1945 = vunpack.c.l.b16 %v1242
        %v1946 = vunpack.c.h.b16 %v1242
        %v1947 = vunpack.c.l.b16 %v1243
        %v1948 = vunpack.c.h.b16 %v1243
        %v1949 = vunpack.c.l.b16 %v1244
        %v1950 = vunpack.c.h.b16 %v1244
        %v1951 = vunpack.c.l.b16 %v1245
        %v1952 = vunpack.c.h.b16 %v1245
        %v1953 = vunpack.c.l.b16 %v1246
        %v1954 = vunpack.c.h.b16 %v1246
        %v1955 = vunpack.c.l.b16 %v1247
        %v1956 = vunpack.c.h.b16 %v1247
        %v1957 = vunpack.c.l.b16 %v1248
        %v1958 = vunpack.c.h.b16 %v1248
        %v1959 = vunpack.c.l.b16 %v1249
        %v1960 = vunpack.c.h.b16 %v1249
        %v1961 = vunpack.c.l.b16 %v1250
        %v1962 = vunpack.c.h.b16 %v1250
        %v1963 = vunpack.c.l.b16 %v1251
        %v1964 = vunpack.c.h.b16 %v1251
        %v1965 = vunpack.c.l.b16 %v1252
        %v1966 = vunpack.c.h.b16 %v1252
        %v1967 = vunpack.c.l.b16 %v1253
        %v1968 = vunpack.c.h.b16 %v1253
        %v1969 = vunpack.c.l.b16 %v1254
        %v1970 = vunpack.c.h.b16 %v1254
        %v1971 = vunpack.c.l.b16 %v1255
        %v1972 = vunpack.c.h.b16 %v1255
        %v1973 = vunpack.c.l.b16 %v1256
        %v1974 = vunpack.c.h.b16 %v1256
        %v1975 = vunpack.c.l.b16 %v1257
        %v1976 = vunpack.c.h.b16 %v1257
        %v1977 = vunpack.c.l.b16 %v1258
        %v1978 = vunpack.c.h.b16 %v1258
        %v1979 = vunpack.c.l.b16 %v1259
        %v1980 = vunpack.c.h.b16 %v1259
        %v1981 = vunpack.c.l.b16 %v1260
        %v1982 = vunpack.c.h.b16 %v1260
        %v1983 = vunpack.c.l.b16 %v1261
        %v1984 = vunpack.c.h.b16 %v1261
        %v1985 = vunpack.c.l.b16 %v1262
        %v1986 = vunpack.c.h.b16 %v1262
        %v1987 = vunpack.c.l.b16 %v1263
        %v1988 = vunpack.c.h.b16 %v1263
        %v1989 = vunpack.c.l.b16 %v1264
        %v1990 = vunpack.c.h.b16 %v1264
        %v1991 = vunpack.c.l.b16 %v1265
        %v1992 = vunpack.c.h.b16 %v1265
        %v1993 = vunpack.c.l.b16 %v1266
        %v1994 = vunpack.c.h.b16 %v1266
        %v1995 = vunpack.c.l.b16 %v1267
        %v1996 = vunpack.c.h.b16 %v1267
        %v1997 = vunpack.c.l.b16 %v1268
        %v1998 = vunpack.c.h.b16 %v1268
        %v1999 = vunpack.c.l.b16 %v1269
        %v2000 = vunpack.c.h.b16 %v1269
        %v2001 = vunpack.c.l.b16 %v1270
        %v2002 = vunpack.c.h.b16 %v1270
        %v2003 = vunpack.c.l.b16 %v1271
        %v2004 = vunpack.c.h.b16 %v1271
        %v2005 = vunpack.c.l.b16 %v1272
        %v2006 = vunpack.c.h.b16 %v1272
        %v2007 = vunpack.c.l.b16 %v1273
        %v2008 = vunpack.c.h.b16 %v1273
        %v2009 = vunpack.c.l.b16 %v1274
        %v2010 = vunpack.c.h.b16 %v1274
        %v2011 = vunpack.c.l.b16 %v1275
        %v2012 = vunpack.c.h.b16 %v1275
        %v2013 = vunpack.c.l.b16 %v1276
        %v2014 = vunpack.c.h.b16 %v1276
        %v2015 = vunpack.c.l.b16 %v1277
        %v2016 = vunpack.c.h.b16 %v1277
        %v2017 = vunpack.c.l.b16 %v1278
        %v2018 = vunpack.c.h.b16 %v1278
        %v2019 = vunpack.c.l.b16 %v1279
        %v2020 = vunpack.c.h.b16 %v1279
        %v2021 = vunpack.c.l.b16 %v1280
        %v2022 = vunpack.c.h.b16 %v1280
        %v2023 = vunpack.c.l.b16 %v1281
        %v2024 = vunpack.c.h.b16 %v1281
        %v2025 = vunpack.c.l.b16 %v1282
        %v2026 = vunpack.c.h.b16 %v1282
        %v2027 = vunpack.c.l.b16 %v1283
        %v2028 = vunpack.c.h.b16 %v1283
        %v2029 = vunpack.c.l.b16 %v1284
        %v2030 = vunpack.c.h.b16 %v1284
        %v2031 = vunpack.c.l.b16 %v1285
        %v2032 = vunpack.c.h.b16 %v1285
        %v2033 = vunpack.c.l.b16 %v1286
        %v2034 = vunpack.c.h.b16 %v1286
        %v2035 = vunpack.c.l.b16 %v1287
        %v2036 = vunpack.c.h.b16 %v1287
        %v2037 = vunpack.c.l.b16 %v1288
        %v2038 = vunpack.c.h.b16 %v1288
        %v2039 = vunpack.c.l.b16 %v1289
        %v2040 = vunpack.c.h.b16 %v1289
        %v2041 = vunpack.c.l.b16 %v1290
        %v2042 = vunpack.c.h.b16 %v1290
        %v2043 = vunpack.c.l.b16 %v1291
        %v2044 = vunpack.c.h.b16 %v1291
        %v2045 = vunpack.c.l.b16 %v1292
        %v2046 = vunpack.c.h.b16 %v1292
        %v2047 = vunpack.c.l.b16 %v1293
        %v2048 = vunpack.c.h.b16 %v1293
        %v2049 = vunpack.c.l.b16 %v1294
        %v2050 = vunpack.c.h.b16 %v1294
        %v2051 = vunpack.c.l.b16 %v1295
        %v2052 = vunpack.c.h.b16 %v1295
        %v2053 = vunpack.c.l.b16 %v1296
        %v2054 = vunpack.c.h.b16 %v1296
        %v2055 = vunpack.c.l.b16 %v1297
        %v2056 = vunpack.c.h.b16 %v1297
        %v2057 = vunpack.c.l.b16 %v1298
        %v2058 = vunpack.c.h.b16 %v1298
        %v2059 = vunpack.c.l.b16 %v1299
        %v2060 = vunpack.c.h.b16 %v1299
        %v2061 = vunpack.c.l.b16 %v1300
        %v2062 = vunpack.c.h.b16 %v1300
        %v2063 = vunpack.c.l.b16 %v1301
        %v2064 = vunpack.c.h.b16 %v1301
        %v2065 = vunpack.c.l.b16 %v1302
        %v2066 = vunpack.c.h.b16 %v1302
        %v2067 = vunpack.c.l.b16 %v1303
        %v2068 = vunpack.c.h.b16 %v1303
        %v2069 = vunpack.c.l.b16 %v1304
        %v2070 = vunpack.c.h.b16 %v1304
        %v2071 = vunpack.c.l.b16 %v1305
        %v2072 = vunpack.c.h.b16 %v1305
        %v2073 = vunpack.c.l.b16 %v1306
        %v2074 = vunpack.c.h.b16 %v1306
        %v2075 = vunpack.c.l.b16 %v1307
        %v2076 = vunpack.c.h.b16 %v1307
        %v2077 = vunpack.c.l.b16 %v1308
        %v2078 = vunpack.c.h.b16 %v1308
        %v2079 = vunpack.c.l.b16 %v1309
        %v2080 = vunpack.c.h.b16 %v1309
        %v2081 = vunpack.c.l.b16 %v1310
        %v2082 = vunpack.c.h.b16 %v1310
        %v2083 = vunpack.c.l.b16 %v1311
        %v2084 = vunpack.c.h.b16 %v1311
        %v2085 = vunpack.c.l.b16 %v1312
        %v2086 = vunpack.c.h.b16 %v1312
        %v2087 = vunpack.c.l.b16 %v1313
        %v2088 = vunpack.c.h.b16 %v1313
        %v2089 = vunpack.c.l.b16 %v1314
        %v2090 = vunpack.c.h.b16 %v1314
        %v2091 = vunpack.c.l.b16 %v1315
        %v2092 = vunpack.c.h.b16 %v1315
        %v2093 = vunpack.c.l.b16 %v1316
        %v2094 = vunpack.c.h.b16 %v1316
        %v2095 = vunpack.c.l.b16 %v1317
        %v2096 = vunpack.c.h.b16 %v1317
        %v2097 = vunpack.c.l.b16 %v1318
        %v2098 = vunpack.c.h.b16 %v1318
        %v2099 = vunpack.c.l.b16 %v1319
        %v2100 = vunpack.c.h.b16 %v1319
        %v2101 = vunpack.c.l.b16 %v1320
        %v2102 = vunpack.c.h.b16 %v1320
        %v2103 = vunpack.c.l.b16 %v1321
        %v2104 = vunpack.c.h.b16 %v1321
        %v2105 = vunpack.c.l.b16 %v1322
        %v2106 = vunpack.c.h.b16 %v1322
        %v2107 = vunpack.c.l.b16 %v1323
        %v2108 = vunpack.c.h.b16 %v1323
        %v2109 = vunpack.c.l.b16 %v1324
        %v2110 = vunpack.c.h.b16 %v1324
        %v2111 = vunpack.c.l.b16 %v1325
        %v2112 = vunpack.c.h.b16 %v1325
        %v2113 = vunpack.c.l.b16 %v1326
        %v2114 = vunpack.c.h.b16 %v1326
        %v2115 = vunpack.c.l.b16 %v1327
        %v2116 = vunpack.c.h.b16 %v1327
        %v2117 = vunpack.c.l.b16 %v1328
        %v2118 = vunpack.c.h.b16 %v1328
        %v2119 = vpack.c.b16 %v1611, %v1607
        %v2120 = vpack.c.b16 %v1612, %v1608
        %v2121 = vpack.c.b16 %v1613, %v1609
        %v2122 = vpack.c.b16 %v1614, %v1610
        %v2123 = vpack.c.b16 %v1619, %v1615
        %v2124 = vpack.c.b16 %v1620, %v1616
        %v2125 = vpack.c.b16 %v1621, %v1617
        %v2126 = vpack.c.b16 %v1622, %v1618
        %v2127 = vpack.c.b16 %v1627, %v1623
        %v2128 = vpack.c.b16 %v1628, %v1624
        %v2129 = vpack.c.b16 %v1629, %v1625
        %v2130 = vpack.c.b16 %v1630, %v1626
        %v2131 = vpack.c.b16 %v1635, %v1631
        %v2132 = vpack.c.b16 %v1636, %v1632
        %v2133 = vpack.c.b16 %v1637, %v1633
        %v2134 = vpack.c.b16 %v1638, %v1634
        %v2135 = vpack.c.b16 %v1643, %v1639
        %v2136 = vpack.c.b16 %v1644, %v1640
        %v2137 = vpack.c.b16 %v1645, %v1641
        %v2138 = vpack.c.b16 %v1646, %v1642
        %v2139 = vpack.c.b16 %v1651, %v1647
        %v2140 = vpack.c.b16 %v1652, %v1648
        %v2141 = vpack.c.b16 %v1653, %v1649
        %v2142 = vpack.c.b16 %v1654, %v1650
        %v2143 = vpack.c.b16 %v1659, %v1655
        %v2144 = vpack.c.b16 %v1660, %v1656
        %v2145 = vpack.c.b16 %v1661, %v1657
        %v2146 = vpack.c.b16 %v1662, %v1658
        %v2147 = vpack.c.b16 %v1667, %v1663
        %v2148 = vpack.c.b16 %v1668, %v1664
        %v2149 = vpack.c.b16 %v1669, %v1665
        %v2150 = vpack.c.b16 %v1670, %v1666
        %v2151 = vpack.c.b16 %v1675, %v1671
        %v2152 = vpack.c.b16 %v1676, %v1672
        %v2153 = vpack.c.b16 %v1677, %v1673
        %v2154 = vpack.c.b16 %v1678, %v1674
        %v2155 = vpack.c.b16 %v1683, %v1679
        %v2156 = vpack.c.b16 %v1684, %v1680
        %v2157 = vpack.c.b16 %v1685, %v1681
        %v2158 = vpack.c.b16 %v1686, %v1682
        %v2159 = vpack.c.b16 %v1691, %v1687
        %v2160 = vpack.c.b16 %v1692, %v1688
        %v2161 = vpack.c.b16 %v1693, %v1689
        %v2162 = vpack.c.b16 %v1694, %v1690
        %v2163 = vpack.c.b16 %v1699, %v1695
        %v2164 = vpack.c.b16 %v1700, %v1696
        %v2165 = vpack.c.b16 %v1701, %v1697
        %v2166 = vpack.c.b16 %v1702, %v1698
        %v2167 = vpack.c.b16 %v1707, %v1703
        %v2168 = vpack.c.b16 %v1708, %v1704
        %v2169 = vpack.c.b16 %v1709, %v1705
        %v2170 = vpack.c.b16 %v1710, %v1706
        %v2171 = vpack.c.b16 %v1715, %v1711
        %v2172 = vpack.c.b16 %v1716, %v1712
        %v2173 = vpack.c.b16 %v1717, %v1713
        %v2174 = vpack.c.b16 %v1718, %v1714
        %v2175 = vpack.c.b16 %v1723, %v1719
        %v2176 = vpack.c.b16 %v1724, %v1720
        %v2177 = vpack.c.b16 %v1725, %v1721
        %v2178 = vpack.c.b16 %v1726, %v1722
        %v2179 = vpack.c.b16 %v1731, %v1727
        %v2180 = vpack.c.b16 %v1732, %v1728
        %v2181 = vpack.c.b16 %v1733, %v1729
        %v2182 = vpack.c.b16 %v1734, %v1730
        %v2183 = vpack.c.b16 %v1739, %v1735
        %v2184 = vpack.c.b16 %v1740, %v1736
        %v2185 = vpack.c.b16 %v1741, %v1737
        %v2186 = vpack.c.b16 %v1742, %v1738
        %v2187 = vpack.c.b16 %v1747, %v1743
        %v2188 = vpack.c.b16 %v1748, %v1744
        %v2189 = vpack.c.b16 %v1749, %v1745
        %v2190 = vpack.c.b16 %v1750, %v1746
        %v2191 = vpack.c.b16 %v1755, %v1751
        %v2192 = vpack.c.b16 %v1756, %v1752
        %v2193 = vpack.c.b16 %v1757, %v1753
        %v2194 = vpack.c.b16 %v1758, %v1754
        %v2195 = vpack.c.b16 %v1763, %v1759
        %v2196 = vpack.c.b16 %v1764, %v1760
        %v2197 = vpack.c.b16 %v1765, %v1761
        %v2198 = vpack.c.b16 %v1766, %v1762
        %v2199 = vpack.c.b16 %v1771, %v1767
        %v2200 = vpack.c.b16 %v1772, %v1768
        %v2201 = vpack.c.b16 %v1773, %v1769
        %v2202 = vpack.c.b16 %v1774, %v1770
        %v2203 = vpack.c.b16 %v1779, %v1775
        %v2204 = vpack.c.b16 %v1780, %v1776
        %v2205 = vpack.c.b16 %v1781, %v1777
        %v2206 = vpack.c.b16 %v1782, %v1778
        %v2207 = vpack.c.b16 %v1787, %v1783
        %v2208 = vpack.c.b16 %v1788, %v1784
        %v2209 = vpack.c.b16 %v1789, %v1785
        %v2210 = vpack.c.b16 %v1790, %v1786
        %v2211 = vpack.c.b16 %v1795, %v1791
        %v2212 = vpack.c.b16 %v1796, %v1792
        %v2213 = vpack.c.b16 %v1797, %v1793
        %v2214 = vpack.c.b16 %v1798, %v1794
        %v2215 = vpack.c.b16 %v1803, %v1799
        %v2216 = vpack.c.b16 %v1804, %v1800
        %v2217 = vpack.c.b16 %v1805, %v1801
        %v2218 = vpack.c.b16 %v1806, %v1802
        %v2219 = vpack.c.b16 %v1811, %v1807
        %v2220 = vpack.c.b16 %v1812, %v1808
        %v2221 = vpack.c.b16 %v1813, %v1809
        %v2222 = vpack.c.b16 %v1814, %v1810
        %v2223 = vpack.c.b16 %v1819, %v1815
        %v2224 = vpack.c.b16 %v1820, %v1816
        %v2225 = vpack.c.b16 %v1821, %v1817
        %v2226 = vpack.c.b16 %v1822, %v1818
        %v2227 = vpack.c.b16 %v1827, %v1823
        %v2228 = vpack.c.b16 %v1828, %v1824
        %v2229 = vpack.c.b16 %v1829, %v1825
        %v2230 = vpack.c.b16 %v1830, %v1826
        %v2231 = vpack.c.b16 %v1835, %v1831
        %v2232 = vpack.c.b16 %v1836, %v1832
        %v2233 = vpack.c.b16 %v1837, %v1833
        %v2234 = vpack.c.b16 %v1838, %v1834
        %v2235 = vpack.c.b16 %v1843, %v1839
        %v2236 = vpack.c.b16 %v1844, %v1840
        %v2237 = vpack.c.b16 %v1845, %v1841
        %v2238 = vpack.c.b16 %v1846, %v1842
        %v2239 = vpack.c.b16 %v1851, %v1847
        %v2240 = vpack.c.b16 %v1852, %v1848
        %v2241 = vpack.c.b16 %v1853, %v1849
        %v2242 = vpack.c.b16 %v1854, %v1850
        %v2243 = vpack.c.b16 %v1859, %v1855
        %v2244 = vpack.c.b16 %v1860, %v1856
        %v2245 = vpack.c.b16 %v1861, %v1857
        %v2246 = vpack.c.b16 %v1862, %v1858
        %v2247 = vpack.c.b16 %v1867, %v1863
        %v2248 = vpack.c.b16 %v1868, %v1864
        %v2249 = vpack.c.b16 %v1869, %v1865
        %v2250 = vpack.c.b16 %v1870, %v1866
        %v2251 = vpack.c.b16 %v1875, %v1871
        %v2252 = vpack.c.b16 %v1876, %v1872
        %v2253 = vpack.c.b16 %v1877, %v1873
        %v2254 = vpack.c.b16 %v1878, %v1874
        %v2255 = vpack.c.b16 %v1883, %v1879
        %v2256 = vpack.c.b16 %v1884, %v1880
        %v2257 = vpack.c.b16 %v1885, %v1881
        %v2258 = vpack.c.b16 %v1886, %v1882
        %v2259 = vpack.c.b16 %v1891, %v1887
        %v2260 = vpack.c.b16 %v1892, %v1888
        %v2261 = vpack.c.b16 %v1893, %v1889
        %v2262 = vpack.c.b16 %v1894, %v1890
        %v2263 = vpack.c.b16 %v1899, %v1895
        %v2264 = vpack.c.b16 %v1900, %v1896
        %v2265 = vpack.c.b16 %v1901, %v1897
        %v2266 = vpack.c.b16 %v1902, %v1898
        %v2267 = vpack.c.b16 %v1907, %v1903
        %v2268 = vpack.c.b16 %v1908, %v1904
        %v2269 = vpack.c.b16 %v1909, %v1905
        %v2270 = vpack.c.b16 %v1910, %v1906
        %v2271 = vpack.c.b16 %v1915, %v1911
        %v2272 = vpack.c.b16 %v1916, %v1912
        %v2273 = vpack.c.b16 %v1917, %v1913
        %v2274 = vpack.c.b16 %v1918, %v1914
        %v2275 = vpack.c.b16 %v1923, %v1919
        %v2276 = vpack.c.b16 %v1924, %v1920
        %v2277 = vpack.c.b16 %v1925, %v1921
        %v2278 = vpack.c.b16 %v1926, %v1922
        %v2279 = vpack.c.b16 %v1931, %v1927
        %v2280 = vpack.c.b16 %v1932, %v1928
        %v2281 = vpack.c.b16 %v1933, %v1929
        %v2282 = vpack.c.b16 %v1934, %v1930
        %v2283 = vpack.c.b16 %v1939, %v1935
        %v2284 = vpack.c.b16 %v1940, %v1936
        %v2285 = vpack.c.b16 %v1941, %v1937
        %v2286 = vpack.c.b16 %v1942, %v1938
        %v2287 = vpack.c.b16 %v1947, %v1943
        %v2288 = vpack.c.b16 %v1948, %v1944
        %v2289 = vpack.c.b16 %v1949, %v1945
        %v2290 = vpack.c.b16 %v1950, %v1946
        %v2291 = vpack.c.b16 %v1955, %v1951
        %v2292 = vpack.c.b16 %v1956, %v1952
        %v2293 = vpack.c.b16 %v1957, %v1953
        %v2294 = vpack.c.b16 %v1958, %v1954
        %v2295 = vpack.c.b16 %v1963, %v1959
        %v2296 = vpack.c.b16 %v1964, %v1960
        %v2297 = vpack.c.b16 %v1965, %v1961
        %v2298 = vpack.c.b16 %v1966, %v1962
        %v2299 = vpack.c.b16 %v1971, %v1967
        %v2300 = vpack.c.b16 %v1972, %v1968
        %v2301 = vpack.c.b16 %v1973, %v1969
        %v2302 = vpack.c.b16 %v1974, %v1970
        %v2303 = vpack.c.b16 %v1979, %v1975
        %v2304 = vpack.c.b16 %v1980, %v1976
        %v2305 = vpack.c.b16 %v1981, %v1977
        %v2306 = vpack.c.b16 %v1982, %v1978
        %v2307 = vpack.c.b16 %v1987, %v1983
        %v2308 = vpack.c.b16 %v1988, %v1984
        %v2309 = vpack.c.b16 %v1989, %v1985
        %v2310 = vpack.c.b16 %v1990, %v1986
        %v2311 = vpack.c.b16 %v1995, %v1991
        %v2312 = vpack.c.b16 %v1996, %v1992
        %v2313 = vpack.c.b16 %v1997, %v1993
        %v2314 = vpack.c.b16 %v1998, %v1994
        %v2315 = vpack.c.b16 %v2003, %v1999
        %v2316 = vpack.c.b16 %v2004, %v2000
        %v2317 = vpack.c.b16 %v2005, %v2001
        %v2318 = vpack.c.b16 %v2006, %v2002
        %v2319 = vpack.c.b16 %v2011, %v2007
        %v2320 = vpack.c.b16 %v2012, %v2008
        %v2321 = vpack.c.b16 %v2013, %v2009
        %v2322 = vpack.c.b16 %v2014, %v2010
        %v2323 = vpack.c.b16 %v2019, %v2015
        %v2324 = vpack.c.b16 %v2020, %v2016
        %v2325 = vpack.c.b16 %v2021, %v2017
        %v2326 = vpack.c.b16 %v2022, %v2018
        %v2327 = vpack.c.b16 %v2027, %v2023
        %v2328 = vpack.c.b16 %v2028, %v2024
        %v2329 = vpack.c.b16 %v2029, %v2025
        %v2330 = vpack.c.b16 %v2030, %v2026
        %v2331 = vpack.c.b16 %v2035, %v2031
        %v2332 = vpack.c.b16 %v2036, %v2032
        %v2333 = vpack.c.b16 %v2037, %v2033
        %v2334 = vpack.c.b16 %v2038, %v2034
        %v2335 = vpack.c.b16 %v2043, %v2039
        %v2336 = vpack.c.b16 %v2044, %v2040
        %v2337 = vpack.c.b16 %v2045, %v2041
        %v2338 = vpack.c.b16 %v2046, %v2042
        %v2339 = vpack.c.b16 %v2051, %v2047
        %v2340 = vpack.c.b16 %v2052, %v2048
        %v2341 = vpack.c.b16 %v2053, %v2049
        %v2342 = vpack.c.b16 %v2054, %v2050
        %v2343 = vpack.c.b16 %v2059, %v2055
        %v2344 = vpack.c.b16 %v2060, %v2056
        %v2345 = vpack.c.b16 %v2061, %v2057
        %v2346 = vpack.c.b16 %v2062, %v2058
        %v2347 = vpack.c.b16 %v2067, %v2063
        %v2348 = vpack.c.b16 %v2068, %v2064
        %v2349 = vpack.c.b16 %v2069, %v2065
        %v2350 = vpack.c.b16 %v2070, %v2066
        %v2351 = vpack.c.b16 %v2075, %v2071
        %v2352 = vpack.c.b16 %v2076, %v2072
        %v2353 = vpack.c.b16 %v2077, %v2073
        %v2354 = vpack.c.b16 %v2078, %v2074
        %v2355 = vpack.c.b16 %v2083, %v2079
        %v2356 = vpack.c.b16 %v2084, %v2080
        %v2357 = vpack.c.b16 %v2085, %v2081
        %v2358 = vpack.c.b16 %v2086, %v2082
        %v2359 = vpack.c.b16 %v2091, %v2087
        %v2360 = vpack.c.b16 %v2092, %v2088
        %v2361 = vpack.c.b16 %v2093, %v2089
        %v2362 = vpack.c.b16 %v2094, %v2090
        %v2363 = vpack.c.b16 %v2099, %v2095
        %v2364 = vpack.c.b16 %v2100, %v2096
        %v2365 = vpack.c.b16 %v2101, %v2097
        %v2366 = vpack.c.b16 %v2102, %v2098
        %v2367 = vpack.c.b16 %v2107, %v2103
        %v2368 = vpack.c.b16 %v2108, %v2104
        %v2369 = vpack.c.b16 %v2109, %v2105
        %v2370 = vpack.c.b16 %v2110, %v2106
        %v2371 = vpack.c.b16 %v2115, %v2111
        %v2372 = vpack.c.b16 %v2116, %v2112
        %v2373 = vpack.c.b16 %v2117, %v2113
        %v2374 = vpack.c.b16 %v2118, %v2114
        %2631 = vmatprep.subr.bf16.mxu0 %v2148
        %2632 = vmatpush1.bf16.msra.mxu0 %v2147
        %2633 = vmatprep.subr.bf16.mxu0 %v2144
        %2634 = vmatpush1.bf16.msra.mxu0 %v2143
        %2635 = vmatprep.subr.bf16.mxu0 %v2140
        %2636 = vmatpush1.bf16.msra.mxu0 %v2139
        %2637 = vmatprep.subr.bf16.mxu0 %v2136
        %2638 = vmatpush1.bf16.msra.mxu0 %v2135
        %2639 = vmatprep.subr.bf16.mxu0 %v2132
        %2640 = vmatpush1.bf16.msra.mxu0 %v2131
        %2641 = vmatprep.subr.bf16.mxu0 %v2128
        %2642 = vmatpush1.bf16.msra.mxu0 %v2127
        %2643 = vmatprep.subr.bf16.mxu0 %v2124
        %2644 = vmatpush1.bf16.msra.mxu0 %v2123
        %2645 = vmatprep.subr.bf16.mxu0 %v2120
        %2646 = vmatpush1.bf16.msra.mxu0 %v2119
        %2647 = vmatprep.subr.bf16.mxu0 %v2180
        %2648 = vmatpush2.bf16.msra.mxu0 %v2179
        %2649 = vmatprep.subr.bf16.mxu0 %v2176
        %2650 = vmatpush2.bf16.msra.mxu0 %v2175
        %2651 = vmatprep.subr.bf16.mxu0 %v2172
        %2652 = vmatpush2.bf16.msra.mxu0 %v2171
        %2653 = vmatprep.subr.bf16.mxu0 %v2168
        %2654 = vmatpush2.bf16.msra.mxu0 %v2167
        %2655 = vmatprep.subr.bf16.mxu0 %v2164
        %2656 = vmatpush2.bf16.msra.mxu0 %v2163
        %2657 = vmatprep.subr.bf16.mxu0 %v2160
        %2658 = vmatpush2.bf16.msra.mxu0 %v2159
        %2659 = vmatprep.subr.bf16.mxu0 %v2156
        %2660 = vmatpush2.bf16.msra.mxu0 %v2155
        %2661 = vmatprep.subr.bf16.mxu0 %v2152
        %2662 = vmatpush2.bf16.msra.mxu0 %v2151
        %2663 = vmatprep.mubr.bf16.mxu0 %v1010
        %2664 = vmatmul.mubr.bf16.gmra.mxu0 %v1009
        %v2665 = vpop.f32.mrf.mxu0
        %v2666 = vadd.f32 %v1334, %v2665
        %v2667 = vpop.f32.mrf.mxu0
        %v2668 = vadd.f32 %v1338, %v2667
        %v2669 = vpop.f32.mrf.mxu0
        %v2670 = vadd.f32 %v1334, %v2669
        %v2671 = vpop.f32.mrf.mxu0
        %v2672 = vadd.f32 %v1338, %v2671
        %2673 = vmatprep.mubr.bf16.mxu0 %v1018
        %2674 = vmatmul.mubr.bf16.gmra.mxu0 %v1017
        %v2675 = vpop.f32.mrf.mxu0
        %v2676 = vadd.f32 %v1334, %v2675
        %v2677 = vpop.f32.mrf.mxu0
        %v2678 = vadd.f32 %v1338, %v2677
        %v2679 = vpop.f32.mrf.mxu0
        %v2680 = vadd.f32 %v1334, %v2679
        %v2681 = vpop.f32.mrf.mxu0
        %v2682 = vadd.f32 %v1338, %v2681
        %2683 = vmatprep.mubr.bf16.mxu0 %v1026
        %2684 = vmatmul.mubr.bf16.gmra.mxu0 %v1025
        %v2685 = vpop.f32.mrf.mxu0
        %v2686 = vadd.f32 %v1334, %v2685
        %v2687 = vpop.f32.mrf.mxu0
        %v2688 = vadd.f32 %v1338, %v2687
        %v2689 = vpop.f32.mrf.mxu0
        %v2690 = vadd.f32 %v1334, %v2689
        %v2691 = vpop.f32.mrf.mxu0
        %v2692 = vadd.f32 %v1338, %v2691
        %2693 = vmatprep.mubr.bf16.mxu0 %v1034
        %2694 = vmatmul.mubr.bf16.gmra.mxu0 %v1033
        %v2695 = vpop.f32.mrf.mxu0
        %v2696 = vadd.f32 %v1334, %v2695
        %v2697 = vpop.f32.mrf.mxu0
        %v2698 = vadd.f32 %v1338, %v2697
        %v2699 = vpop.f32.mrf.mxu0
        %v2700 = vadd.f32 %v1334, %v2699
        %v2701 = vpop.f32.mrf.mxu0
        %v2702 = vadd.f32 %v1338, %v2701
        %2703 = vmatprep.mubr.bf16.mxu0 %v1042
        %2704 = vmatmul.mubr.bf16.gmra.mxu0 %v1041
        %v2705 = vpop.f32.mrf.mxu0
        %v2706 = vadd.f32 %v1334, %v2705
        %v2707 = vpop.f32.mrf.mxu0
        %v2708 = vadd.f32 %v1338, %v2707
        %v2709 = vpop.f32.mrf.mxu0
        %v2710 = vadd.f32 %v1334, %v2709
        %v2711 = vpop.f32.mrf.mxu0
        %v2712 = vadd.f32 %v1338, %v2711
        %2713 = vmatprep.mubr.bf16.mxu0 %v1050
        %2714 = vmatmul.mubr.bf16.gmra.mxu0 %v1049
        %v2715 = vpop.f32.mrf.mxu0
        %v2716 = vadd.f32 %v1334, %v2715
        %v2717 = vpop.f32.mrf.mxu0
        %v2718 = vadd.f32 %v1338, %v2717
        %v2719 = vpop.f32.mrf.mxu0
        %v2720 = vadd.f32 %v1334, %v2719
        %v2721 = vpop.f32.mrf.mxu0
        %v2722 = vadd.f32 %v1338, %v2721
        %2723 = vmatprep.mubr.bf16.mxu0 %v1058
        %2724 = vmatmul.mubr.bf16.gmra.mxu0 %v1057
        %v2725 = vpop.f32.mrf.mxu0
        %v2726 = vadd.f32 %v1334, %v2725
        %v2727 = vpop.f32.mrf.mxu0
        %v2728 = vadd.f32 %v1338, %v2727
        %v2729 = vpop.f32.mrf.mxu0
        %v2730 = vadd.f32 %v1334, %v2729
        %v2731 = vpop.f32.mrf.mxu0
        %v2732 = vadd.f32 %v1338, %v2731
        %2733 = vmatprep.mubr.bf16.mxu0 %v1066
        %2734 = vmatmul.mubr.bf16.gmra.mxu0 %v1065
        %v2735 = vpop.f32.mrf.mxu0
        %v2736 = vadd.f32 %v1334, %v2735
        %v2737 = vpop.f32.mrf.mxu0
        %v2738 = vadd.f32 %v1338, %v2737
        %v2739 = vpop.f32.mrf.mxu0
        %v2740 = vadd.f32 %v1334, %v2739
        %v2741 = vpop.f32.mrf.mxu0
        %v2742 = vadd.f32 %v1338, %v2741
        %2743 = vdwg.mxu0
        %2744 = vmatprep.subr.bf16.mxu0 %v2212
        %2745 = vmatpush1.bf16.msra.mxu0 %v2211
        %2746 = vmatprep.subr.bf16.mxu0 %v2208
        %2747 = vmatpush1.bf16.msra.mxu0 %v2207
        %2748 = vmatprep.subr.bf16.mxu0 %v2204
        %2749 = vmatpush1.bf16.msra.mxu0 %v2203
        %2750 = vmatprep.subr.bf16.mxu0 %v2200
        %2751 = vmatpush1.bf16.msra.mxu0 %v2199
        %2752 = vmatprep.subr.bf16.mxu0 %v2196
        %2753 = vmatpush1.bf16.msra.mxu0 %v2195
        %2754 = vmatprep.subr.bf16.mxu0 %v2192
        %2755 = vmatpush1.bf16.msra.mxu0 %v2191
        %2756 = vmatprep.subr.bf16.mxu0 %v2188
        %2757 = vmatpush1.bf16.msra.mxu0 %v2187
        %2758 = vmatprep.subr.bf16.mxu0 %v2184
        %2759 = vmatpush1.bf16.msra.mxu0 %v2183
        %2760 = vmatprep.subr.bf16.mxu0 %v2244
        %2761 = vmatpush2.bf16.msra.mxu0 %v2243
        %2762 = vmatprep.subr.bf16.mxu0 %v2240
        %2763 = vmatpush2.bf16.msra.mxu0 %v2239
        %2764 = vmatprep.subr.bf16.mxu0 %v2236
        %2765 = vmatpush2.bf16.msra.mxu0 %v2235
        %2766 = vmatprep.subr.bf16.mxu0 %v2232
        %2767 = vmatpush2.bf16.msra.mxu0 %v2231
        %2768 = vmatprep.subr.bf16.mxu0 %v2228
        %2769 = vmatpush2.bf16.msra.mxu0 %v2227
        %2770 = vmatprep.subr.bf16.mxu0 %v2224
        %2771 = vmatpush2.bf16.msra.mxu0 %v2223
        %2772 = vmatprep.subr.bf16.mxu0 %v2220
        %2773 = vmatpush2.bf16.msra.mxu0 %v2219
        %2774 = vmatprep.subr.bf16.mxu0 %v2216
        %2775 = vmatpush2.bf16.msra.mxu0 %v2215
        %2776 = vmatprep.mubr.bf16.mxu0 %v1012
        %2777 = vmatmul.mubr.bf16.gmra.mxu0 %v1011
        %v2778 = vpop.f32.mrf.mxu0
        %v2779 = vadd.f32 %v2666, %v2778
        %v2780 = vpop.f32.mrf.mxu0
        %v2781 = vadd.f32 %v2668, %v2780
        %v2782 = vpop.f32.mrf.mxu0
        %v2783 = vadd.f32 %v2670, %v2782
        %v2784 = vpop.f32.mrf.mxu0
        %v2785 = vadd.f32 %v2672, %v2784
        %2786 = vmatprep.mubr.bf16.mxu0 %v1020
        %2787 = vmatmul.mubr.bf16.gmra.mxu0 %v1019
        %v2788 = vpop.f32.mrf.mxu0
        %v2789 = vadd.f32 %v2676, %v2788
        %v2790 = vpop.f32.mrf.mxu0
        %v2791 = vadd.f32 %v2678, %v2790
        %v2792 = vpop.f32.mrf.mxu0
        %v2793 = vadd.f32 %v2680, %v2792
        %v2794 = vpop.f32.mrf.mxu0
        %v2795 = vadd.f32 %v2682, %v2794
        %2796 = vmatprep.mubr.bf16.mxu0 %v1028
        %2797 = vmatmul.mubr.bf16.gmra.mxu0 %v1027
        %v2798 = vpop.f32.mrf.mxu0
        %v2799 = vadd.f32 %v2686, %v2798
        %v2800 = vpop.f32.mrf.mxu0
        %v2801 = vadd.f32 %v2688, %v2800
        %v2802 = vpop.f32.mrf.mxu0
        %v2803 = vadd.f32 %v2690, %v2802
        %v2804 = vpop.f32.mrf.mxu0
        %v2805 = vadd.f32 %v2692, %v2804
        %2806 = vmatprep.mubr.bf16.mxu0 %v1036
        %2807 = vmatmul.mubr.bf16.gmra.mxu0 %v1035
        %v2808 = vpop.f32.mrf.mxu0
        %v2809 = vadd.f32 %v2696, %v2808
        %v2810 = vpop.f32.mrf.mxu0
        %v2811 = vadd.f32 %v2698, %v2810
        %v2812 = vpop.f32.mrf.mxu0
        %v2813 = vadd.f32 %v2700, %v2812
        %v2814 = vpop.f32.mrf.mxu0
        %v2815 = vadd.f32 %v2702, %v2814
        %2816 = vmatprep.mubr.bf16.mxu0 %v1044
        %2817 = vmatmul.mubr.bf16.gmra.mxu0 %v1043
        %v2818 = vpop.f32.mrf.mxu0
        %v2819 = vadd.f32 %v2706, %v2818
        %v2820 = vpop.f32.mrf.mxu0
        %v2821 = vadd.f32 %v2708, %v2820
        %v2822 = vpop.f32.mrf.mxu0
        %v2823 = vadd.f32 %v2710, %v2822
        %v2824 = vpop.f32.mrf.mxu0
        %v2825 = vadd.f32 %v2712, %v2824
        %2826 = vmatprep.mubr.bf16.mxu0 %v1052
        %2827 = vmatmul.mubr.bf16.gmra.mxu0 %v1051
        %v2828 = vpop.f32.mrf.mxu0
        %v2829 = vadd.f32 %v2716, %v2828
        %v2830 = vpop.f32.mrf.mxu0
        %v2831 = vadd.f32 %v2718, %v2830
        %v2832 = vpop.f32.mrf.mxu0
        %v2833 = vadd.f32 %v2720, %v2832
        %v2834 = vpop.f32.mrf.mxu0
        %v2835 = vadd.f32 %v2722, %v2834
        %2836 = vmatprep.mubr.bf16.mxu0 %v1060
        %2837 = vmatmul.mubr.bf16.gmra.mxu0 %v1059
        %v2838 = vpop.f32.mrf.mxu0
        %v2839 = vadd.f32 %v2726, %v2838
        %v2840 = vpop.f32.mrf.mxu0
        %v2841 = vadd.f32 %v2728, %v2840
        %v2842 = vpop.f32.mrf.mxu0
        %v2843 = vadd.f32 %v2730, %v2842
        %v2844 = vpop.f32.mrf.mxu0
        %v2845 = vadd.f32 %v2732, %v2844
        %2846 = vmatprep.mubr.bf16.mxu0 %v1068
        %2847 = vmatmul.mubr.bf16.gmra.mxu0 %v1067
        %v2848 = vpop.f32.mrf.mxu0
        %v2849 = vadd.f32 %v2736, %v2848
        %v2850 = vpop.f32.mrf.mxu0
        %v2851 = vadd.f32 %v2738, %v2850
        %v2852 = vpop.f32.mrf.mxu0
        %v2853 = vadd.f32 %v2740, %v2852
        %v2854 = vpop.f32.mrf.mxu0
        %v2855 = vadd.f32 %v2742, %v2854
        %2856 = vdwg.mxu0
        %2857 = vmatprep.subr.bf16.mxu0 %v2276
        %2858 = vmatpush1.bf16.msra.mxu0 %v2275
        %2859 = vmatprep.subr.bf16.mxu0 %v2272
        %2860 = vmatpush1.bf16.msra.mxu0 %v2271
        %2861 = vmatprep.subr.bf16.mxu0 %v2268
        %2862 = vmatpush1.bf16.msra.mxu0 %v2267
        %2863 = vmatprep.subr.bf16.mxu0 %v2264
        %2864 = vmatpush1.bf16.msra.mxu0 %v2263
        %2865 = vmatprep.subr.bf16.mxu0 %v2260
        %2866 = vmatpush1.bf16.msra.mxu0 %v2259
        %2867 = vmatprep.subr.bf16.mxu0 %v2256
        %2868 = vmatpush1.bf16.msra.mxu0 %v2255
        %2869 = vmatprep.subr.bf16.mxu0 %v2252
        %2870 = vmatpush1.bf16.msra.mxu0 %v2251
        %2871 = vmatprep.subr.bf16.mxu0 %v2248
        %2872 = vmatpush1.bf16.msra.mxu0 %v2247
        %2873 = vmatprep.subr.bf16.mxu0 %v2308
        %2874 = vmatpush2.bf16.msra.mxu0 %v2307
        %2875 = vmatprep.subr.bf16.mxu0 %v2304
        %2876 = vmatpush2.bf16.msra.mxu0 %v2303
        %2877 = vmatprep.subr.bf16.mxu0 %v2300
        %2878 = vmatpush2.bf16.msra.mxu0 %v2299
        %2879 = vmatprep.subr.bf16.mxu0 %v2296
        %2880 = vmatpush2.bf16.msra.mxu0 %v2295
        %2881 = vmatprep.subr.bf16.mxu0 %v2292
        %2882 = vmatpush2.bf16.msra.mxu0 %v2291
        %2883 = vmatprep.subr.bf16.mxu0 %v2288
        %2884 = vmatpush2.bf16.msra.mxu0 %v2287
        %2885 = vmatprep.subr.bf16.mxu0 %v2284
        %2886 = vmatpush2.bf16.msra.mxu0 %v2283
        %2887 = vmatprep.subr.bf16.mxu0 %v2280
        %2888 = vmatpush2.bf16.msra.mxu0 %v2279
        %2889 = vmatprep.mubr.bf16.mxu0 %v1014
        %2890 = vmatmul.mubr.bf16.gmra.mxu0 %v1013
        %v2891 = vpop.f32.mrf.mxu0
        %v2892 = vadd.f32 %v2779, %v2891
        %v2893 = vpop.f32.mrf.mxu0
        %v2894 = vadd.f32 %v2781, %v2893
        %v2895 = vpop.f32.mrf.mxu0
        %v2896 = vadd.f32 %v2783, %v2895
        %v2897 = vpop.f32.mrf.mxu0
        %v2898 = vadd.f32 %v2785, %v2897
        %2899 = vmatprep.mubr.bf16.mxu0 %v1022
        %2900 = vmatmul.mubr.bf16.gmra.mxu0 %v1021
        %v2901 = vpop.f32.mrf.mxu0
        %v2902 = vadd.f32 %v2789, %v2901
        %v2903 = vpop.f32.mrf.mxu0
        %v2904 = vadd.f32 %v2791, %v2903
        %v2905 = vpop.f32.mrf.mxu0
        %v2906 = vadd.f32 %v2793, %v2905
        %v2907 = vpop.f32.mrf.mxu0
        %v2908 = vadd.f32 %v2795, %v2907
        %2909 = vmatprep.mubr.bf16.mxu0 %v1030
        %2910 = vmatmul.mubr.bf16.gmra.mxu0 %v1029
        %v2911 = vpop.f32.mrf.mxu0
        %v2912 = vadd.f32 %v2799, %v2911
        %v2913 = vpop.f32.mrf.mxu0
        %v2914 = vadd.f32 %v2801, %v2913
        %v2915 = vpop.f32.mrf.mxu0
        %v2916 = vadd.f32 %v2803, %v2915
        %v2917 = vpop.f32.mrf.mxu0
        %v2918 = vadd.f32 %v2805, %v2917
        %2919 = vmatprep.mubr.bf16.mxu0 %v1038
        %2920 = vmatmul.mubr.bf16.gmra.mxu0 %v1037
        %v2921 = vpop.f32.mrf.mxu0
        %v2922 = vadd.f32 %v2809, %v2921
        %v2923 = vpop.f32.mrf.mxu0
        %v2924 = vadd.f32 %v2811, %v2923
        %v2925 = vpop.f32.mrf.mxu0
        %v2926 = vadd.f32 %v2813, %v2925
        %v2927 = vpop.f32.mrf.mxu0
        %v2928 = vadd.f32 %v2815, %v2927
        %2929 = vmatprep.mubr.bf16.mxu0 %v1046
        %2930 = vmatmul.mubr.bf16.gmra.mxu0 %v1045
        %v2931 = vpop.f32.mrf.mxu0
        %v2932 = vadd.f32 %v2819, %v2931
        %v2933 = vpop.f32.mrf.mxu0
        %v2934 = vadd.f32 %v2821, %v2933
        %v2935 = vpop.f32.mrf.mxu0
        %v2936 = vadd.f32 %v2823, %v2935
        %v2937 = vpop.f32.mrf.mxu0
        %v2938 = vadd.f32 %v2825, %v2937
        %2939 = vmatprep.mubr.bf16.mxu0 %v1054
        %2940 = vmatmul.mubr.bf16.gmra.mxu0 %v1053
        %v2941 = vpop.f32.mrf.mxu0
        %v2942 = vadd.f32 %v2829, %v2941
        %v2943 = vpop.f32.mrf.mxu0
        %v2944 = vadd.f32 %v2831, %v2943
        %v2945 = vpop.f32.mrf.mxu0
        %v2946 = vadd.f32 %v2833, %v2945
        %v2947 = vpop.f32.mrf.mxu0
        %v2948 = vadd.f32 %v2835, %v2947
        %2949 = vmatprep.mubr.bf16.mxu0 %v1062
        %2950 = vmatmul.mubr.bf16.gmra.mxu0 %v1061
        %v2951 = vpop.f32.mrf.mxu0
        %v2952 = vadd.f32 %v2839, %v2951
        %v2953 = vpop.f32.mrf.mxu0
        %v2954 = vadd.f32 %v2841, %v2953
        %v2955 = vpop.f32.mrf.mxu0
        %v2956 = vadd.f32 %v2843, %v2955
        %v2957 = vpop.f32.mrf.mxu0
        %v2958 = vadd.f32 %v2845, %v2957
        %2959 = vmatprep.mubr.bf16.mxu0 %v1070
        %2960 = vmatmul.mubr.bf16.gmra.mxu0 %v1069
        %v2961 = vpop.f32.mrf.mxu0
        %v2962 = vadd.f32 %v2849, %v2961
        %v2963 = vpop.f32.mrf.mxu0
        %v2964 = vadd.f32 %v2851, %v2963
        %v2965 = vpop.f32.mrf.mxu0
        %v2966 = vadd.f32 %v2853, %v2965
        %v2967 = vpop.f32.mrf.mxu0
        %v2968 = vadd.f32 %v2855, %v2967
        %2969 = vdwg.mxu0
        %2970 = vmatprep.subr.bf16.mxu0 %v2340
        %2971 = vmatpush1.bf16.msra.mxu0 %v2339
        %2972 = vmatprep.subr.bf16.mxu0 %v2336
        %2973 = vmatpush1.bf16.msra.mxu0 %v2335
        %2974 = vmatprep.subr.bf16.mxu0 %v2332
        %2975 = vmatpush1.bf16.msra.mxu0 %v2331
        %2976 = vmatprep.subr.bf16.mxu0 %v2328
        %2977 = vmatpush1.bf16.msra.mxu0 %v2327
        %2978 = vmatprep.subr.bf16.mxu0 %v2324
        %2979 = vmatpush1.bf16.msra.mxu0 %v2323
        %2980 = vmatprep.subr.bf16.mxu0 %v2320
        %2981 = vmatpush1.bf16.msra.mxu0 %v2319
        %2982 = vmatprep.subr.bf16.mxu0 %v2316
        %2983 = vmatpush1.bf16.msra.mxu0 %v2315
        %2984 = vmatprep.subr.bf16.mxu0 %v2312
        %2985 = vmatpush1.bf16.msra.mxu0 %v2311
        %2986 = vmatprep.subr.bf16.mxu0 %v2372
        %2987 = vmatpush2.bf16.msra.mxu0 %v2371
        %2988 = vmatprep.subr.bf16.mxu0 %v2368
        %2989 = vmatpush2.bf16.msra.mxu0 %v2367
        %2990 = vmatprep.subr.bf16.mxu0 %v2364
        %2991 = vmatpush2.bf16.msra.mxu0 %v2363
        %2992 = vmatprep.subr.bf16.mxu0 %v2360
        %2993 = vmatpush2.bf16.msra.mxu0 %v2359
        %2994 = vmatprep.subr.bf16.mxu0 %v2356
        %2995 = vmatpush2.bf16.msra.mxu0 %v2355
        %2996 = vmatprep.subr.bf16.mxu0 %v2352
        %2997 = vmatpush2.bf16.msra.mxu0 %v2351
        %2998 = vmatprep.subr.bf16.mxu0 %v2348
        %2999 = vmatpush2.bf16.msra.mxu0 %v2347
        %3000 = vmatprep.subr.bf16.mxu0 %v2344
        %3001 = vmatpush2.bf16.msra.mxu0 %v2343
        %3002 = vmatprep.mubr.bf16.mxu0 %v1016
        %3003 = vmatmul.mubr.bf16.gmra.mxu0 %v1015
        %v3004 = vpop.f32.mrf.mxu0
        %v3005 = vadd.f32 %v2892, %v3004
        %v3006 = vpop.f32.mrf.mxu0
        %v3007 = vadd.f32 %v2894, %v3006
        %v3008 = vpop.f32.mrf.mxu0
        %v3009 = vadd.f32 %v2896, %v3008
        %v3010 = vpop.f32.mrf.mxu0
        %v3011 = vadd.f32 %v2898, %v3010
        %3012 = vmatprep.mubr.bf16.mxu0 %v1024
        %3013 = vmatmul.mubr.bf16.gmra.mxu0 %v1023
        %v3014 = vpop.f32.mrf.mxu0
        %v3015 = vadd.f32 %v2902, %v3014
        %v3016 = vpop.f32.mrf.mxu0
        %v3017 = vadd.f32 %v2904, %v3016
        %v3018 = vpop.f32.mrf.mxu0
        %v3019 = vadd.f32 %v2906, %v3018
        %v3020 = vpop.f32.mrf.mxu0
        %v3021 = vadd.f32 %v2908, %v3020
        %3022 = vmatprep.mubr.bf16.mxu0 %v1032
        %3023 = vmatmul.mubr.bf16.gmra.mxu0 %v1031
        %v3024 = vpop.f32.mrf.mxu0
        %v3025 = vadd.f32 %v2912, %v3024
        %v3026 = vpop.f32.mrf.mxu0
        %v3027 = vadd.f32 %v2914, %v3026
        %v3028 = vpop.f32.mrf.mxu0
        %v3029 = vadd.f32 %v2916, %v3028
        %v3030 = vpop.f32.mrf.mxu0
        %v3031 = vadd.f32 %v2918, %v3030
        %3032 = vmatprep.mubr.bf16.mxu0 %v1040
        %3033 = vmatmul.mubr.bf16.gmra.mxu0 %v1039
        %v3034 = vpop.f32.mrf.mxu0
        %v3035 = vadd.f32 %v2922, %v3034
        %v3036 = vpop.f32.mrf.mxu0
        %v3037 = vadd.f32 %v2924, %v3036
        %v3038 = vpop.f32.mrf.mxu0
        %v3039 = vadd.f32 %v2926, %v3038
        %v3040 = vpop.f32.mrf.mxu0
        %v3041 = vadd.f32 %v2928, %v3040
        %3042 = vmatprep.mubr.bf16.mxu0 %v1048
        %3043 = vmatmul.mubr.bf16.gmra.mxu0 %v1047
        %v3044 = vpop.f32.mrf.mxu0
        %v3045 = vadd.f32 %v2932, %v3044
        %v3046 = vpop.f32.mrf.mxu0
        %v3047 = vadd.f32 %v2934, %v3046
        %v3048 = vpop.f32.mrf.mxu0
        %v3049 = vadd.f32 %v2936, %v3048
        %v3050 = vpop.f32.mrf.mxu0
        %v3051 = vadd.f32 %v2938, %v3050
        %3052 = vmatprep.mubr.bf16.mxu0 %v1056
        %3053 = vmatmul.mubr.bf16.gmra.mxu0 %v1055
        %v3054 = vpop.f32.mrf.mxu0
        %v3055 = vadd.f32 %v2942, %v3054
        %v3056 = vpop.f32.mrf.mxu0
        %v3057 = vadd.f32 %v2944, %v3056
        %v3058 = vpop.f32.mrf.mxu0
        %v3059 = vadd.f32 %v2946, %v3058
        %v3060 = vpop.f32.mrf.mxu0
        %v3061 = vadd.f32 %v2948, %v3060
        %3062 = vmatprep.mubr.bf16.mxu0 %v1064
        %3063 = vmatmul.mubr.bf16.gmra.mxu0 %v1063
        %v3064 = vpop.f32.mrf.mxu0
        %v3065 = vadd.f32 %v2952, %v3064
        %v3066 = vpop.f32.mrf.mxu0
        %v3067 = vadd.f32 %v2954, %v3066
        %v3068 = vpop.f32.mrf.mxu0
        %v3069 = vadd.f32 %v2956, %v3068
        %v3070 = vpop.f32.mrf.mxu0
        %v3071 = vadd.f32 %v2958, %v3070
        %3072 = vmatprep.mubr.bf16.mxu0 %v1072
        %3073 = vmatmul.mubr.bf16.gmra.mxu0 %v1071
        %v3074 = vpop.f32.mrf.mxu0
        %v3075 = vadd.f32 %v2962, %v3074
        %v3076 = vpop.f32.mrf.mxu0
        %v3077 = vadd.f32 %v2964, %v3076
        %v3078 = vpop.f32.mrf.mxu0
        %v3079 = vadd.f32 %v2966, %v3078
        %v3080 = vpop.f32.mrf.mxu0
        %v3081 = vadd.f32 %v2968, %v3080
        %3082 = vdwg.mxu0
        %3083 = vmatprep.subr.bf16.mxu0 %v2150
        %3084 = vmatpush1.bf16.msra.mxu0 %v2149
        %3085 = vmatprep.subr.bf16.mxu0 %v2146
        %3086 = vmatpush1.bf16.msra.mxu0 %v2145
        %3087 = vmatprep.subr.bf16.mxu0 %v2142
        %3088 = vmatpush1.bf16.msra.mxu0 %v2141
        %3089 = vmatprep.subr.bf16.mxu0 %v2138
        %3090 = vmatpush1.bf16.msra.mxu0 %v2137
        %3091 = vmatprep.subr.bf16.mxu0 %v2134
        %3092 = vmatpush1.bf16.msra.mxu0 %v2133
        %3093 = vmatprep.subr.bf16.mxu0 %v2130
        %3094 = vmatpush1.bf16.msra.mxu0 %v2129
        %3095 = vmatprep.subr.bf16.mxu0 %v2126
        %3096 = vmatpush1.bf16.msra.mxu0 %v2125
        %3097 = vmatprep.subr.bf16.mxu0 %v2122
        %3098 = vmatpush1.bf16.msra.mxu0 %v2121
        %3099 = vmatprep.subr.bf16.mxu0 %v2182
        %3100 = vmatpush2.bf16.msra.mxu0 %v2181
        %3101 = vmatprep.subr.bf16.mxu0 %v2178
        %3102 = vmatpush2.bf16.msra.mxu0 %v2177
        %3103 = vmatprep.subr.bf16.mxu0 %v2174
        %3104 = vmatpush2.bf16.msra.mxu0 %v2173
        %3105 = vmatprep.subr.bf16.mxu0 %v2170
        %3106 = vmatpush2.bf16.msra.mxu0 %v2169
        %3107 = vmatprep.subr.bf16.mxu0 %v2166
        %3108 = vmatpush2.bf16.msra.mxu0 %v2165
        %3109 = vmatprep.subr.bf16.mxu0 %v2162
        %3110 = vmatpush2.bf16.msra.mxu0 %v2161
        %3111 = vmatprep.subr.bf16.mxu0 %v2158
        %3112 = vmatpush2.bf16.msra.mxu0 %v2157
        %3113 = vmatprep.subr.bf16.mxu0 %v2154
        %3114 = vmatpush2.bf16.msra.mxu0 %v2153
        %3115 = vmatprep.mubr.bf16.mxu0 %v1010
        %3116 = vmatmul.mubr.bf16.gmra.mxu0 %v1009
        %v3117 = vpop.f32.mrf.mxu0
        %v3118 = vadd.f32 %v1342, %v3117
        %v3119 = vpop.f32.mrf.mxu0
        %v3120 = vadd.f32 %v1346, %v3119
        %v3121 = vpop.f32.mrf.mxu0
        %v3122 = vadd.f32 %v1342, %v3121
        %v3123 = vpop.f32.mrf.mxu0
        %v3124 = vadd.f32 %v1346, %v3123
        %3125 = vmatprep.mubr.bf16.mxu0 %v1018
        %3126 = vmatmul.mubr.bf16.gmra.mxu0 %v1017
        %v3127 = vpop.f32.mrf.mxu0
        %v3128 = vadd.f32 %v1342, %v3127
        %v3129 = vpop.f32.mrf.mxu0
        %v3130 = vadd.f32 %v1346, %v3129
        %v3131 = vpop.f32.mrf.mxu0
        %v3132 = vadd.f32 %v1342, %v3131
        %v3133 = vpop.f32.mrf.mxu0
        %v3134 = vadd.f32 %v1346, %v3133
        %3135 = vmatprep.mubr.bf16.mxu0 %v1026
        %3136 = vmatmul.mubr.bf16.gmra.mxu0 %v1025
        %v3137 = vpop.f32.mrf.mxu0
        %v3138 = vadd.f32 %v1342, %v3137
        %v3139 = vpop.f32.mrf.mxu0
        %v3140 = vadd.f32 %v1346, %v3139
        %v3141 = vpop.f32.mrf.mxu0
        %v3142 = vadd.f32 %v1342, %v3141
        %v3143 = vpop.f32.mrf.mxu0
        %v3144 = vadd.f32 %v1346, %v3143
        %3145 = vmatprep.mubr.bf16.mxu0 %v1034
        %3146 = vmatmul.mubr.bf16.gmra.mxu0 %v1033
        %v3147 = vpop.f32.mrf.mxu0
        %v3148 = vadd.f32 %v1342, %v3147
        %v3149 = vpop.f32.mrf.mxu0
        %v3150 = vadd.f32 %v1346, %v3149
        %v3151 = vpop.f32.mrf.mxu0
        %v3152 = vadd.f32 %v1342, %v3151
        %v3153 = vpop.f32.mrf.mxu0
        %v3154 = vadd.f32 %v1346, %v3153
        %3155 = vmatprep.mubr.bf16.mxu0 %v1042
        %3156 = vmatmul.mubr.bf16.gmra.mxu0 %v1041
        %v3157 = vpop.f32.mrf.mxu0
        %v3158 = vadd.f32 %v1342, %v3157
        %v3159 = vpop.f32.mrf.mxu0
        %v3160 = vadd.f32 %v1346, %v3159
        %v3161 = vpop.f32.mrf.mxu0
        %v3162 = vadd.f32 %v1342, %v3161
        %v3163 = vpop.f32.mrf.mxu0
        %v3164 = vadd.f32 %v1346, %v3163
        %3165 = vmatprep.mubr.bf16.mxu0 %v1050
        %3166 = vmatmul.mubr.bf16.gmra.mxu0 %v1049
        %v3167 = vpop.f32.mrf.mxu0
        %v3168 = vadd.f32 %v1342, %v3167
        %v3169 = vpop.f32.mrf.mxu0
        %v3170 = vadd.f32 %v1346, %v3169
        %v3171 = vpop.f32.mrf.mxu0
        %v3172 = vadd.f32 %v1342, %v3171
        %v3173 = vpop.f32.mrf.mxu0
        %v3174 = vadd.f32 %v1346, %v3173
        %3175 = vmatprep.mubr.bf16.mxu0 %v1058
        %3176 = vmatmul.mubr.bf16.gmra.mxu0 %v1057
        %v3177 = vpop.f32.mrf.mxu0
        %v3178 = vadd.f32 %v1342, %v3177
        %v3179 = vpop.f32.mrf.mxu0
        %v3180 = vadd.f32 %v1346, %v3179
        %v3181 = vpop.f32.mrf.mxu0
        %v3182 = vadd.f32 %v1342, %v3181
        %v3183 = vpop.f32.mrf.mxu0
        %v3184 = vadd.f32 %v1346, %v3183
        %3185 = vmatprep.mubr.bf16.mxu0 %v1066
        %3186 = vmatmul.mubr.bf16.gmra.mxu0 %v1065
        %v3187 = vpop.f32.mrf.mxu0
        %v3188 = vadd.f32 %v1342, %v3187
        %v3189 = vpop.f32.mrf.mxu0
        %v3190 = vadd.f32 %v1346, %v3189
        %v3191 = vpop.f32.mrf.mxu0
        %v3192 = vadd.f32 %v1342, %v3191
        %v3193 = vpop.f32.mrf.mxu0
        %v3194 = vadd.f32 %v1346, %v3193
        %3195 = vdwg.mxu0
        %3196 = vmatprep.subr.bf16.mxu0 %v2214
        %3197 = vmatpush1.bf16.msra.mxu0 %v2213
        %3198 = vmatprep.subr.bf16.mxu0 %v2210
        %3199 = vmatpush1.bf16.msra.mxu0 %v2209
        %3200 = vmatprep.subr.bf16.mxu0 %v2206
        %3201 = vmatpush1.bf16.msra.mxu0 %v2205
        %3202 = vmatprep.subr.bf16.mxu0 %v2202
        %3203 = vmatpush1.bf16.msra.mxu0 %v2201
        %3204 = vmatprep.subr.bf16.mxu0 %v2198
        %3205 = vmatpush1.bf16.msra.mxu0 %v2197
        %3206 = vmatprep.subr.bf16.mxu0 %v2194
        %3207 = vmatpush1.bf16.msra.mxu0 %v2193
        %3208 = vmatprep.subr.bf16.mxu0 %v2190
        %3209 = vmatpush1.bf16.msra.mxu0 %v2189
        %3210 = vmatprep.subr.bf16.mxu0 %v2186
        %3211 = vmatpush1.bf16.msra.mxu0 %v2185
        %3212 = vmatprep.subr.bf16.mxu0 %v2246
        %3213 = vmatpush2.bf16.msra.mxu0 %v2245
        %3214 = vmatprep.subr.bf16.mxu0 %v2242
        %3215 = vmatpush2.bf16.msra.mxu0 %v2241
        %3216 = vmatprep.subr.bf16.mxu0 %v2238
        %3217 = vmatpush2.bf16.msra.mxu0 %v2237
        %3218 = vmatprep.subr.bf16.mxu0 %v2234
        %3219 = vmatpush2.bf16.msra.mxu0 %v2233
        %3220 = vmatprep.subr.bf16.mxu0 %v2230
        %3221 = vmatpush2.bf16.msra.mxu0 %v2229
        %3222 = vmatprep.subr.bf16.mxu0 %v2226
        %3223 = vmatpush2.bf16.msra.mxu0 %v2225
        %3224 = vmatprep.subr.bf16.mxu0 %v2222
        %3225 = vmatpush2.bf16.msra.mxu0 %v2221
        %3226 = vmatprep.subr.bf16.mxu0 %v2218
        %3227 = vmatpush2.bf16.msra.mxu0 %v2217
        %3228 = vmatprep.mubr.bf16.mxu0 %v1012
        %3229 = vmatmul.mubr.bf16.gmra.mxu0 %v1011
        %v3230 = vpop.f32.mrf.mxu0
        %v3231 = vadd.f32 %v3118, %v3230
        %v3232 = vpop.f32.mrf.mxu0
        %v3233 = vadd.f32 %v3120, %v3232
        %v3234 = vpop.f32.mrf.mxu0
        %v3235 = vadd.f32 %v3122, %v3234
        %v3236 = vpop.f32.mrf.mxu0
        %v3237 = vadd.f32 %v3124, %v3236
        %3238 = vmatprep.mubr.bf16.mxu0 %v1020
        %3239 = vmatmul.mubr.bf16.gmra.mxu0 %v1019
        %v3240 = vpop.f32.mrf.mxu0
        %v3241 = vadd.f32 %v3128, %v3240
        %v3242 = vpop.f32.mrf.mxu0
        %v3243 = vadd.f32 %v3130, %v3242
        %v3244 = vpop.f32.mrf.mxu0
        %v3245 = vadd.f32 %v3132, %v3244
        %v3246 = vpop.f32.mrf.mxu0
        %v3247 = vadd.f32 %v3134, %v3246
        %3248 = vmatprep.mubr.bf16.mxu0 %v1028
        %3249 = vmatmul.mubr.bf16.gmra.mxu0 %v1027
        %v3250 = vpop.f32.mrf.mxu0
        %v3251 = vadd.f32 %v3138, %v3250
        %v3252 = vpop.f32.mrf.mxu0
        %v3253 = vadd.f32 %v3140, %v3252
        %v3254 = vpop.f32.mrf.mxu0
        %v3255 = vadd.f32 %v3142, %v3254
        %v3256 = vpop.f32.mrf.mxu0
        %v3257 = vadd.f32 %v3144, %v3256
        %3258 = vmatprep.mubr.bf16.mxu0 %v1036
        %3259 = vmatmul.mubr.bf16.gmra.mxu0 %v1035
        %v3260 = vpop.f32.mrf.mxu0
        %v3261 = vadd.f32 %v3148, %v3260
        %v3262 = vpop.f32.mrf.mxu0
        %v3263 = vadd.f32 %v3150, %v3262
        %v3264 = vpop.f32.mrf.mxu0
        %v3265 = vadd.f32 %v3152, %v3264
        %v3266 = vpop.f32.mrf.mxu0
        %v3267 = vadd.f32 %v3154, %v3266
        %3268 = vmatprep.mubr.bf16.mxu0 %v1044
        %3269 = vmatmul.mubr.bf16.gmra.mxu0 %v1043
        %v3270 = vpop.f32.mrf.mxu0
        %v3271 = vadd.f32 %v3158, %v3270
        %v3272 = vpop.f32.mrf.mxu0
        %v3273 = vadd.f32 %v3160, %v3272
        %v3274 = vpop.f32.mrf.mxu0
        %v3275 = vadd.f32 %v3162, %v3274
        %v3276 = vpop.f32.mrf.mxu0
        %v3277 = vadd.f32 %v3164, %v3276
        %3278 = vmatprep.mubr.bf16.mxu0 %v1052
        %3279 = vmatmul.mubr.bf16.gmra.mxu0 %v1051
        %v3280 = vpop.f32.mrf.mxu0
        %v3281 = vadd.f32 %v3168, %v3280
        %v3282 = vpop.f32.mrf.mxu0
        %v3283 = vadd.f32 %v3170, %v3282
        %v3284 = vpop.f32.mrf.mxu0
        %v3285 = vadd.f32 %v3172, %v3284
        %v3286 = vpop.f32.mrf.mxu0
        %v3287 = vadd.f32 %v3174, %v3286
        %3288 = vmatprep.mubr.bf16.mxu0 %v1060
        %3289 = vmatmul.mubr.bf16.gmra.mxu0 %v1059
        %v3290 = vpop.f32.mrf.mxu0
        %v3291 = vadd.f32 %v3178, %v3290
        %v3292 = vpop.f32.mrf.mxu0
        %v3293 = vadd.f32 %v3180, %v3292
        %v3294 = vpop.f32.mrf.mxu0
        %v3295 = vadd.f32 %v3182, %v3294
        %v3296 = vpop.f32.mrf.mxu0
        %v3297 = vadd.f32 %v3184, %v3296
        %3298 = vmatprep.mubr.bf16.mxu0 %v1068
        %3299 = vmatmul.mubr.bf16.gmra.mxu0 %v1067
        %v3300 = vpop.f32.mrf.mxu0
        %v3301 = vadd.f32 %v3188, %v3300
        %v3302 = vpop.f32.mrf.mxu0
        %v3303 = vadd.f32 %v3190, %v3302
        %v3304 = vpop.f32.mrf.mxu0
        %v3305 = vadd.f32 %v3192, %v3304
        %v3306 = vpop.f32.mrf.mxu0
        %v3307 = vadd.f32 %v3194, %v3306
        %3308 = vdwg.mxu0
        %3309 = vmatprep.subr.bf16.mxu0 %v2278
        %3310 = vmatpush1.bf16.msra.mxu0 %v2277
        %3311 = vmatprep.subr.bf16.mxu0 %v2274
        %3312 = vmatpush1.bf16.msra.mxu0 %v2273
        %3313 = vmatprep.subr.bf16.mxu0 %v2270
        %3314 = vmatpush1.bf16.msra.mxu0 %v2269
        %3315 = vmatprep.subr.bf16.mxu0 %v2266
        %3316 = vmatpush1.bf16.msra.mxu0 %v2265
        %3317 = vmatprep.subr.bf16.mxu0 %v2262
        %3318 = vmatpush1.bf16.msra.mxu0 %v2261
        %3319 = vmatprep.subr.bf16.mxu0 %v2258
        %3320 = vmatpush1.bf16.msra.mxu0 %v2257
        %3321 = vmatprep.subr.bf16.mxu0 %v2254
        %3322 = vmatpush1.bf16.msra.mxu0 %v2253
        %3323 = vmatprep.subr.bf16.mxu0 %v2250
        %3324 = vmatpush1.bf16.msra.mxu0 %v2249
        %3325 = vmatprep.subr.bf16.mxu0 %v2310
        %3326 = vmatpush2.bf16.msra.mxu0 %v2309
        %3327 = vmatprep.subr.bf16.mxu0 %v2306
        %3328 = vmatpush2.bf16.msra.mxu0 %v2305
        %3329 = vmatprep.subr.bf16.mxu0 %v2302
        %3330 = vmatpush2.bf16.msra.mxu0 %v2301
        %3331 = vmatprep.subr.bf16.mxu0 %v2298
        %3332 = vmatpush2.bf16.msra.mxu0 %v2297
        %3333 = vmatprep.subr.bf16.mxu0 %v2294
        %3334 = vmatpush2.bf16.msra.mxu0 %v2293
        %3335 = vmatprep.subr.bf16.mxu0 %v2290
        %3336 = vmatpush2.bf16.msra.mxu0 %v2289
        %3337 = vmatprep.subr.bf16.mxu0 %v2286
        %3338 = vmatpush2.bf16.msra.mxu0 %v2285
        %3339 = vmatprep.subr.bf16.mxu0 %v2282
        %3340 = vmatpush2.bf16.msra.mxu0 %v2281
        %3341 = vmatprep.mubr.bf16.mxu0 %v1014
        %3342 = vmatmul.mubr.bf16.gmra.mxu0 %v1013
        %v3343 = vpop.f32.mrf.mxu0
        %v3344 = vadd.f32 %v3231, %v3343
        %v3345 = vpop.f32.mrf.mxu0
        %v3346 = vadd.f32 %v3233, %v3345
        %v3347 = vpop.f32.mrf.mxu0
        %v3348 = vadd.f32 %v3235, %v3347
        %v3349 = vpop.f32.mrf.mxu0
        %v3350 = vadd.f32 %v3237, %v3349
        %3351 = vmatprep.mubr.bf16.mxu0 %v1022
        %3352 = vmatmul.mubr.bf16.gmra.mxu0 %v1021
        %v3353 = vpop.f32.mrf.mxu0
        %v3354 = vadd.f32 %v3241, %v3353
        %v3355 = vpop.f32.mrf.mxu0
        %v3356 = vadd.f32 %v3243, %v3355
        %v3357 = vpop.f32.mrf.mxu0
        %v3358 = vadd.f32 %v3245, %v3357
        %v3359 = vpop.f32.mrf.mxu0
        %v3360 = vadd.f32 %v3247, %v3359
        %3361 = vmatprep.mubr.bf16.mxu0 %v1030
        %3362 = vmatmul.mubr.bf16.gmra.mxu0 %v1029
        %v3363 = vpop.f32.mrf.mxu0
        %v3364 = vadd.f32 %v3251, %v3363
        %v3365 = vpop.f32.mrf.mxu0
        %v3366 = vadd.f32 %v3253, %v3365
        %v3367 = vpop.f32.mrf.mxu0
        %v3368 = vadd.f32 %v3255, %v3367
        %v3369 = vpop.f32.mrf.mxu0
        %v3370 = vadd.f32 %v3257, %v3369
        %3371 = vmatprep.mubr.bf16.mxu0 %v1038
        %3372 = vmatmul.mubr.bf16.gmra.mxu0 %v1037
        %v3373 = vpop.f32.mrf.mxu0
        %v3374 = vadd.f32 %v3261, %v3373
        %v3375 = vpop.f32.mrf.mxu0
        %v3376 = vadd.f32 %v3263, %v3375
        %v3377 = vpop.f32.mrf.mxu0
        %v3378 = vadd.f32 %v3265, %v3377
        %v3379 = vpop.f32.mrf.mxu0
        %v3380 = vadd.f32 %v3267, %v3379
        %3381 = vmatprep.mubr.bf16.mxu0 %v1046
        %3382 = vmatmul.mubr.bf16.gmra.mxu0 %v1045
        %v3383 = vpop.f32.mrf.mxu0
        %v3384 = vadd.f32 %v3271, %v3383
        %v3385 = vpop.f32.mrf.mxu0
        %v3386 = vadd.f32 %v3273, %v3385
        %v3387 = vpop.f32.mrf.mxu0
        %v3388 = vadd.f32 %v3275, %v3387
        %v3389 = vpop.f32.mrf.mxu0
        %v3390 = vadd.f32 %v3277, %v3389
        %3391 = vmatprep.mubr.bf16.mxu0 %v1054
        %3392 = vmatmul.mubr.bf16.gmra.mxu0 %v1053
        %v3393 = vpop.f32.mrf.mxu0
        %v3394 = vadd.f32 %v3281, %v3393
        %v3395 = vpop.f32.mrf.mxu0
        %v3396 = vadd.f32 %v3283, %v3395
        %v3397 = vpop.f32.mrf.mxu0
        %v3398 = vadd.f32 %v3285, %v3397
        %v3399 = vpop.f32.mrf.mxu0
        %v3400 = vadd.f32 %v3287, %v3399
        %3401 = vmatprep.mubr.bf16.mxu0 %v1062
        %3402 = vmatmul.mubr.bf16.gmra.mxu0 %v1061
        %v3403 = vpop.f32.mrf.mxu0
        %v3404 = vadd.f32 %v3291, %v3403
        %v3405 = vpop.f32.mrf.mxu0
        %v3406 = vadd.f32 %v3293, %v3405
        %v3407 = vpop.f32.mrf.mxu0
        %v3408 = vadd.f32 %v3295, %v3407
        %v3409 = vpop.f32.mrf.mxu0
        %v3410 = vadd.f32 %v3297, %v3409
        %3411 = vmatprep.mubr.bf16.mxu0 %v1070
        %3412 = vmatmul.mubr.bf16.gmra.mxu0 %v1069
        %v3413 = vpop.f32.mrf.mxu0
        %v3414 = vadd.f32 %v3301, %v3413
        %v3415 = vpop.f32.mrf.mxu0
        %v3416 = vadd.f32 %v3303, %v3415
        %v3417 = vpop.f32.mrf.mxu0
        %v3418 = vadd.f32 %v3305, %v3417
        %v3419 = vpop.f32.mrf.mxu0
        %v3420 = vadd.f32 %v3307, %v3419
        %3421 = vdwg.mxu0
        %3422 = vmatprep.subr.bf16.mxu0 %v2342
        %3423 = vmatpush1.bf16.msra.mxu0 %v2341
        %3424 = vmatprep.subr.bf16.mxu0 %v2338
        %3425 = vmatpush1.bf16.msra.mxu0 %v2337
        %3426 = vmatprep.subr.bf16.mxu0 %v2334
        %3427 = vmatpush1.bf16.msra.mxu0 %v2333
        %3428 = vmatprep.subr.bf16.mxu0 %v2330
        %3429 = vmatpush1.bf16.msra.mxu0 %v2329
        %3430 = vmatprep.subr.bf16.mxu0 %v2326
        %3431 = vmatpush1.bf16.msra.mxu0 %v2325
        %3432 = vmatprep.subr.bf16.mxu0 %v2322
        %3433 = vmatpush1.bf16.msra.mxu0 %v2321
        %3434 = vmatprep.subr.bf16.mxu0 %v2318
        %3435 = vmatpush1.bf16.msra.mxu0 %v2317
        %3436 = vmatprep.subr.bf16.mxu0 %v2314
        %3437 = vmatpush1.bf16.msra.mxu0 %v2313
        %3438 = vmatprep.subr.bf16.mxu0 %v2374
        %3439 = vmatpush2.bf16.msra.mxu0 %v2373
        %3440 = vmatprep.subr.bf16.mxu0 %v2370
        %3441 = vmatpush2.bf16.msra.mxu0 %v2369
        %3442 = vmatprep.subr.bf16.mxu0 %v2366
        %3443 = vmatpush2.bf16.msra.mxu0 %v2365
        %3444 = vmatprep.subr.bf16.mxu0 %v2362
        %3445 = vmatpush2.bf16.msra.mxu0 %v2361
        %3446 = vmatprep.subr.bf16.mxu0 %v2358
        %3447 = vmatpush2.bf16.msra.mxu0 %v2357
        %3448 = vmatprep.subr.bf16.mxu0 %v2354
        %3449 = vmatpush2.bf16.msra.mxu0 %v2353
        %3450 = vmatprep.subr.bf16.mxu0 %v2350
        %3451 = vmatpush2.bf16.msra.mxu0 %v2349
        %3452 = vmatprep.subr.bf16.mxu0 %v2346
        %3453 = vmatpush2.bf16.msra.mxu0 %v2345
        %3454 = vmatprep.mubr.bf16.mxu0 %v1016
        %3455 = vmatmul.mubr.bf16.gmra.mxu0 %v1015
        %v3456 = vpop.f32.mrf.mxu0
        %v3457 = vadd.f32 %v3344, %v3456
        %v3458 = vpop.f32.mrf.mxu0
        %v3459 = vadd.f32 %v3346, %v3458
        %v3460 = vpop.f32.mrf.mxu0
        %v3461 = vadd.f32 %v3348, %v3460
        %v3462 = vpop.f32.mrf.mxu0
        %v3463 = vadd.f32 %v3350, %v3462
        %3464 = vmatprep.mubr.bf16.mxu0 %v1024
        %3465 = vmatmul.mubr.bf16.gmra.mxu0 %v1023
        %v3466 = vpop.f32.mrf.mxu0
        %v3467 = vadd.f32 %v3354, %v3466
        %v3468 = vpop.f32.mrf.mxu0
        %v3469 = vadd.f32 %v3356, %v3468
        %v3470 = vpop.f32.mrf.mxu0
        %v3471 = vadd.f32 %v3358, %v3470
        %v3472 = vpop.f32.mrf.mxu0
        %v3473 = vadd.f32 %v3360, %v3472
        %3474 = vmatprep.mubr.bf16.mxu0 %v1032
        %3475 = vmatmul.mubr.bf16.gmra.mxu0 %v1031
        %v3476 = vpop.f32.mrf.mxu0
        %v3477 = vadd.f32 %v3364, %v3476
        %v3478 = vpop.f32.mrf.mxu0
        %v3479 = vadd.f32 %v3366, %v3478
        %v3480 = vpop.f32.mrf.mxu0
        %v3481 = vadd.f32 %v3368, %v3480
        %v3482 = vpop.f32.mrf.mxu0
        %v3483 = vadd.f32 %v3370, %v3482
        %3484 = vmatprep.mubr.bf16.mxu0 %v1040
        %3485 = vmatmul.mubr.bf16.gmra.mxu0 %v1039
        %v3486 = vpop.f32.mrf.mxu0
        %v3487 = vadd.f32 %v3374, %v3486
        %v3488 = vpop.f32.mrf.mxu0
        %v3489 = vadd.f32 %v3376, %v3488
        %v3490 = vpop.f32.mrf.mxu0
        %v3491 = vadd.f32 %v3378, %v3490
        %v3492 = vpop.f32.mrf.mxu0
        %v3493 = vadd.f32 %v3380, %v3492
        %3494 = vmatprep.mubr.bf16.mxu0 %v1048
        %3495 = vmatmul.mubr.bf16.gmra.mxu0 %v1047
        %v3496 = vpop.f32.mrf.mxu0
        %v3497 = vadd.f32 %v3384, %v3496
        %v3498 = vpop.f32.mrf.mxu0
        %v3499 = vadd.f32 %v3386, %v3498
        %v3500 = vpop.f32.mrf.mxu0
        %v3501 = vadd.f32 %v3388, %v3500
        %v3502 = vpop.f32.mrf.mxu0
        %v3503 = vadd.f32 %v3390, %v3502
        %3504 = vmatprep.mubr.bf16.mxu0 %v1056
        %3505 = vmatmul.mubr.bf16.gmra.mxu0 %v1055
        %v3506 = vpop.f32.mrf.mxu0
        %v3507 = vadd.f32 %v3394, %v3506
        %v3508 = vpop.f32.mrf.mxu0
        %v3509 = vadd.f32 %v3396, %v3508
        %v3510 = vpop.f32.mrf.mxu0
        %v3511 = vadd.f32 %v3398, %v3510
        %v3512 = vpop.f32.mrf.mxu0
        %v3513 = vadd.f32 %v3400, %v3512
        %3514 = vmatprep.mubr.bf16.mxu0 %v1064
        %3515 = vmatmul.mubr.bf16.gmra.mxu0 %v1063
        %v3516 = vpop.f32.mrf.mxu0
        %v3517 = vadd.f32 %v3404, %v3516
        %v3518 = vpop.f32.mrf.mxu0
        %v3519 = vadd.f32 %v3406, %v3518
        %v3520 = vpop.f32.mrf.mxu0
        %v3521 = vadd.f32 %v3408, %v3520
        %v3522 = vpop.f32.mrf.mxu0
        %v3523 = vadd.f32 %v3410, %v3522
        %3524 = vmatprep.mubr.bf16.mxu0 %v1072
        %3525 = vmatmul.mubr.bf16.gmra.mxu0 %v1071
        %v3526 = vpop.f32.mrf.mxu0
        %v3527 = vadd.f32 %v3414, %v3526
        %v3528 = vpop.f32.mrf.mxu0
        %v3529 = vadd.f32 %v3416, %v3528
        %v3530 = vpop.f32.mrf.mxu0
        %v3531 = vadd.f32 %v3418, %v3530
        %v3532 = vpop.f32.mrf.mxu0
        %v3533 = vadd.f32 %v3420, %v3532
        %3534 = vdwg.mxu0
        %3535 = vst [vmem:[%s233] sm:$0xff] %v3005
        %3536 = vst [vmem:[%s233 + $0x8] sm:$0xff] %v3007
        %3537 = vst [vmem:[%s233 + $0x10] sm:$0xff] %v3457
        %3538 = vst [vmem:[%s233 + $0x18] sm:$0xff] %v3459
        %3539 = vst [vmem:[%s233 + $0x20] sm:$0xff] %v3009
        %3540 = vst [vmem:[%s233 + $0x28] sm:$0xff] %v3011
        %3541 = vst [vmem:[%s233 + $0x30] sm:$0xff] %v3461
        %3542 = vst [vmem:[%s233 + $0x38] sm:$0xff] %v3463
        %3543 = vst [vmem:[%s233 + $0x40] sm:$0xff] %v3015
        %3544 = vst [vmem:[%s233 + $0x48] sm:$0xff] %v3017
        %3545 = vst [vmem:[%s233 + $0x50] sm:$0xff] %v3467
        %3546 = vst [vmem:[%s233 + $0x58] sm:$0xff] %v3469
        %3547 = vst [vmem:[%s233 + $0x60] sm:$0xff] %v3019
        %3548 = vst [vmem:[%s233 + $0x68] sm:$0xff] %v3021
        %3549 = vst [vmem:[%s233 + $0x70] sm:$0xff] %v3471
        %3550 = vst [vmem:[%s233 + $0x78] sm:$0xff] %v3473
        %3551 = vst [vmem:[%s233 + $0x80] sm:$0xff] %v3025
        %3552 = vst [vmem:[%s233 + $0x88] sm:$0xff] %v3027
        %3553 = vst [vmem:[%s233 + $0x90] sm:$0xff] %v3477
        %3554 = vst [vmem:[%s233 + $0x98] sm:$0xff] %v3479
        %3555 = vst [vmem:[%s233 + $0xa0] sm:$0xff] %v3029
        %3556 = vst [vmem:[%s233 + $0xa8] sm:$0xff] %v3031
        %3557 = vst [vmem:[%s233 + $0xb0] sm:$0xff] %v3481
        %3558 = vst [vmem:[%s233 + $0xb8] sm:$0xff] %v3483
        %3559 = vst [vmem:[%s233 + $0xc0] sm:$0xff] %v3035
        %3560 = vst [vmem:[%s233 + $0xc8] sm:$0xff] %v3037
        %3561 = vst [vmem:[%s233 + $0xd0] sm:$0xff] %v3487
        %3562 = vst [vmem:[%s233 + $0xd8] sm:$0xff] %v3489
        %3563 = vst [vmem:[%s233 + $0xe0] sm:$0xff] %v3039
        %3564 = vst [vmem:[%s233 + $0xe8] sm:$0xff] %v3041
        %3565 = vst [vmem:[%s233 + $0xf0] sm:$0xff] %v3491
        %3566 = vst [vmem:[%s233 + $0xf8] sm:$0xff] %v3493
        %3567 = vst [vmem:[%s233 + $0x100] sm:$0xff] %v3045
        %3568 = vst [vmem:[%s233 + $0x108] sm:$0xff] %v3047
        %3569 = vst [vmem:[%s233 + $0x110] sm:$0xff] %v3497
        %3570 = vst [vmem:[%s233 + $0x118] sm:$0xff] %v3499
        %3571 = vst [vmem:[%s233 + $0x120] sm:$0xff] %v3049
        %3572 = vst [vmem:[%s233 + $0x128] sm:$0xff] %v3051
        %3573 = vst [vmem:[%s233 + $0x130] sm:$0xff] %v3501
        %3574 = vst [vmem:[%s233 + $0x138] sm:$0xff] %v3503
        %3575 = vst [vmem:[%s233 + $0x140] sm:$0xff] %v3055
        %3576 = vst [vmem:[%s233 + $0x148] sm:$0xff] %v3057
        %3577 = vst [vmem:[%s233 + $0x150] sm:$0xff] %v3507
        %3578 = vst [vmem:[%s233 + $0x158] sm:$0xff] %v3509
        %3579 = vst [vmem:[%s233 + $0x160] sm:$0xff] %v3059
        %3580 = vst [vmem:[%s233 + $0x168] sm:$0xff] %v3061
        %3581 = vst [vmem:[%s233 + $0x170] sm:$0xff] %v3511
        %3582 = vst [vmem:[%s233 + $0x178] sm:$0xff] %v3513
        %3583 = vst [vmem:[%s233 + $0x180] sm:$0xff] %v3065
        %3584 = vst [vmem:[%s233 + $0x188] sm:$0xff] %v3067
        %3585 = vst [vmem:[%s233 + $0x190] sm:$0xff] %v3517
        %3586 = vst [vmem:[%s233 + $0x198] sm:$0xff] %v3519
        %3587 = vst [vmem:[%s233 + $0x1a0] sm:$0xff] %v3069
        %3588 = vst [vmem:[%s233 + $0x1a8] sm:$0xff] %v3071
        %3589 = vst [vmem:[%s233 + $0x1b0] sm:$0xff] %v3521
        %3590 = vst [vmem:[%s233 + $0x1b8] sm:$0xff] %v3523
        %3591 = vst [vmem:[%s233 + $0x1c0] sm:$0xff] %v3075
        %3592 = vst [vmem:[%s233 + $0x1c8] sm:$0xff] %v3077
        %3593 = vst [vmem:[%s233 + $0x1d0] sm:$0xff] %v3527
        %3594 = vst [vmem:[%s233 + $0x1d8] sm:$0xff] %v3529
        %3595 = vst [vmem:[%s233 + $0x1e0] sm:$0xff] %v3079
        %3596 = vst [vmem:[%s233 + $0x1e8] sm:$0xff] %v3081
        %3597 = vst [vmem:[%s233 + $0x1f0] sm:$0xff] %v3531
        %3598 = vst [vmem:[%s233 + $0x1f8] sm:$0xff] %v3533
        %s3599 = sand.u32 %s138, 1
        %s3600 = scalar_lea.sflag [#allocation4], %s3599
        %s3601 = sand.u32 %s138, 1
        %s3602 = smul.addr %s3601, 512
        %s3603 = scalar_lea.vmem [#allocation5], %s3602
        // Predicated region
        $region45: #{tpu_custom_call.1} parent=39 // pred_check
          %p3604 = pneg %p148
        $region46: #{tpu_custom_call.1} parent=39 // pred_check_branch
          %3606 = sbr.rel (%p3604) target = $region48
        $region47: #{tpu_custom_call.1} parent=39 // pred_region
          %s3607 = smul.u32 16, %s20
          %s3609 = ssub.s32 8192, 8192
          %3610 = vsyncadd %s3600, %s3609
          %s3611 = smul.addr %s3607, 4
          %s3612 = smul.addr %s3611, 128
          %s3613 = scalar_lea.hbm %s5, %s3612
          %s3614 = sshll.u32 %s3603, 4
          %s3615 = int_to_ptr.vmem [resolvable:$true] %s3614
          %3620 = dma.vmem_to_hbm [thread:$0]  %s3615, 8192, %s3613, %s3600, 512, 512, 32
        $region48: #{tpu_custom_call.1} parent=39 // pred_fallthru
          _
      $region40: #{tpu_custom_call.1} parent=5 // pred_fallthru
        _
      %p3621 = scmp.le.s32.totalorder 2, %s15
      // Predicated region
      $region49: #{tpu_custom_call.1} parent=5 // pred_check
        %p3622 = pneg %p3621
      $region50: #{tpu_custom_call.1} parent=5 // pred_check_branch
        %3624 = sbr.rel (%p3622) target = $region52
      $region51: #{tpu_custom_call.1} parent=5 // pred_region
        %s3625 = ssub.s32 %s15, 2
        // Predicated region
        $region53: #{tpu_custom_call.1} parent=51 // pred_check
          %p3626 = pneg %p154
        $region54: #{tpu_custom_call.1} parent=51 // pred_check_branch
          %3628 = sbr.rel (%p3626) target = $region56
        $region55: #{tpu_custom_call.1} parent=51 // pred_region
          %s3629 = sand.u32 %s139, 1
          %s3630 = scalar_lea.sflag [#allocation4], %s3629
          %s3631 = sand.u32 %s139, 1
          %s3632 = smul.addr %s3631, 512
          %s3633 = scalar_lea.vmem [#allocation5], %s3632
          %3634 = dma.done %s3630, 8192
        $region56: #{tpu_custom_call.1} parent=51 // pred_fallthru
          _
      $region52: #{tpu_custom_call.1} parent=5 // pred_fallthru
        _
    $region6: #{tpu_custom_call.1} parent=1 // loop_footer
      %s19 = sadd.s32 1, %s15
    $region7: #{tpu_custom_call.1} parent=1 // loop_footer_branch
      %14 = sbr.rel target = $region3
    $region8: #{tpu_custom_call.1} parent=1 // loop_exit
      _
    %3635 = vsyncpa [#allocation3], 1
    %s3636 = scalar_lea.sflag [#allocation3], 1
    %3637 = vsyncpa %s3636, 1
    %3638 = vsyncpa [#allocation4], 1
    %s3639 = scalar_lea.sflag [#allocation4], 1
    %3640 = vsyncpa %s3639, 1

</llo_original>
